<compile_context>
chip_gen: v6e
topology: v6e:2x2x1
jax: 0.10.0
libtpu: 0.0.40
codegen_flags: <defaults>
</compile_context>

<pallas_src>
import numpy as np
import jax
import jax.numpy as jnp
from jax import lax
from jax.experimental import pallas as pl
from jax.experimental.pallas import tpu as pltpu

# ----------------------- small synthetic ResEEGNet configuration -----------------------
B, E, T = 2, 8, 64          # batch, num_electrodes, chunk_size   (B*T = 128 lanes)
F1, D, F2 = 4, 2, 8
C = F1 * D                  # 8  (F1 * D channels after block1)
K1, K2 = 16, 8              # kernel_1, kernel_2 (even, as in the reference module)
NC = 2                      # num_classes
PAD1, PAD2 = K1 // 2, K2 // 2

T1_FULL = T + 2 * PAD1 - K1 + 1        # 65 : full block1 temporal-conv length
T1 = 64                                # trimmed: AvgPool(1,4) never reads sample 64
TP1 = (T1_FULL - 4) // 4 + 1           # 16 : after AvgPool2d((1,4), stride=4)
T2 = TP1 + 2 * PAD2 - K2 + 1           # 17 : after block2 depthwise conv
TP2 = (T2 - 8) // 8 + 1                # 2  : after AvgPool2d((1,8), stride=8)
FEAT = F2 * TP2                        # 16 : nn.Linear in-features


# ----------------------- static (parameter-independent) matrices ------------------------
def _np_block_diag(block):
    """Repeat `block` on the diagonal once per batch element (batch packed along lanes)."""
    return np.kron(np.eye(B, dtype=np.float32), block.astype(np.float32))


# AvgPool2d((1,4), stride=4) over the kept T1=64 temporal-conv outputs.
_p4 = np.zeros((T1, TP1), np.float32)
for _p in range(TP1):
    _p4[4 * _p:4 * _p + 4, _p] = 0.25
P4_BD = jnp.asarray(_np_block_diag(_p4))                       # (B*T1, B*TP1) = (128, 32)

# block2 depthwise tap-shift selectors: (A @ S2SEL[j])[c, t] = A[c, t + j - PAD2] (padded).
_s2 = np.zeros((K2, TP1, T2), np.float32)
for _j in range(K2):
    for _t in range(T2):
        _i = _t + _j - PAD2
        if 0 <= _i < TP1:
            _s2[_j, _i, _t] = 1.0
S2SEL = jnp.asarray(np.stack([_np_block_diag(_s2[_j]) for _j in range(K2)]))   # (K2, 32, 34)

# residual-block shift selectors for the two non-center taps (j=0 -> in[t-1], j=2 -> in[t+1]).
_s3 = np.zeros((2, T2, T2), np.float32)
for _idx, _j in enumerate((0, 2)):
    for _t in range(T2):
        _i = _t + _j - 1
        if 0 <= _i < T2:
            _s3[_idx, _i, _t] = 1.0
SR2 = jnp.asarray(np.stack([_np_block_diag(_s3[_idx]) for _idx in range(2)]))  # (2, 34, 34)

# AvgPool2d((1,8), stride=8) fused with per-batch column selection, all pooled positions
# concatenated along columns: column p*B + b pools positions [8p, 8p+8) of batch b.
_p8 = np.zeros((T2, TP2), np.float32)
for _p in range(TP2):
    _p8[8 * _p:8 * _p + 8, _p] = 0.125
Q8CAT = jnp.asarray(np.concatenate(
    [_np_block_diag(_p8[:, _p:_p + 1]) for _p in range(TP2)], axis=1))         # (B*T2, TP2*B)


# --------------------------------- fused Pallas kernel ----------------------------------
def reseegnet_kernel(x_ref, m_ref, wspf_ref, b1_ref, p4_ref, w2j_ref, b3_ref,
                     s2_ref, sr_ref, rbw_ref, rbb_ref, wl_ref, q8_ref, o_ref):
    f32 = jnp.float32
    dot = lambda a, b: jnp.dot(a, b, preferred_element_type=f32)
    # ELU: exp(z)-1 instead of expm1 (guaranteed Mosaic lowering; matches the reference).
    elu = lambda v: jnp.where(v > 0.0, v, jnp.exp(v) - 1.0)

    x = x_ref[...]                                               # (E, B*T) = (8, 128)

    # ---- block1: grouped spatial mix (8x8) first, then per-filter Toeplitz temporal conv;
    #      BN1/BN2 folded; accumulated as MXU sum-of-partials (no sublane concatenates).
    #      Dropout = identity (eval mode).
    z = dot(dot(wspf_ref[0], x), m_ref[0])
    for f in range(1, F1):
        z = z + dot(dot(wspf_ref[f], x), m_ref[f])
    z = z + b1_ref[...]                                          # (C, B*T1) = (8, 128)
    h1 = dot(elu(z), p4_ref[...])                                # (C, B*TP1) = (8, 32)

    # ---- block2: depthwise x pointwise conv + BN3 folded into K2 per-tap (F2,C) weights;
    #      each tap channel-mixed then shifted by a banded selector; MXU accumulation.
    hp = dot(dot(w2j_ref[0], h1), s2_ref[0])
    for j in range(1, K2):
        hp = hp + dot(dot(w2j_ref[j], h1), s2_ref[j])
    h = elu(hp + b3_ref[...])                                    # (F2, B*T2) = (8, 34)

    # ---- block3: two residual blocks (conv bias + BN folded).
    #      3-tap conv = center matmul + two shifted partials (no concat, no big selector).
    def conv3(hin, w3, bias):
        out = dot(w3[1], hin) + bias                             # center tap
        out = out + dot(dot(w3[0], hin), sr_ref[0])              # tap j=0 : in[t-1]
        out = out + dot(dot(w3[2], hin), sr_ref[1])              # tap j=2 : in[t+1]
        return out

    for r in range(2):
        w_a, b_a = rbw_ref[2 * r], rbb_ref[2 * r]
        w_b, b_b = rbw_ref[2 * r + 1], rbb_ref[2 * r + 1]
        yr = jnp.maximum(conv3(h, w_a, b_a), 0.0)
        zr = conv3(yr, w_b, b_b)
        h = jnp.maximum(zr + h, 0.0)

    # ---- tail: AvgPool(1,8) + flatten + Linear(bias=False), fused.
    pooled = dot(h, q8_ref[...])                                 # (F2, TP2*B) = (8, 4)
    lt = dot(wl_ref[0], pooled[:, 0:B])
    for p in range(1, TP2):
        lt = lt + dot(wl_ref[p], pooled[:, p * B:(p + 1) * B])
    o_ref[...] = lt                                              # (NC, B)


@jax.jit
def forward_pallas(x, prep):
    vmem = pl.BlockSpec(memory_space=pltpu.MemorySpace.VMEM)
    # batch packed along the lane axis in the wrapper: (B,1,E,T) -> (E, B*T) = (8, 128)
    x_packed = jnp.transpose(x[:, 0], (1, 0, 2)).reshape(E, B * T)
    operands = (x_packed,
                prep['m_bd'], prep['wspf'], prep['b1'], P4_BD,
                prep['w2j'], prep['b3'], S2SEL, SR2,
                prep['rbw'], prep['rbb'], prep['wl'], Q8CAT)
    logits_t = pl.pallas_call(
        reseegnet_kernel,
        out_shape=jax.ShapeDtypeStruct((NC, B), jnp.float32),
        in_specs=[vmem] * len(operands),
        out_specs=vmem,
    )(*operands)
    return logits_t.T                                            # (B, NC)


# ------------------------------ parameters (deterministic) ------------------------------
def _bn_init(key, n):
    k1, k2, k3, k4 = jax.random.split(key, 4)
    return dict(g=1.0 + 0.1 * jax.random.normal(k1, (n,), jnp.float32),
                b=0.1 * jax.random.normal(k2, (n,), jnp.float32),
                m=0.1 * jax.random.normal(k3, (n,), jnp.float32),
                v=0.9 + 0.2 * jax.random.uniform(k4, (n,), jnp.float32))


def _bn_fold(p, eps):
    scale = p['g'] / jnp.sqrt(p['v'] + eps)
    return scale, p['b'] - p['m'] * scale


def init_params(key):
    ks = iter(jax.random.split(key, 24))
    P = {}
    P['w_t'] = 0.25 * jax.random.normal(next(ks), (F1, 1, 1, K1), jnp.float32)
    P['bn1'] = _bn_init(next(ks), F1)
    w_sp = 0.4 * jax.random.normal(next(ks), (C, 1, E, 1), jnp.float32)
    norms = jnp.sqrt(jnp.sum(w_sp ** 2, axis=(1, 2, 3), keepdims=True))
    P['w_sp'] = jnp.where(norms > 1.0, w_sp / (norms + 1e-7), w_sp)  # Conv2dWithConstraint renorm
    P['bn2'] = _bn_init(next(ks), C)
    P['w_dw'] = 0.35 * jax.random.normal(next(ks), (C, 1, 1, K2), jnp.float32)
    P['w_pw'] = 0.35 * jax.random.normal(next(ks), (F2, C, 1, 1), jnp.float32)
    P['bn3'] = _bn_init(next(ks), F2)
    for name in ('rb1', 'rb2'):
        P[name] = dict(
            w1=0.2 * jax.random.normal(next(ks), (F2, F2, 1, 3), jnp.float32),
            c1b=0.1 * jax.random.normal(next(ks), (F2,), jnp.float32),
            bn1=_bn_init(next(ks), F2),
            w2=0.2 * jax.random.normal(next(ks), (F2, F2, 1, 3), jnp.float32),
            c2b=0.1 * jax.random.normal(next(ks), (F2,), jnp.float32),
            bn2=_bn_init(next(ks), F2),
        )
    P['w_lin'] = 0.3 * jax.random.normal(next(ks), (NC, FEAT), jnp.float32)
    return P


# ---------------- host-side one-time folding of weights into kernel matrices ------------
def _toeplitz_bank(w, t_in, t_out, pad):
    """M[f, i, u] = w[f, i - u + pad] when in-range else 0 (zero-padded 'same' conv)."""
    k = np.arange(t_in)[:, None] - np.arange(t_out)[None, :] + pad
    valid = jnp.asarray(((k >= 0) & (k < w.shape[1])).astype(np.float32))
    return w[:, np.clip(k, 0, w.shape[1] - 1)] * valid[None]


def _batch_block_diag(m):
    """(F, R, Ccols) -> (F, B*R, B*Ccols): same block per batch element (batch in lanes)."""
    eye = jnp.eye(B, dtype=m.dtype)
    out = eye[:, None, :, None] * m[..., None, :, None, :]
    return out.reshape(m.shape[:-2] + (B * m.shape[-2], B * m.shape[-1]))


def prepare(P):
    s1, g1 = _bn_fold(P['bn1'], 1e-3)                 # (F1,)
    s2, g2 = _bn_fold(P['bn2'], 1e-3)                 # (C,)
    s3, g3 = _bn_fold(P['bn3'], 1e-3)                 # (F2,)

    # block1 temporal conv -> per-filter banded Toeplitz (only the 64 kept outputs),
    # block-diagonal over the packed batch lanes.
    w_t = P['w_t'][:, 0, 0, :]                        # (F1, K1)
    m_bd = _batch_block_diag(_toeplitz_bank(w_t, T, T1, PAD1))       # (F1, 128, 128)

    # grouped spatial conv with BN1/BN2 folded, split per temporal filter (sum-of-partials)
    w_sp = P['w_sp'][:, 0, :, 0]                      # (C, E)
    f_of_o = np.arange(C) // D
    wsp_eff = w_sp * (s2 * s1[f_of_o])[:, None]       # (C, E)
    onehot_f = jnp.asarray((f_of_o[None, :] == np.arange(F1)[:, None]).astype(np.float32))
    wspf = onehot_f[:, :, None] * wsp_eff[None, :, :]                # (F1, C, E)
    b1 = (s2 * g1[f_of_o] * jnp.sum(w_sp, axis=1) + g2)[:, None]     # (C, 1)

    # block2: depthwise x pointwise conv + BN3 folded into per-tap (F2, C) weights
    wdw = P['w_dw'][:, 0, 0, :]                       # (C, K2)
    wpw = P['w_pw'][:, :, 0, 0]                       # (F2, C)
    w2j = (s3[:, None] * wpw)[None, :, :] * wdw.T[:, None, :]        # (K2, F2, C)
    b3 = g3[:, None]                                  # (F2, 1)

    # residual blocks: conv bias + BN folded; per-tap (F2, F2) weights
    rbw, rbb = [], []
    for name in ('rb1', 'rb2'):
        rb = P[name]
        for w_key, b_key, bn_key in (('w1', 'c1b', 'bn1'), ('w2', 'c2b', 'bn2')):
            s, g = _bn_fold(rb[bn_key], 1e-5)
            w = rb[w_key][:, :, 0, :] * s[:, None, None]             # (F2, F2, 3)
            rbw.append(jnp.transpose(w, (2, 0, 1)))                  # (3, F2, F2)
            rbb.append((s * rb[b_key] + g)[:, None])
    rbw = jnp.stack(rbw)                              # (4, 3, F2, F2)
    rbb = jnp.stack(rbb)                              # (4, F2, 1)

    # final linear split per pooled position p (torch-flatten column order o*TP2 + p)
    wl = jnp.stack([P['w_lin'][:, p::TP2] for p in range(TP2)])      # (TP2, NC, F2)

    return dict(m_bd=m_bd, wspf=wspf, b1=b1, w2j=w2j, b3=b3,
                rbw=rbw, rbb=rbb, wl=wl)


# ----------------------------- pure-JAX reference (checks) ------------------------------
def reference_forward(x, P):
    hp = lax.Precision.HIGHEST
    dn = ('NCHW', 'OIHW', 'NCHW')

    def conv(h, w, pad, groups=1):
        return lax.conv_general_dilated(h, w, (1, 1), ((0, 0), pad),
                                        dimension_numbers=dn,
                                        feature_group_count=groups, precision=hp)

    def bn(h, p, eps):
        scale = p['g'] / jnp.sqrt(p['v'] + eps)
        shift = p['b'] - p['m'] * scale
        return h * scale[None, :, None, None] + shift[None, :, None, None]

    def elu(h):
        return jnp.where(h > 0.0, h, jnp.exp(h) - 1.0)

    def avgpool_t(h, k):
        s = lax.reduce_window(h, 0.0, lax.add, (1, 1, 1, k), (1, 1, k, k), 'VALID')
        return s / float(k)

    h = conv(x, P['w_t'], (K1 // 2, K1 // 2))
    h = bn(h, P['bn1'], 1e-3)
    h = conv(h, P['w_sp'], (0, 0), groups=F1)
    h = bn(h, P['bn2'], 1e-3)
    h = elu(h)
    h = avgpool_t(h, 4)
    h = conv(h, P['w_dw'], (K2 // 2, K2 // 2), groups=C)
    h = conv(h, P['w_pw'], (0, 0))
    h = bn(h, P['bn3'], 1e-3)
    h = elu(h)
    for name in ('rb1', 'rb2'):
        rb = P[name]
        y = conv(h, rb['w1'], (1, 1)) + rb['c1b'][None, :, None, None]
        y = bn(y, rb['bn1'], 1e-5)
        y = jnp.maximum(y, 0.0)
        z = conv(y, rb['w2'], (1, 1)) + rb['c2b'][None, :, None, None]
        z = bn(z, rb['bn2'], 1e-5)
        h = jnp.maximum(z + h, 0.0)
    h = avgpool_t(h, 8)
    flat = h.reshape(h.shape[0], -1)
    return jnp.dot(flat, P['w_lin'].T, precision=hp)


# --------------------------------------- main -------------------------------------------
if __name__ == "__main__":
    key = jax.random.PRNGKey(0)
    kx, kp = jax.random.split(key)
    x = jax.random.normal(kx, (B, 1, E, T), jnp.float32)
    P = init_params(kp)

    prep = prepare(P)                       # one-time weight folding (host side)
    out = forward_pallas(x, prep)
    out = jax.block_until_ready(out)
    assert out.shape == (B, NC)

    ref = reference_forward(x, P)
    np.testing.assert_allclose(np.asarray(out), np.asarray(ref), rtol=1e-3, atol=1e-3)
    print("KERNEL_OK")
</pallas_src>

<mosaic_0001>
module attributes {stable_mosaic.version = 11 : i64} {
  func.func @reseegnet_kernel(%arg0: memref<8x128xf32, #tpu.memory_space<vmem>>, %arg1: memref<4x128x128xf32, #tpu.memory_space<vmem>>, %arg2: memref<4x8x8xf32, #tpu.memory_space<vmem>>, %arg3: memref<8x1xf32, #tpu.memory_space<vmem>>, %arg4: memref<128x32xf32, #tpu.memory_space<vmem>>, %arg5: memref<8x8x8xf32, #tpu.memory_space<vmem>>, %arg6: memref<8x1xf32, #tpu.memory_space<vmem>>, %arg7: memref<8x32x34xf32, #tpu.memory_space<vmem>>, %arg8: memref<2x34x34xf32, #tpu.memory_space<vmem>>, %arg9: memref<4x3x8x8xf32, #tpu.memory_space<vmem>>, %arg10: memref<4x8x1xf32, #tpu.memory_space<vmem>>, %arg11: memref<2x2x8xf32, #tpu.memory_space<vmem>>, %arg12: memref<34x4xf32, #tpu.memory_space<vmem>>, %arg13: memref<2x2xf32, #tpu.memory_space<vmem>>) attributes {dimension_semantics = [], scalar_prefetch = 0 : i64, scratch_operands = 0 : i64, tpu.core_type = #tpu.core_type<tc>} {
    %c0 = arith.constant 0 : index
    %c0_0 = arith.constant 0 : index
    %0 = vector.load %arg0[%c0, %c0_0] : memref<8x128xf32, #tpu.memory_space<vmem>>, vector<8x128xf32>
    %c0_1 = arith.constant 0 : index
    %c0_2 = arith.constant 0 : index
    %c0_3 = arith.constant 0 : index
    %1 = vector.load %arg2[%c0_1, %c0_2, %c0_3] : memref<4x8x8xf32, #tpu.memory_space<vmem>>, vector<1x8x8xf32>
    %2 = vector.shape_cast %1 : vector<1x8x8xf32> to vector<8x8xf32>
    %cst = arith.constant dense<0.000000e+00> : vector<8x128xf32>
    %3 = tpu.matmul %2, %0, %cst {dimension_numbers = #tpu.dot_dimension_numbers<[1], [0], [0], [1], [0, 0, 1, 1], [], []>} : vector<8x8xf32>, vector<8x128xf32>, vector<8x128xf32> -> vector<8x128xf32>
    %c0_4 = arith.constant 0 : index
    %c0_5 = arith.constant 0 : index
    %c0_6 = arith.constant 0 : index
    %4 = vector.load %arg1[%c0_4, %c0_5, %c0_6] : memref<4x128x128xf32, #tpu.memory_space<vmem>>, vector<1x128x128xf32>
    %5 = vector.shape_cast %4 : vector<1x128x128xf32> to vector<128x128xf32>
    %cst_7 = arith.constant dense<0.000000e+00> : vector<8x128xf32>
    %6 = tpu.matmul %3, %5, %cst_7 {dimension_numbers = #tpu.dot_dimension_numbers<[1], [0], [0], [1], [0, 0, 1, 1], [], []>} : vector<8x128xf32>, vector<128x128xf32>, vector<8x128xf32> -> vector<8x128xf32>
    %c1 = arith.constant 1 : index
    %c0_8 = arith.constant 0 : index
    %c0_9 = arith.constant 0 : index
    %7 = vector.load %arg2[%c1, %c0_8, %c0_9] : memref<4x8x8xf32, #tpu.memory_space<vmem>>, vector<1x8x8xf32>
    %8 = vector.shape_cast %7 : vector<1x8x8xf32> to vector<8x8xf32>
    %cst_10 = arith.constant dense<0.000000e+00> : vector<8x128xf32>
    %9 = tpu.matmul %8, %0, %cst_10 {dimension_numbers = #tpu.dot_dimension_numbers<[1], [0], [0], [1], [0, 0, 1, 1], [], []>} : vector<8x8xf32>, vector<8x128xf32>, vector<8x128xf32> -> vector<8x128xf32>
    %c1_11 = arith.constant 1 : index
    %c0_12 = arith.constant 0 : index
    %c0_13 = arith.constant 0 : index
    %10 = vector.load %arg1[%c1_11, %c0_12, %c0_13] : memref<4x128x128xf32, #tpu.memory_space<vmem>>, vector<1x128x128xf32>
    %11 = vector.shape_cast %10 : vector<1x128x128xf32> to vector<128x128xf32>
    %cst_14 = arith.constant dense<0.000000e+00> : vector<8x128xf32>
    %12 = tpu.matmul %9, %11, %cst_14 {dimension_numbers = #tpu.dot_dimension_numbers<[1], [0], [0], [1], [0, 0, 1, 1], [], []>} : vector<8x128xf32>, vector<128x128xf32>, vector<8x128xf32> -> vector<8x128xf32>
    %13 = arith.addf %6, %12 : vector<8x128xf32>
    %c2 = arith.constant 2 : index
    %c0_15 = arith.constant 0 : index
    %c0_16 = arith.constant 0 : index
    %14 = vector.load %arg2[%c2, %c0_15, %c0_16] : memref<4x8x8xf32, #tpu.memory_space<vmem>>, vector<1x8x8xf32>
    %15 = vector.shape_cast %14 : vector<1x8x8xf32> to vector<8x8xf32>
    %cst_17 = arith.constant dense<0.000000e+00> : vector<8x128xf32>
    %16 = tpu.matmul %15, %0, %cst_17 {dimension_numbers = #tpu.dot_dimension_numbers<[1], [0], [0], [1], [0, 0, 1, 1], [], []>} : vector<8x8xf32>, vector<8x128xf32>, vector<8x128xf32> -> vector<8x128xf32>
    %c2_18 = arith.constant 2 : index
    %c0_19 = arith.constant 0 : index
    %c0_20 = arith.constant 0 : index
    %17 = vector.load %arg1[%c2_18, %c0_19, %c0_20] : memref<4x128x128xf32, #tpu.memory_space<vmem>>, vector<1x128x128xf32>
    %18 = vector.shape_cast %17 : vector<1x128x128xf32> to vector<128x128xf32>
    %cst_21 = arith.constant dense<0.000000e+00> : vector<8x128xf32>
    %19 = tpu.matmul %16, %18, %cst_21 {dimension_numbers = #tpu.dot_dimension_numbers<[1], [0], [0], [1], [0, 0, 1, 1], [], []>} : vector<8x128xf32>, vector<128x128xf32>, vector<8x128xf32> -> vector<8x128xf32>
    %20 = arith.addf %13, %19 : vector<8x128xf32>
    %c3 = arith.constant 3 : index
    %c0_22 = arith.constant 0 : index
    %c0_23 = arith.constant 0 : index
    %21 = vector.load %arg2[%c3, %c0_22, %c0_23] : memref<4x8x8xf32, #tpu.memory_space<vmem>>, vector<1x8x8xf32>
    %22 = vector.shape_cast %21 : vector<1x8x8xf32> to vector<8x8xf32>
    %cst_24 = arith.constant dense<0.000000e+00> : vector<8x128xf32>
    %23 = tpu.matmul %22, %0, %cst_24 {dimension_numbers = #tpu.dot_dimension_numbers<[1], [0], [0], [1], [0, 0, 1, 1], [], []>} : vector<8x8xf32>, vector<8x128xf32>, vector<8x128xf32> -> vector<8x128xf32>
    %c3_25 = arith.constant 3 : index
    %c0_26 = arith.constant 0 : index
    %c0_27 = arith.constant 0 : index
    %24 = vector.load %arg1[%c3_25, %c0_26, %c0_27] : memref<4x128x128xf32, #tpu.memory_space<vmem>>, vector<1x128x128xf32>
    %25 = vector.shape_cast %24 : vector<1x128x128xf32> to vector<128x128xf32>
    %cst_28 = arith.constant dense<0.000000e+00> : vector<8x128xf32>
    %26 = tpu.matmul %23, %25, %cst_28 {dimension_numbers = #tpu.dot_dimension_numbers<[1], [0], [0], [1], [0, 0, 1, 1], [], []>} : vector<8x128xf32>, vector<128x128xf32>, vector<8x128xf32> -> vector<8x128xf32>
    %27 = arith.addf %20, %26 : vector<8x128xf32>
    %c0_29 = arith.constant 0 : index
    %c0_30 = arith.constant 0 : index
    %28 = vector.load %arg3[%c0_29, %c0_30] : memref<8x1xf32, #tpu.memory_space<vmem>>, vector<8x1xf32>
    %29 = vector.broadcast %28 : vector<8x1xf32> to vector<8x128xf32>
    %30 = arith.addf %27, %29 : vector<8x128xf32>
    %cst_31 = arith.constant 0.000000e+00 : f32
    %31 = vector.broadcast %cst_31 : f32 to vector<8x128xf32>
    %32 = arith.cmpf ogt, %30, %31 : vector<8x128xf32>
    %33 = math.exp %30 : vector<8x128xf32>
    %cst_32 = arith.constant 1.000000e+00 : f32
    %34 = vector.broadcast %cst_32 : f32 to vector<8x128xf32>
    %35 = arith.subf %33, %34 : vector<8x128xf32>
    %36 = arith.select %32, %30, %35 : vector<8x128xi1>, vector<8x128xf32>
    %c0_33 = arith.constant 0 : index
    %c0_34 = arith.constant 0 : index
    %37 = vector.load %arg4[%c0_33, %c0_34] : memref<128x32xf32, #tpu.memory_space<vmem>>, vector<128x32xf32>
    %cst_35 = arith.constant dense<0.000000e+00> : vector<8x32xf32>
    %38 = tpu.matmul %36, %37, %cst_35 {dimension_numbers = #tpu.dot_dimension_numbers<[1], [0], [0], [1], [0, 0, 1, 1], [], []>} : vector<8x128xf32>, vector<128x32xf32>, vector<8x32xf32> -> vector<8x32xf32>
    %c0_36 = arith.constant 0 : index
    %c0_37 = arith.constant 0 : index
    %c0_38 = arith.constant 0 : index
    %39 = vector.load %arg5[%c0_36, %c0_37, %c0_38] : memref<8x8x8xf32, #tpu.memory_space<vmem>>, vector<1x8x8xf32>
    %40 = vector.shape_cast %39 : vector<1x8x8xf32> to vector<8x8xf32>
    %cst_39 = arith.constant dense<0.000000e+00> : vector<8x32xf32>
    %41 = tpu.matmul %40, %38, %cst_39 {dimension_numbers = #tpu.dot_dimension_numbers<[1], [0], [0], [1], [0, 0, 1, 1], [], []>} : vector<8x8xf32>, vector<8x32xf32>, vector<8x32xf32> -> vector<8x32xf32>
    %c0_40 = arith.constant 0 : index
    %c0_41 = arith.constant 0 : index
    %c0_42 = arith.constant 0 : index
    %42 = vector.load %arg7[%c0_40, %c0_41, %c0_42] : memref<8x32x34xf32, #tpu.memory_space<vmem>>, vector<1x32x34xf32>
    %43 = vector.shape_cast %42 : vector<1x32x34xf32> to vector<32x34xf32>
    %cst_43 = arith.constant dense<0.000000e+00> : vector<8x34xf32>
    %44 = tpu.matmul %41, %43, %cst_43 {dimension_numbers = #tpu.dot_dimension_numbers<[1], [0], [0], [1], [0, 0, 1, 1], [], []>} : vector<8x32xf32>, vector<32x34xf32>, vector<8x34xf32> -> vector<8x34xf32>
    %c1_44 = arith.constant 1 : index
    %c0_45 = arith.constant 0 : index
    %c0_46 = arith.constant 0 : index
    %45 = vector.load %arg5[%c1_44, %c0_45, %c0_46] : memref<8x8x8xf32, #tpu.memory_space<vmem>>, vector<1x8x8xf32>
    %46 = vector.shape_cast %45 : vector<1x8x8xf32> to vector<8x8xf32>
    %cst_47 = arith.constant dense<0.000000e+00> : vector<8x32xf32>
    %47 = tpu.matmul %46, %38, %cst_47 {dimension_numbers = #tpu.dot_dimension_numbers<[1], [0], [0], [1], [0, 0, 1, 1], [], []>} : vector<8x8xf32>, vector<8x32xf32>, vector<8x32xf32> -> vector<8x32xf32>
    %c1_48 = arith.constant 1 : index
    %c0_49 = arith.constant 0 : index
    %c0_50 = arith.constant 0 : index
    %48 = vector.load %arg7[%c1_48, %c0_49, %c0_50] : memref<8x32x34xf32, #tpu.memory_space<vmem>>, vector<1x32x34xf32>
    %49 = vector.shape_cast %48 : vector<1x32x34xf32> to vector<32x34xf32>
    %cst_51 = arith.constant dense<0.000000e+00> : vector<8x34xf32>
    %50 = tpu.matmul %47, %49, %cst_51 {dimension_numbers = #tpu.dot_dimension_numbers<[1], [0], [0], [1], [0, 0, 1, 1], [], []>} : vector<8x32xf32>, vector<32x34xf32>, vector<8x34xf32> -> vector<8x34xf32>
    %51 = arith.addf %44, %50 : vector<8x34xf32>
    %c2_52 = arith.constant 2 : index
    %c0_53 = arith.constant 0 : index
    %c0_54 = arith.constant 0 : index
    %52 = vector.load %arg5[%c2_52, %c0_53, %c0_54] : memref<8x8x8xf32, #tpu.memory_space<vmem>>, vector<1x8x8xf32>
    %53 = vector.shape_cast %52 : vector<1x8x8xf32> to vector<8x8xf32>
    %cst_55 = arith.constant dense<0.000000e+00> : vector<8x32xf32>
    %54 = tpu.matmul %53, %38, %cst_55 {dimension_numbers = #tpu.dot_dimension_numbers<[1], [0], [0], [1], [0, 0, 1, 1], [], []>} : vector<8x8xf32>, vector<8x32xf32>, vector<8x32xf32> -> vector<8x32xf32>
    %c2_56 = arith.constant 2 : index
    %c0_57 = arith.constant 0 : index
    %c0_58 = arith.constant 0 : index
    %55 = vector.load %arg7[%c2_56, %c0_57, %c0_58] : memref<8x32x34xf32, #tpu.memory_space<vmem>>, vector<1x32x34xf32>
    %56 = vector.shape_cast %55 : vector<1x32x34xf32> to vector<32x34xf32>
    %cst_59 = arith.constant dense<0.000000e+00> : vector<8x34xf32>
    %57 = tpu.matmul %54, %56, %cst_59 {dimension_numbers = #tpu.dot_dimension_numbers<[1], [0], [0], [1], [0, 0, 1, 1], [], []>} : vector<8x32xf32>, vector<32x34xf32>, vector<8x34xf32> -> vector<8x34xf32>
    %58 = arith.addf %51, %57 : vector<8x34xf32>
    %c3_60 = arith.constant 3 : index
    %c0_61 = arith.constant 0 : index
    %c0_62 = arith.constant 0 : index
    %59 = vector.load %arg5[%c3_60, %c0_61, %c0_62] : memref<8x8x8xf32, #tpu.memory_space<vmem>>, vector<1x8x8xf32>
    %60 = vector.shape_cast %59 : vector<1x8x8xf32> to vector<8x8xf32>
    %cst_63 = arith.constant dense<0.000000e+00> : vector<8x32xf32>
    %61 = tpu.matmul %60, %38, %cst_63 {dimension_numbers = #tpu.dot_dimension_numbers<[1], [0], [0], [1], [0, 0, 1, 1], [], []>} : vector<8x8xf32>, vector<8x32xf32>, vector<8x32xf32> -> vector<8x32xf32>
    %c3_64 = arith.constant 3 : index
    %c0_65 = arith.constant 0 : index
    %c0_66 = arith.constant 0 : index
    %62 = vector.load %arg7[%c3_64, %c0_65, %c0_66] : memref<8x32x34xf32, #tpu.memory_space<vmem>>, vector<1x32x34xf32>
    %63 = vector.shape_cast %62 : vector<1x32x34xf32> to vector<32x34xf32>
    %cst_67 = arith.constant dense<0.000000e+00> : vector<8x34xf32>
    %64 = tpu.matmul %61, %63, %cst_67 {dimension_numbers = #tpu.dot_dimension_numbers<[1], [0], [0], [1], [0, 0, 1, 1], [], []>} : vector<8x32xf32>, vector<32x34xf32>, vector<8x34xf32> -> vector<8x34xf32>
    %65 = arith.addf %58, %64 : vector<8x34xf32>
    %c4 = arith.constant 4 : index
    %c0_68 = arith.constant 0 : index
    %c0_69 = arith.constant 0 : index
    %66 = vector.load %arg5[%c4, %c0_68, %c0_69] : memref<8x8x8xf32, #tpu.memory_space<vmem>>, vector<1x8x8xf32>
    %67 = vector.shape_cast %66 : vector<1x8x8xf32> to vector<8x8xf32>
    %cst_70 = arith.constant dense<0.000000e+00> : vector<8x32xf32>
    %68 = tpu.matmul %67, %38, %cst_70 {dimension_numbers = #tpu.dot_dimension_numbers<[1], [0], [0], [1], [0, 0, 1, 1], [], []>} : vector<8x8xf32>, vector<8x32xf32>, vector<8x32xf32> -> vector<8x32xf32>
    %c4_71 = arith.constant 4 : index
    %c0_72 = arith.constant 0 : index
    %c0_73 = arith.constant 0 : index
    %69 = vector.load %arg7[%c4_71, %c0_72, %c0_73] : memref<8x32x34xf32, #tpu.memory_space<vmem>>, vector<1x32x34xf32>
    %70 = vector.shape_cast %69 : vector<1x32x34xf32> to vector<32x34xf32>
    %cst_74 = arith.constant dense<0.000000e+00> : vector<8x34xf32>
    %71 = tpu.matmul %68, %70, %cst_74 {dimension_numbers = #tpu.dot_dimension_numbers<[1], [0], [0], [1], [0, 0, 1, 1], [], []>} : vector<8x32xf32>, vector<32x34xf32>, vector<8x34xf32> -> vector<8x34xf32>
    %72 = arith.addf %65, %71 : vector<8x34xf32>
    %c5 = arith.constant 5 : index
    %c0_75 = arith.constant 0 : index
    %c0_76 = arith.constant 0 : index
    %73 = vector.load %arg5[%c5, %c0_75, %c0_76] : memref<8x8x8xf32, #tpu.memory_space<vmem>>, vector<1x8x8xf32>
    %74 = vector.shape_cast %73 : vector<1x8x8xf32> to vector<8x8xf32>
    %cst_77 = arith.constant dense<0.000000e+00> : vector<8x32xf32>
    %75 = tpu.matmul %74, %38, %cst_77 {dimension_numbers = #tpu.dot_dimension_numbers<[1], [0], [0], [1], [0, 0, 1, 1], [], []>} : vector<8x8xf32>, vector<8x32xf32>, vector<8x32xf32> -> vector<8x32xf32>
    %c5_78 = arith.constant 5 : index
    %c0_79 = arith.constant 0 : index
    %c0_80 = arith.constant 0 : index
    %76 = vector.load %arg7[%c5_78, %c0_79, %c0_80] : memref<8x32x34xf32, #tpu.memory_space<vmem>>, vector<1x32x34xf32>
    %77 = vector.shape_cast %76 : vector<1x32x34xf32> to vector<32x34xf32>
    %cst_81 = arith.constant dense<0.000000e+00> : vector<8x34xf32>
    %78 = tpu.matmul %75, %77, %cst_81 {dimension_numbers = #tpu.dot_dimension_numbers<[1], [0], [0], [1], [0, 0, 1, 1], [], []>} : vector<8x32xf32>, vector<32x34xf32>, vector<8x34xf32> -> vector<8x34xf32>
    %79 = arith.addf %72, %78 : vector<8x34xf32>
    %c6 = arith.constant 6 : index
    %c0_82 = arith.constant 0 : index
    %c0_83 = arith.constant 0 : index
    %80 = vector.load %arg5[%c6, %c0_82, %c0_83] : memref<8x8x8xf32, #tpu.memory_space<vmem>>, vector<1x8x8xf32>
    %81 = vector.shape_cast %80 : vector<1x8x8xf32> to vector<8x8xf32>
    %cst_84 = arith.constant dense<0.000000e+00> : vector<8x32xf32>
    %82 = tpu.matmul %81, %38, %cst_84 {dimension_numbers = #tpu.dot_dimension_numbers<[1], [0], [0], [1], [0, 0, 1, 1], [], []>} : vector<8x8xf32>, vector<8x32xf32>, vector<8x32xf32> -> vector<8x32xf32>
    %c6_85 = arith.constant 6 : index
    %c0_86 = arith.constant 0 : index
    %c0_87 = arith.constant 0 : index
    %83 = vector.load %arg7[%c6_85, %c0_86, %c0_87] : memref<8x32x34xf32, #tpu.memory_space<vmem>>, vector<1x32x34xf32>
    %84 = vector.shape_cast %83 : vector<1x32x34xf32> to vector<32x34xf32>
    %cst_88 = arith.constant dense<0.000000e+00> : vector<8x34xf32>
    %85 = tpu.matmul %82, %84, %cst_88 {dimension_numbers = #tpu.dot_dimension_numbers<[1], [0], [0], [1], [0, 0, 1, 1], [], []>} : vector<8x32xf32>, vector<32x34xf32>, vector<8x34xf32> -> vector<8x34xf32>
    %86 = arith.addf %79, %85 : vector<8x34xf32>
    %c7 = arith.constant 7 : index
    %c0_89 = arith.constant 0 : index
    %c0_90 = arith.constant 0 : index
    %87 = vector.load %arg5[%c7, %c0_89, %c0_90] : memref<8x8x8xf32, #tpu.memory_space<vmem>>, vector<1x8x8xf32>
    %88 = vector.shape_cast %87 : vector<1x8x8xf32> to vector<8x8xf32>
    %cst_91 = arith.constant dense<0.000000e+00> : vector<8x32xf32>
    %89 = tpu.matmul %88, %38, %cst_91 {dimension_numbers = #tpu.dot_dimension_numbers<[1], [0], [0], [1], [0, 0, 1, 1], [], []>} : vector<8x8xf32>, vector<8x32xf32>, vector<8x32xf32> -> vector<8x32xf32>
    %c7_92 = arith.constant 7 : index
    %c0_93 = arith.constant 0 : index
    %c0_94 = arith.constant 0 : index
    %90 = vector.load %arg7[%c7_92, %c0_93, %c0_94] : memref<8x32x34xf32, #tpu.memory_space<vmem>>, vector<1x32x34xf32>
    %91 = vector.shape_cast %90 : vector<1x32x34xf32> to vector<32x34xf32>
    %cst_95 = arith.constant dense<0.000000e+00> : vector<8x34xf32>
    %92 = tpu.matmul %89, %91, %cst_95 {dimension_numbers = #tpu.dot_dimension_numbers<[1], [0], [0], [1], [0, 0, 1, 1], [], []>} : vector<8x32xf32>, vector<32x34xf32>, vector<8x34xf32> -> vector<8x34xf32>
    %93 = arith.addf %86, %92 : vector<8x34xf32>
    %c0_96 = arith.constant 0 : index
    %c0_97 = arith.constant 0 : index
    %94 = vector.load %arg6[%c0_96, %c0_97] : memref<8x1xf32, #tpu.memory_space<vmem>>, vector<8x1xf32>
    %95 = vector.broadcast %94 : vector<8x1xf32> to vector<8x34xf32>
    %96 = arith.addf %93, %95 : vector<8x34xf32>
    %cst_98 = arith.constant 0.000000e+00 : f32
    %97 = vector.broadcast %cst_98 : f32 to vector<8x34xf32>
    %98 = arith.cmpf ogt, %96, %97 : vector<8x34xf32>
    %99 = math.exp %96 : vector<8x34xf32>
    %cst_99 = arith.constant 1.000000e+00 : f32
    %100 = vector.broadcast %cst_99 : f32 to vector<8x34xf32>
    %101 = arith.subf %99, %100 : vector<8x34xf32>
    %102 = arith.select %98, %96, %101 : vector<8x34xi1>, vector<8x34xf32>
    %c0_100 = arith.constant 0 : index
    %c0_101 = arith.constant 0 : index
    %c0_102 = arith.constant 0 : index
    %c0_103 = arith.constant 0 : index
    %103 = vector.load %arg9[%c0_100, %c0_101, %c0_102, %c0_103] : memref<4x3x8x8xf32, #tpu.memory_space<vmem>>, vector<1x3x8x8xf32>
    %104 = vector.shape_cast %103 : vector<1x3x8x8xf32> to vector<3x8x8xf32>
    %c0_104 = arith.constant 0 : index
    %c0_105 = arith.constant 0 : index
    %c0_106 = arith.constant 0 : index
    %105 = vector.load %arg10[%c0_104, %c0_105, %c0_106] : memref<4x8x1xf32, #tpu.memory_space<vmem>>, vector<1x8x1xf32>
    %106 = vector.shape_cast %105 : vector<1x8x1xf32> to vector<8x1xf32>
    %c1_107 = arith.constant 1 : index
    %c0_108 = arith.constant 0 : index
    %c0_109 = arith.constant 0 : index
    %c0_110 = arith.constant 0 : index
    %107 = vector.load %arg9[%c1_107, %c0_108, %c0_109, %c0_110] : memref<4x3x8x8xf32, #tpu.memory_space<vmem>>, vector<1x3x8x8xf32>
    %108 = vector.shape_cast %107 : vector<1x3x8x8xf32> to vector<3x8x8xf32>
    %c1_111 = arith.constant 1 : index
    %c0_112 = arith.constant 0 : index
    %c0_113 = arith.constant 0 : index
    %109 = vector.load %arg10[%c1_111, %c0_112, %c0_113] : memref<4x8x1xf32, #tpu.memory_space<vmem>>, vector<1x8x1xf32>
    %110 = vector.shape_cast %109 : vector<1x8x1xf32> to vector<8x1xf32>
    %111 = vector.extract_strided_slice %104 {offsets = [1, 0, 0], sizes = [1, 8, 8], strides = [1, 1, 1]} : vector<3x8x8xf32> to vector<1x8x8xf32>
    %112 = vector.shape_cast %111 : vector<1x8x8xf32> to vector<8x8xf32>
    %cst_114 = arith.constant dense<0.000000e+00> : vector<8x34xf32>
    %113 = tpu.matmul %112, %102, %cst_114 {dimension_numbers = #tpu.dot_dimension_numbers<[1], [0], [0], [1], [0, 0, 1, 1], [], []>} : vector<8x8xf32>, vector<8x34xf32>, vector<8x34xf32> -> vector<8x34xf32>
    %114 = vector.broadcast %106 : vector<8x1xf32> to vector<8x34xf32>
    %115 = arith.addf %113, %114 : vector<8x34xf32>
    %116 = vector.extract_strided_slice %104 {offsets = [0, 0, 0], sizes = [1, 8, 8], strides = [1, 1, 1]} : vector<3x8x8xf32> to vector<1x8x8xf32>
    %117 = vector.shape_cast %116 : vector<1x8x8xf32> to vector<8x8xf32>
    %cst_115 = arith.constant dense<0.000000e+00> : vector<8x34xf32>
    %118 = tpu.matmul %117, %102, %cst_115 {dimension_numbers = #tpu.dot_dimension_numbers<[1], [0], [0], [1], [0, 0, 1, 1], [], []>} : vector<8x8xf32>, vector<8x34xf32>, vector<8x34xf32> -> vector<8x34xf32>
    %c0_116 = arith.constant 0 : index
    %c0_117 = arith.constant 0 : index
    %c0_118 = arith.constant 0 : index
    %119 = vector.load %arg8[%c0_116, %c0_117, %c0_118] : memref<2x34x34xf32, #tpu.memory_space<vmem>>, vector<1x34x34xf32>
    %120 = vector.shape_cast %119 : vector<1x34x34xf32> to vector<34x34xf32>
    %cst_119 = arith.constant dense<0.000000e+00> : vector<8x34xf32>
    %121 = tpu.matmul %118, %120, %cst_119 {dimension_numbers = #tpu.dot_dimension_numbers<[1], [0], [0], [1], [0, 0, 1, 1], [], []>} : vector<8x34xf32>, vector<34x34xf32>, vector<8x34xf32> -> vector<8x34xf32>
    %122 = arith.addf %115, %121 : vector<8x34xf32>
    %123 = vector.extract_strided_slice %104 {offsets = [2, 0, 0], sizes = [1, 8, 8], strides = [1, 1, 1]} : vector<3x8x8xf32> to vector<1x8x8xf32>
    %124 = vector.shape_cast %123 : vector<1x8x8xf32> to vector<8x8xf32>
    %cst_120 = arith.constant dense<0.000000e+00> : vector<8x34xf32>
    %125 = tpu.matmul %124, %102, %cst_120 {dimension_numbers = #tpu.dot_dimension_numbers<[1], [0], [0], [1], [0, 0, 1, 1], [], []>} : vector<8x8xf32>, vector<8x34xf32>, vector<8x34xf32> -> vector<8x34xf32>
    %c1_121 = arith.constant 1 : index
    %c0_122 = arith.constant 0 : index
    %c0_123 = arith.constant 0 : index
    %126 = vector.load %arg8[%c1_121, %c0_122, %c0_123] : memref<2x34x34xf32, #tpu.memory_space<vmem>>, vector<1x34x34xf32>
    %127 = vector.shape_cast %126 : vector<1x34x34xf32> to vector<34x34xf32>
    %cst_124 = arith.constant dense<0.000000e+00> : vector<8x34xf32>
    %128 = tpu.matmul %125, %127, %cst_124 {dimension_numbers = #tpu.dot_dimension_numbers<[1], [0], [0], [1], [0, 0, 1, 1], [], []>} : vector<8x34xf32>, vector<34x34xf32>, vector<8x34xf32> -> vector<8x34xf32>
    %129 = arith.addf %122, %128 : vector<8x34xf32>
    %cst_125 = arith.constant 0.000000e+00 : f32
    %130 = vector.broadcast %cst_125 : f32 to vector<8x34xf32>
    %131 = arith.maximumf %129, %130 : vector<8x34xf32>
    %132 = vector.extract_strided_slice %108 {offsets = [1, 0, 0], sizes = [1, 8, 8], strides = [1, 1, 1]} : vector<3x8x8xf32> to vector<1x8x8xf32>
    %133 = vector.shape_cast %132 : vector<1x8x8xf32> to vector<8x8xf32>
    %cst_126 = arith.constant dense<0.000000e+00> : vector<8x34xf32>
    %134 = tpu.matmul %133, %131, %cst_126 {dimension_numbers = #tpu.dot_dimension_numbers<[1], [0], [0], [1], [0, 0, 1, 1], [], []>} : vector<8x8xf32>, vector<8x34xf32>, vector<8x34xf32> -> vector<8x34xf32>
    %135 = vector.broadcast %110 : vector<8x1xf32> to vector<8x34xf32>
    %136 = arith.addf %134, %135 : vector<8x34xf32>
    %137 = vector.extract_strided_slice %108 {offsets = [0, 0, 0], sizes = [1, 8, 8], strides = [1, 1, 1]} : vector<3x8x8xf32> to vector<1x8x8xf32>
    %138 = vector.shape_cast %137 : vector<1x8x8xf32> to vector<8x8xf32>
    %cst_127 = arith.constant dense<0.000000e+00> : vector<8x34xf32>
    %139 = tpu.matmul %138, %131, %cst_127 {dimension_numbers = #tpu.dot_dimension_numbers<[1], [0], [0], [1], [0, 0, 1, 1], [], []>} : vector<8x8xf32>, vector<8x34xf32>, vector<8x34xf32> -> vector<8x34xf32>
    %c0_128 = arith.constant 0 : index
    %c0_129 = arith.constant 0 : index
    %c0_130 = arith.constant 0 : index
    %140 = vector.load %arg8[%c0_128, %c0_129, %c0_130] : memref<2x34x34xf32, #tpu.memory_space<vmem>>, vector<1x34x34xf32>
    %141 = vector.shape_cast %140 : vector<1x34x34xf32> to vector<34x34xf32>
    %cst_131 = arith.constant dense<0.000000e+00> : vector<8x34xf32>
    %142 = tpu.matmul %139, %141, %cst_131 {dimension_numbers = #tpu.dot_dimension_numbers<[1], [0], [0], [1], [0, 0, 1, 1], [], []>} : vector<8x34xf32>, vector<34x34xf32>, vector<8x34xf32> -> vector<8x34xf32>
    %143 = arith.addf %136, %142 : vector<8x34xf32>
    %144 = vector.extract_strided_slice %108 {offsets = [2, 0, 0], sizes = [1, 8, 8], strides = [1, 1, 1]} : vector<3x8x8xf32> to vector<1x8x8xf32>
    %145 = vector.shape_cast %144 : vector<1x8x8xf32> to vector<8x8xf32>
    %cst_132 = arith.constant dense<0.000000e+00> : vector<8x34xf32>
    %146 = tpu.matmul %145, %131, %cst_132 {dimension_numbers = #tpu.dot_dimension_numbers<[1], [0], [0], [1], [0, 0, 1, 1], [], []>} : vector<8x8xf32>, vector<8x34xf32>, vector<8x34xf32> -> vector<8x34xf32>
    %c1_133 = arith.constant 1 : index
    %c0_134 = arith.constant 0 : index
    %c0_135 = arith.constant 0 : index
    %147 = vector.load %arg8[%c1_133, %c0_134, %c0_135] : memref<2x34x34xf32, #tpu.memory_space<vmem>>, vector<1x34x34xf32>
    %148 = vector.shape_cast %147 : vector<1x34x34xf32> to vector<34x34xf32>
    %cst_136 = arith.constant dense<0.000000e+00> : vector<8x34xf32>
    %149 = tpu.matmul %146, %148, %cst_136 {dimension_numbers = #tpu.dot_dimension_numbers<[1], [0], [0], [1], [0, 0, 1, 1], [], []>} : vector<8x34xf32>, vector<34x34xf32>, vector<8x34xf32> -> vector<8x34xf32>
    %150 = arith.addf %143, %149 : vector<8x34xf32>
    %151 = arith.addf %150, %102 : vector<8x34xf32>
    %cst_137 = arith.constant 0.000000e+00 : f32
    %152 = vector.broadcast %cst_137 : f32 to vector<8x34xf32>
    %153 = arith.maximumf %151, %152 : vector<8x34xf32>
    %c2_138 = arith.constant 2 : index
    %c0_139 = arith.constant 0 : index
    %c0_140 = arith.constant 0 : index
    %c0_141 = arith.constant 0 : index
    %154 = vector.load %arg9[%c2_138, %c0_139, %c0_140, %c0_141] : memref<4x3x8x8xf32, #tpu.memory_space<vmem>>, vector<1x3x8x8xf32>
    %155 = vector.shape_cast %154 : vector<1x3x8x8xf32> to vector<3x8x8xf32>
    %c2_142 = arith.constant 2 : index
    %c0_143 = arith.constant 0 : index
    %c0_144 = arith.constant 0 : index
    %156 = vector.load %arg10[%c2_142, %c0_143, %c0_144] : memref<4x8x1xf32, #tpu.memory_space<vmem>>, vector<1x8x1xf32>
    %157 = vector.shape_cast %156 : vector<1x8x1xf32> to vector<8x1xf32>
    %c3_145 = arith.constant 3 : index
    %c0_146 = arith.constant 0 : index
    %c0_147 = arith.constant 0 : index
    %c0_148 = arith.constant 0 : index
    %158 = vector.load %arg9[%c3_145, %c0_146, %c0_147, %c0_148] : memref<4x3x8x8xf32, #tpu.memory_space<vmem>>, vector<1x3x8x8xf32>
    %159 = vector.shape_cast %158 : vector<1x3x8x8xf32> to vector<3x8x8xf32>
    %c3_149 = arith.constant 3 : index
    %c0_150 = arith.constant 0 : index
    %c0_151 = arith.constant 0 : index
    %160 = vector.load %arg10[%c3_149, %c0_150, %c0_151] : memref<4x8x1xf32, #tpu.memory_space<vmem>>, vector<1x8x1xf32>
    %161 = vector.shape_cast %160 : vector<1x8x1xf32> to vector<8x1xf32>
    %162 = vector.extract_strided_slice %155 {offsets = [1, 0, 0], sizes = [1, 8, 8], strides = [1, 1, 1]} : vector<3x8x8xf32> to vector<1x8x8xf32>
    %163 = vector.shape_cast %162 : vector<1x8x8xf32> to vector<8x8xf32>
    %cst_152 = arith.constant dense<0.000000e+00> : vector<8x34xf32>
    %164 = tpu.matmul %163, %153, %cst_152 {dimension_numbers = #tpu.dot_dimension_numbers<[1], [0], [0], [1], [0, 0, 1, 1], [], []>} : vector<8x8xf32>, vector<8x34xf32>, vector<8x34xf32> -> vector<8x34xf32>
    %165 = vector.broadcast %157 : vector<8x1xf32> to vector<8x34xf32>
    %166 = arith.addf %164, %165 : vector<8x34xf32>
    %167 = vector.extract_strided_slice %155 {offsets = [0, 0, 0], sizes = [1, 8, 8], strides = [1, 1, 1]} : vector<3x8x8xf32> to vector<1x8x8xf32>
    %168 = vector.shape_cast %167 : vector<1x8x8xf32> to vector<8x8xf32>
    %cst_153 = arith.constant dense<0.000000e+00> : vector<8x34xf32>
    %169 = tpu.matmul %168, %153, %cst_153 {dimension_numbers = #tpu.dot_dimension_numbers<[1], [0], [0], [1], [0, 0, 1, 1], [], []>} : vector<8x8xf32>, vector<8x34xf32>, vector<8x34xf32> -> vector<8x34xf32>
    %c0_154 = arith.constant 0 : index
    %c0_155 = arith.constant 0 : index
    %c0_156 = arith.constant 0 : index
    %170 = vector.load %arg8[%c0_154, %c0_155, %c0_156] : memref<2x34x34xf32, #tpu.memory_space<vmem>>, vector<1x34x34xf32>
    %171 = vector.shape_cast %170 : vector<1x34x34xf32> to vector<34x34xf32>
    %cst_157 = arith.constant dense<0.000000e+00> : vector<8x34xf32>
    %172 = tpu.matmul %169, %171, %cst_157 {dimension_numbers = #tpu.dot_dimension_numbers<[1], [0], [0], [1], [0, 0, 1, 1], [], []>} : vector<8x34xf32>, vector<34x34xf32>, vector<8x34xf32> -> vector<8x34xf32>
    %173 = arith.addf %166, %172 : vector<8x34xf32>
    %174 = vector.extract_strided_slice %155 {offsets = [2, 0, 0], sizes = [1, 8, 8], strides = [1, 1, 1]} : vector<3x8x8xf32> to vector<1x8x8xf32>
    %175 = vector.shape_cast %174 : vector<1x8x8xf32> to vector<8x8xf32>
    %cst_158 = arith.constant dense<0.000000e+00> : vector<8x34xf32>
    %176 = tpu.matmul %175, %153, %cst_158 {dimension_numbers = #tpu.dot_dimension_numbers<[1], [0], [0], [1], [0, 0, 1, 1], [], []>} : vector<8x8xf32>, vector<8x34xf32>, vector<8x34xf32> -> vector<8x34xf32>
    %c1_159 = arith.constant 1 : index
    %c0_160 = arith.constant 0 : index
    %c0_161 = arith.constant 0 : index
    %177 = vector.load %arg8[%c1_159, %c0_160, %c0_161] : memref<2x34x34xf32, #tpu.memory_space<vmem>>, vector<1x34x34xf32>
    %178 = vector.shape_cast %177 : vector<1x34x34xf32> to vector<34x34xf32>
    %cst_162 = arith.constant dense<0.000000e+00> : vector<8x34xf32>
    %179 = tpu.matmul %176, %178, %cst_162 {dimension_numbers = #tpu.dot_dimension_numbers<[1], [0], [0], [1], [0, 0, 1, 1], [], []>} : vector<8x34xf32>, vector<34x34xf32>, vector<8x34xf32> -> vector<8x34xf32>
    %180 = arith.addf %173, %179 : vector<8x34xf32>
    %cst_163 = arith.constant 0.000000e+00 : f32
    %181 = vector.broadcast %cst_163 : f32 to vector<8x34xf32>
    %182 = arith.maximumf %180, %181 : vector<8x34xf32>
    %183 = vector.extract_strided_slice %159 {offsets = [1, 0, 0], sizes = [1, 8, 8], strides = [1, 1, 1]} : vector<3x8x8xf32> to vector<1x8x8xf32>
    %184 = vector.shape_cast %183 : vector<1x8x8xf32> to vector<8x8xf32>
    %cst_164 = arith.constant dense<0.000000e+00> : vector<8x34xf32>
    %185 = tpu.matmul %184, %182, %cst_164 {dimension_numbers = #tpu.dot_dimension_numbers<[1], [0], [0], [1], [0, 0, 1, 1], [], []>} : vector<8x8xf32>, vector<8x34xf32>, vector<8x34xf32> -> vector<8x34xf32>
    %186 = vector.broadcast %161 : vector<8x1xf32> to vector<8x34xf32>
    %187 = arith.addf %185, %186 : vector<8x34xf32>
    %188 = vector.extract_strided_slice %159 {offsets = [0, 0, 0], sizes = [1, 8, 8], strides = [1, 1, 1]} : vector<3x8x8xf32> to vector<1x8x8xf32>
    %189 = vector.shape_cast %188 : vector<1x8x8xf32> to vector<8x8xf32>
    %cst_165 = arith.constant dense<0.000000e+00> : vector<8x34xf32>
    %190 = tpu.matmul %189, %182, %cst_165 {dimension_numbers = #tpu.dot_dimension_numbers<[1], [0], [0], [1], [0, 0, 1, 1], [], []>} : vector<8x8xf32>, vector<8x34xf32>, vector<8x34xf32> -> vector<8x34xf32>
    %c0_166 = arith.constant 0 : index
    %c0_167 = arith.constant 0 : index
    %c0_168 = arith.constant 0 : index
    %191 = vector.load %arg8[%c0_166, %c0_167, %c0_168] : memref<2x34x34xf32, #tpu.memory_space<vmem>>, vector<1x34x34xf32>
    %192 = vector.shape_cast %191 : vector<1x34x34xf32> to vector<34x34xf32>
    %cst_169 = arith.constant dense<0.000000e+00> : vector<8x34xf32>
    %193 = tpu.matmul %190, %192, %cst_169 {dimension_numbers = #tpu.dot_dimension_numbers<[1], [0], [0], [1], [0, 0, 1, 1], [], []>} : vector<8x34xf32>, vector<34x34xf32>, vector<8x34xf32> -> vector<8x34xf32>
    %194 = arith.addf %187, %193 : vector<8x34xf32>
    %195 = vector.extract_strided_slice %159 {offsets = [2, 0, 0], sizes = [1, 8, 8], strides = [1, 1, 1]} : vector<3x8x8xf32> to vector<1x8x8xf32>
    %196 = vector.shape_cast %195 : vector<1x8x8xf32> to vector<8x8xf32>
    %cst_170 = arith.constant dense<0.000000e+00> : vector<8x34xf32>
    %197 = tpu.matmul %196, %182, %cst_170 {dimension_numbers = #tpu.dot_dimension_numbers<[1], [0], [0], [1], [0, 0, 1, 1], [], []>} : vector<8x8xf32>, vector<8x34xf32>, vector<8x34xf32> -> vector<8x34xf32>
    %c1_171 = arith.constant 1 : index
    %c0_172 = arith.constant 0 : index
    %c0_173 = arith.constant 0 : index
    %198 = vector.load %arg8[%c1_171, %c0_172, %c0_173] : memref<2x34x34xf32, #tpu.memory_space<vmem>>, vector<1x34x34xf32>
    %199 = vector.shape_cast %198 : vector<1x34x34xf32> to vector<34x34xf32>
    %cst_174 = arith.constant dense<0.000000e+00> : vector<8x34xf32>
    %200 = tpu.matmul %197, %199, %cst_174 {dimension_numbers = #tpu.dot_dimension_numbers<[1], [0], [0], [1], [0, 0, 1, 1], [], []>} : vector<8x34xf32>, vector<34x34xf32>, vector<8x34xf32> -> vector<8x34xf32>
    %201 = arith.addf %194, %200 : vector<8x34xf32>
    %202 = arith.addf %201, %153 : vector<8x34xf32>
    %cst_175 = arith.constant 0.000000e+00 : f32
    %203 = vector.broadcast %cst_175 : f32 to vector<8x34xf32>
    %204 = arith.maximumf %202, %203 : vector<8x34xf32>
    %c0_176 = arith.constant 0 : index
    %c0_177 = arith.constant 0 : index
    %205 = vector.load %arg12[%c0_176, %c0_177] : memref<34x4xf32, #tpu.memory_space<vmem>>, vector<34x4xf32>
    %cst_178 = arith.constant dense<0.000000e+00> : vector<8x4xf32>
    %206 = tpu.matmul %204, %205, %cst_178 {dimension_numbers = #tpu.dot_dimension_numbers<[1], [0], [0], [1], [0, 0, 1, 1], [], []>} : vector<8x34xf32>, vector<34x4xf32>, vector<8x4xf32> -> vector<8x4xf32>
    %c0_179 = arith.constant 0 : index
    %c0_180 = arith.constant 0 : index
    %c0_181 = arith.constant 0 : index
    %207 = vector.load %arg11[%c0_179, %c0_180, %c0_181] : memref<2x2x8xf32, #tpu.memory_space<vmem>>, vector<1x2x8xf32>
    %208 = vector.shape_cast %207 : vector<1x2x8xf32> to vector<2x8xf32>
    %209 = vector.extract_strided_slice %206 {offsets = [0, 0], sizes = [8, 2], strides = [1, 1]} : vector<8x4xf32> to vector<8x2xf32>
    %cst_182 = arith.constant dense<0.000000e+00> : vector<2x2xf32>
    %210 = tpu.matmul %208, %209, %cst_182 {dimension_numbers = #tpu.dot_dimension_numbers<[1], [0], [0], [1], [0, 0, 1, 1], [], []>} : vector<2x8xf32>, vector<8x2xf32>, vector<2x2xf32> -> vector<2x2xf32>
    %c1_183 = arith.constant 1 : index
    %c0_184 = arith.constant 0 : index
    %c0_185 = arith.constant 0 : index
    %211 = vector.load %arg11[%c1_183, %c0_184, %c0_185] : memref<2x2x8xf32, #tpu.memory_space<vmem>>, vector<1x2x8xf32>
    %212 = vector.shape_cast %211 : vector<1x2x8xf32> to vector<2x8xf32>
    %213 = vector.extract_strided_slice %206 {offsets = [0, 2], sizes = [8, 2], strides = [1, 1]} : vector<8x4xf32> to vector<8x2xf32>
    %cst_186 = arith.constant dense<0.000000e+00> : vector<2x2xf32>
    %214 = tpu.matmul %212, %213, %cst_186 {dimension_numbers = #tpu.dot_dimension_numbers<[1], [0], [0], [1], [0, 0, 1, 1], [], []>} : vector<2x8xf32>, vector<8x2xf32>, vector<2x2xf32> -> vector<2x2xf32>
    %215 = arith.addf %210, %214 : vector<2x2xf32>
    %c0_187 = arith.constant 0 : index
    %c0_188 = arith.constant 0 : index
    %216 = vector.load %arg13[%c0_187, %c0_188] : memref<2x2xf32, #tpu.memory_space<vmem>>, vector<2x2xf32>
    tpu.vector_store %arg13[%c0_187, %c0_188], %215 {strides = array<i32>} : memref<2x2xf32, #tpu.memory_space<vmem>>, vector<2x2xf32>,
    return
  }
}

</mosaic_0001>

<llo_original>
// kernel: forward_pallas.1
$region0: #{forward_pallas.1}
  #allocation0 [shape = 'u32[]', space=smem, size = 0x4, offset = 0x4, fixed_abs, tag = 'smem constant byte address 0x4 - core index']
  #allocation1 [shape = 'u32[144,128]{1,0:T(1,128)}', space=vmem, size = 0x12000, scoped, tag = 'internal scratch']
  %s0 = inlined_call_operand.vmem [shape: f32[8,128], index: 0, kind: input, shape index: {}]
  %s1 = inlined_call_operand.hbm [shape: f32[4,128,128], index: 1, kind: input, shape index: {}]
  %s2 = inlined_call_operand.hbm [shape: f32[4,8,8], index: 2, kind: input, shape index: {}]
  %s3 = inlined_call_operand.vmem [shape: f32[8,1], index: 3, kind: input, shape index: {}]
  %s4 = inlined_call_operand.vmem [shape: f32[128,32], index: 4, kind: input, shape index: {}]
  %s5 = inlined_call_operand.hbm [shape: f32[8,8,8], index: 5, kind: input, shape index: {}]
  %s6 = inlined_call_operand.vmem [shape: f32[8,1], index: 6, kind: input, shape index: {}]
  %s7 = inlined_call_operand.hbm [shape: f32[8,32,34], index: 7, kind: input, shape index: {}]
  %s8 = inlined_call_operand.hbm [shape: f32[2,34,34], index: 8, kind: input, shape index: {}]
  %s9 = inlined_call_operand.hbm [shape: f32[4,3,8,8], index: 9, kind: input, shape index: {}]
  %s10 = inlined_call_operand.vmem [shape: f32[4,8,1], index: 10, kind: input, shape index: {}]
  %s11 = inlined_call_operand.hbm [shape: f32[2,2,8], index: 11, kind: input, shape index: {}]
  %s12 = inlined_call_operand.hbm [shape: f32[34,4], index: 12, kind: input, shape index: {}]
  %s13 = inlined_call_operand.vmem [shape: f32[2,2], index: 13, kind: output, shape index: {}]
  %s14 = sld [smem:[#allocation0]]
  $region94: #{forward_pallas.1} parent=0
    _
  %s16 = ssub.s32 1, %s14
  %s17 = scalar_select 0, %s16, %s14
  $region1: #{forward_pallas.1} parent=0
    #allocation2 [shape = 'u8[262144]{0}', space=vmem, size = 0x40000, scoped, tag = 'input window, operand 1, single buffered']
    #allocation3 [shape = 's32[1]{0}', space=sflag, size = 0x4, scoped, tag = 'scoped memory for forward_pallas.1']
    #allocation4 [shape = 'u8[16384]{0}', space=vmem, size = 0x4000, scoped, tag = 'input window, operand 2, single buffered']
    #allocation5 [shape = 's32[1]{0}', space=sflag, size = 0x4, scoped, tag = 'scoped memory for forward_pallas.1']
    #allocation6 [shape = 'u8[32768]{0}', space=vmem, size = 0x8000, scoped, tag = 'input window, operand 5, single buffered']
    #allocation7 [shape = 'u8[131072]{0}', space=vmem, size = 0x20000, scoped, tag = 'input window, operand 7, single buffered']
    #allocation8 [shape = 's32[1]{0}', space=sflag, size = 0x4, scoped, tag = 'scoped memory for forward_pallas.1']
    #allocation9 [shape = 'u8[40960]{0}', space=vmem, size = 0xa000, scoped, tag = 'input window, operand 8, single buffered']
    #allocation10 [shape = 'u8[49152]{0}', space=vmem, size = 0xc000, scoped, tag = 'input window, operand 9, single buffered']
    #allocation11 [shape = 's32[1]{0}', space=sflag, size = 0x4, scoped, tag = 'scoped memory for forward_pallas.1']
    #allocation12 [shape = 'u8[2048]{0}', space=vmem, size = 0x800, scoped, tag = 'input window, operand 11, single buffered']
    #allocation13 [shape = 'u8[20480]{0}', space=vmem, size = 0x5000, scoped, tag = 'input window, operand 12, single buffered']
    #allocation14 [shape = 's32[1]{0}', space=sflag, size = 0x4, scoped, tag = 'scoped memory for forward_pallas.1']
    %18 = vsyncpa [#allocation3], 0
    %19 = vsyncpa [#allocation5], 0
    %20 = vsyncpa [#allocation8], 0
    %21 = vsyncpa [#allocation11], 0
    %22 = vsyncpa [#allocation14], 0
    // Predicated region
    $region2: #{forward_pallas.1} parent=1 // pred_check
      _
    $region3: #{forward_pallas.1} parent=1 // pred_check_branch
      %24 = sbr.rel (0) target = $region5
    $region4: #{forward_pallas.1} parent=1 // pred_region
      _
    $region5: #{forward_pallas.1} parent=1 // pred_fallthru
      _
    // Predicated region
    $region6: #{forward_pallas.1} parent=1 // pred_check
      _
    $region7: #{forward_pallas.1} parent=1 // pred_check_branch
      %26 = sbr.rel (0) target = $region9
    $region8: #{forward_pallas.1} parent=1 // pred_region
      %s28 = ssub.s32 8192, 8192
      %29 = vsyncadd [#allocation3], %s28
      %s30 = sshll.u32 [#allocation2], 4
      %s31 = int_to_ptr.vmem [resolvable:$true] %s30
      %36 = dma.hbm_to_vmem [thread:$0]  %s1, 8192, %s31, [#allocation3], 128, 128, 8
    $region9: #{forward_pallas.1} parent=1 // pred_fallthru
      _
    // Predicated region
    $region10: #{forward_pallas.1} parent=1 // pred_check
      _
    $region11: #{forward_pallas.1} parent=1 // pred_check_branch
      %38 = sbr.rel (0) target = $region13
    $region12: #{forward_pallas.1} parent=1 // pred_region
      %s40 = ssub.s32 512, 512
      %41 = vsyncadd [#allocation5], %s40
      %s42 = sshll.u32 [#allocation4], 4
      %s43 = int_to_ptr.vmem [resolvable:$true] %s42
      %48 = dma.hbm_to_vmem [thread:$0]  %s2, 512, %s43, [#allocation5], 128, 128, 8
    $region13: #{forward_pallas.1} parent=1 // pred_fallthru
      _
    // Predicated region
    $region14: #{forward_pallas.1} parent=1 // pred_check
      _
    $region15: #{forward_pallas.1} parent=1 // pred_check_branch
      %50 = sbr.rel (0) target = $region17
    $region16: #{forward_pallas.1} parent=1 // pred_region
      _
    $region17: #{forward_pallas.1} parent=1 // pred_fallthru
      _
    // Predicated region
    $region18: #{forward_pallas.1} parent=1 // pred_check
      _
    $region19: #{forward_pallas.1} parent=1 // pred_check_branch
      %52 = sbr.rel (0) target = $region21
    $region20: #{forward_pallas.1} parent=1 // pred_region
      _
    $region21: #{forward_pallas.1} parent=1 // pred_fallthru
      _
    // Predicated region
    $region22: #{forward_pallas.1} parent=1 // pred_check
      _
    $region23: #{forward_pallas.1} parent=1 // pred_check_branch
      %54 = sbr.rel (0) target = $region25
    $region24: #{forward_pallas.1} parent=1 // pred_region
      %s56 = ssub.s32 1024, 1024
      %57 = vsyncadd [#allocation5], %s56
      %s58 = sshll.u32 [#allocation6], 4
      %s59 = int_to_ptr.vmem [resolvable:$true] %s58
      %64 = dma.hbm_to_vmem [thread:$0]  %s5, 1024, %s59, [#allocation5], 128, 128, 8
    $region25: #{forward_pallas.1} parent=1 // pred_fallthru
      _
    // Predicated region
    $region26: #{forward_pallas.1} parent=1 // pred_check
      _
    $region27: #{forward_pallas.1} parent=1 // pred_check_branch
      %66 = sbr.rel (0) target = $region29
    $region28: #{forward_pallas.1} parent=1 // pred_region
      _
    $region29: #{forward_pallas.1} parent=1 // pred_fallthru
      _
    // Predicated region
    $region30: #{forward_pallas.1} parent=1 // pred_check
      _
    $region31: #{forward_pallas.1} parent=1 // pred_check_branch
      %68 = sbr.rel (0) target = $region33
    $region32: #{forward_pallas.1} parent=1 // pred_region
      %s70 = ssub.s32 4096, 4096
      %71 = vsyncadd [#allocation8], %s70
      %s72 = sshll.u32 [#allocation7], 4
      %s73 = int_to_ptr.vmem [resolvable:$true] %s72
      %78 = dma.hbm_to_vmem [thread:$0]  %s7, 4096, %s73, [#allocation8], 128, 128, 8
    $region33: #{forward_pallas.1} parent=1 // pred_fallthru
      _
    // Predicated region
    $region34: #{forward_pallas.1} parent=1 // pred_check
      _
    $region35: #{forward_pallas.1} parent=1 // pred_check_branch
      %80 = sbr.rel (0) target = $region37
    $region36: #{forward_pallas.1} parent=1 // pred_region
      %s82 = ssub.s32 1280, 1280
      %83 = vsyncadd [#allocation8], %s82
      %s84 = sshll.u32 [#allocation9], 4
      %s85 = int_to_ptr.vmem [resolvable:$true] %s84
      %90 = dma.hbm_to_vmem [thread:$0]  %s8, 1280, %s85, [#allocation8], 128, 128, 8
    $region37: #{forward_pallas.1} parent=1 // pred_fallthru
      _
    // Predicated region
    $region38: #{forward_pallas.1} parent=1 // pred_check
      _
    $region39: #{forward_pallas.1} parent=1 // pred_check_branch
      %92 = sbr.rel (0) target = $region41
    $region40: #{forward_pallas.1} parent=1 // pred_region
      %s94 = ssub.s32 1536, 1536
      %95 = vsyncadd [#allocation11], %s94
      %s96 = sshll.u32 [#allocation10], 4
      %s97 = int_to_ptr.vmem [resolvable:$true] %s96
      %102 = dma.hbm_to_vmem [thread:$0]  %s9, 1536, %s97, [#allocation11], 128, 128, 8
    $region41: #{forward_pallas.1} parent=1 // pred_fallthru
      _
    // Predicated region
    $region42: #{forward_pallas.1} parent=1 // pred_check
      _
    $region43: #{forward_pallas.1} parent=1 // pred_check_branch
      %104 = sbr.rel (0) target = $region45
    $region44: #{forward_pallas.1} parent=1 // pred_region
      _
    $region45: #{forward_pallas.1} parent=1 // pred_fallthru
      _
    // Predicated region
    $region46: #{forward_pallas.1} parent=1 // pred_check
      _
    $region47: #{forward_pallas.1} parent=1 // pred_check_branch
      %106 = sbr.rel (0) target = $region49
    $region48: #{forward_pallas.1} parent=1 // pred_region
      %s108 = ssub.s32 64, 64
      %109 = vsyncadd [#allocation11], %s108
      %s110 = sshll.u32 [#allocation12], 4
      %s111 = int_to_ptr.vmem [resolvable:$true] %s110
      %116 = dma.hbm_to_vmem [thread:$0]  %s11, 64, %s111, [#allocation11], 32, 32, 2
    $region49: #{forward_pallas.1} parent=1 // pred_fallthru
      _
    // Predicated region
    $region50: #{forward_pallas.1} parent=1 // pred_check
      _
    $region51: #{forward_pallas.1} parent=1 // pred_check_branch
      %118 = sbr.rel (0) target = $region53
    $region52: #{forward_pallas.1} parent=1 // pred_region
      %s120 = ssub.s32 640, 640
      %121 = vsyncadd [#allocation14], %s120
      %s122 = sshll.u32 [#allocation13], 4
      %s123 = int_to_ptr.vmem [resolvable:$true] %s122
      %128 = dma.hbm_to_vmem [thread:$0]  %s12, 640, %s123, [#allocation14], 128, 128, 8
    $region53: #{forward_pallas.1} parent=1 // pred_fallthru
      _
    // Predicated region
    $region54: #{forward_pallas.1} parent=1 // pred_check
      _
    $region55: #{forward_pallas.1} parent=1 // pred_check_branch
      %130 = sbr.rel (0) target = $region57
    $region56: #{forward_pallas.1} parent=1 // pred_region
      %131 = dma.done [#allocation3], 8192
    $region57: #{forward_pallas.1} parent=1 // pred_fallthru
      _
    // Predicated region
    $region58: #{forward_pallas.1} parent=1 // pred_check
      _
    $region59: #{forward_pallas.1} parent=1 // pred_check_branch
      %133 = sbr.rel (0) target = $region61
    $region60: #{forward_pallas.1} parent=1 // pred_region
      %134 = dma.done [#allocation5], 512
    $region61: #{forward_pallas.1} parent=1 // pred_fallthru
      _
    // Predicated region
    $region62: #{forward_pallas.1} parent=1 // pred_check
      _
    $region63: #{forward_pallas.1} parent=1 // pred_check_branch
      %136 = sbr.rel (0) target = $region65
    $region64: #{forward_pallas.1} parent=1 // pred_region
      %137 = dma.done [#allocation5], 1024
    $region65: #{forward_pallas.1} parent=1 // pred_fallthru
      _
    // Predicated region
    $region66: #{forward_pallas.1} parent=1 // pred_check
      _
    $region67: #{forward_pallas.1} parent=1 // pred_check_branch
      %139 = sbr.rel (0) target = $region69
    $region68: #{forward_pallas.1} parent=1 // pred_region
      %140 = dma.done [#allocation8], 4096
    $region69: #{forward_pallas.1} parent=1 // pred_fallthru
      _
    // Predicated region
    $region70: #{forward_pallas.1} parent=1 // pred_check
      _
    $region71: #{forward_pallas.1} parent=1 // pred_check_branch
      %142 = sbr.rel (0) target = $region73
    $region72: #{forward_pallas.1} parent=1 // pred_region
      %143 = dma.done [#allocation8], 1280
    $region73: #{forward_pallas.1} parent=1 // pred_fallthru
      _
    // Predicated region
    $region74: #{forward_pallas.1} parent=1 // pred_check
      _
    $region75: #{forward_pallas.1} parent=1 // pred_check_branch
      %145 = sbr.rel (0) target = $region77
    $region76: #{forward_pallas.1} parent=1 // pred_region
      %146 = dma.done [#allocation11], 1536
    $region77: #{forward_pallas.1} parent=1 // pred_fallthru
      _
    // Predicated region
    $region78: #{forward_pallas.1} parent=1 // pred_check
      _
    $region79: #{forward_pallas.1} parent=1 // pred_check_branch
      %148 = sbr.rel (0) target = $region81
    $region80: #{forward_pallas.1} parent=1 // pred_region
      %149 = dma.done [#allocation11], 64
    $region81: #{forward_pallas.1} parent=1 // pred_fallthru
      _
    // Predicated region
    $region82: #{forward_pallas.1} parent=1 // pred_check
      _
    $region83: #{forward_pallas.1} parent=1 // pred_check_branch
      %151 = sbr.rel (0) target = $region85
    $region84: #{forward_pallas.1} parent=1 // pred_region
      %152 = dma.done [#allocation14], 640
    $region85: #{forward_pallas.1} parent=1 // pred_fallthru
      _
    %v153 = vld [vmem:[%s0] sm:$0xff]
    %v154 = vld [vmem:[#allocation4] sm:$0xff]
    %vm155 = vcmask 64512
    %v157 = vsel %vm155, %v154, 0
    %159 = vmatprep.subr.mxu0 0.0
    %160 = vmatpush1.msra.mxu0 0.0
    %161 = vmatprep.subr.mxu0 0.0
    %162 = vmatpush1.msra.mxu0 0.0
    %163 = vmatprep.subr.mxu0 0.0
    %164 = vmatpush1.msra.mxu0 0.0
    %165 = vmatprep.subr.mxu0 0.0
    %166 = vmatpush1.msra.mxu0 0.0
    %167 = vmatprep.subr.mxu0 0.0
    %168 = vmatpush1.msra.mxu0 0.0
    %169 = vmatprep.subr.mxu0 0.0
    %170 = vmatpush1.msra.mxu0 0.0
    %171 = vmatprep.subr.mxu0 0.0
    %172 = vmatpush1.msra.mxu0 0.0
    %173 = vmatprep.subr.mxu0 0.0
    %174 = vmatpush1.msra.mxu0 0.0
    %175 = vmatprep.subr.mxu0 0.0
    %176 = vmatpush1.msra.mxu0 0.0
    %177 = vmatprep.subr.mxu0 0.0
    %178 = vmatpush1.msra.mxu0 0.0
    %179 = vmatprep.subr.mxu0 0.0
    %180 = vmatpush1.msra.mxu0 0.0
    %181 = vmatprep.subr.mxu0 0.0
    %182 = vmatpush1.msra.mxu0 0.0
    %183 = vmatprep.subr.mxu0 0.0
    %184 = vmatpush1.msra.mxu0 0.0
    %185 = vmatprep.subr.mxu0 0.0
    %186 = vmatpush1.msra.mxu0 0.0
    %187 = vmatprep.subr.mxu0 0.0
    %188 = vmatpush1.msra.mxu0 0.0
    %189 = vmatprep.subr.mxu0 0.0
    %190 = vmatpush1.msra.mxu0 %v153
    %191 = vmatprep.subr.mxu0 0.0
    %192 = vmatpush2.msra.mxu0 0.0
    %193 = vmatprep.subr.mxu0 0.0
    %194 = vmatpush2.msra.mxu0 0.0
    %195 = vmatprep.subr.mxu0 0.0
    %196 = vmatpush2.msra.mxu0 0.0
    %197 = vmatprep.subr.mxu0 0.0
    %198 = vmatpush2.msra.mxu0 0.0
    %199 = vmatprep.subr.mxu0 0.0
    %200 = vmatpush2.msra.mxu0 0.0
    %201 = vmatprep.subr.mxu0 0.0
    %202 = vmatpush2.msra.mxu0 0.0
    %203 = vmatprep.subr.mxu0 0.0
    %204 = vmatpush2.msra.mxu0 0.0
    %205 = vmatprep.subr.mxu0 0.0
    %206 = vmatpush2.msra.mxu0 0.0
    %207 = vmatprep.subr.mxu0 0.0
    %208 = vmatpush2.msra.mxu0 0.0
    %209 = vmatprep.subr.mxu0 0.0
    %210 = vmatpush2.msra.mxu0 0.0
    %211 = vmatprep.subr.mxu0 0.0
    %212 = vmatpush2.msra.mxu0 0.0
    %213 = vmatprep.subr.mxu0 0.0
    %214 = vmatpush2.msra.mxu0 0.0
    %215 = vmatprep.subr.mxu0 0.0
    %216 = vmatpush2.msra.mxu0 0.0
    %217 = vmatprep.subr.mxu0 0.0
    %218 = vmatpush2.msra.mxu0 0.0
    %219 = vmatprep.subr.mxu0 0.0
    %220 = vmatpush2.msra.mxu0 0.0
    %221 = vmatprep.subr.mxu0 0.0
    %222 = vmatpush2.msra.mxu0 0.0
    %223 = vmatprep.mubr.f32.mxu0 0.0
    %224 = vmatmul.mubr.f32.gmra.mxu0 %v157
    %v225 = vpop.f32.mrf.mxu0
    %v226 = vadd.f32 0.0, %v225
    %v227 = vpop.f32.mrf.mxu0
    %228 = vdwg.mxu0
    %v229 = vld [vmem:[#allocation2] sm:$0xff]
    %v230 = vld [vmem:[#allocation2 + $0x8] sm:$0xff]
    %v231 = vld [vmem:[#allocation2 + $0x10] sm:$0xff]
    %v232 = vld [vmem:[#allocation2 + $0x18] sm:$0xff]
    %v233 = vld [vmem:[#allocation2 + $0x20] sm:$0xff]
    %v234 = vld [vmem:[#allocation2 + $0x28] sm:$0xff]
    %v235 = vld [vmem:[#allocation2 + $0x30] sm:$0xff]
    %v236 = vld [vmem:[#allocation2 + $0x38] sm:$0xff]
    %v237 = vld [vmem:[#allocation2 + $0x40] sm:$0xff]
    %v238 = vld [vmem:[#allocation2 + $0x48] sm:$0xff]
    %v239 = vld [vmem:[#allocation2 + $0x50] sm:$0xff]
    %v240 = vld [vmem:[#allocation2 + $0x58] sm:$0xff]
    %v241 = vld [vmem:[#allocation2 + $0x60] sm:$0xff]
    %v242 = vld [vmem:[#allocation2 + $0x68] sm:$0xff]
    %v243 = vld [vmem:[#allocation2 + $0x70] sm:$0xff]
    %v244 = vld [vmem:[#allocation2 + $0x78] sm:$0xff]
    %s245 = scalar_lea.vmem [#allocation4], 8
    %v246 = vld [vmem:[%s245] sm:$0xff]
    %v248 = vsel %vm155, %v246, 0
    %250 = vmatprep.subr.mxu0 0.0
    %251 = vmatpush1.msra.mxu0 0.0
    %252 = vmatprep.subr.mxu0 0.0
    %253 = vmatpush1.msra.mxu0 0.0
    %254 = vmatprep.subr.mxu0 0.0
    %255 = vmatpush1.msra.mxu0 0.0
    %256 = vmatprep.subr.mxu0 0.0
    %257 = vmatpush1.msra.mxu0 0.0
    %258 = vmatprep.subr.mxu0 0.0
    %259 = vmatpush1.msra.mxu0 0.0
    %260 = vmatprep.subr.mxu0 0.0
    %261 = vmatpush1.msra.mxu0 0.0
    %262 = vmatprep.subr.mxu0 0.0
    %263 = vmatpush1.msra.mxu0 0.0
    %264 = vmatprep.subr.mxu0 0.0
    %265 = vmatpush1.msra.mxu0 0.0
    %266 = vmatprep.subr.mxu0 0.0
    %267 = vmatpush1.msra.mxu0 0.0
    %268 = vmatprep.subr.mxu0 0.0
    %269 = vmatpush1.msra.mxu0 0.0
    %270 = vmatprep.subr.mxu0 0.0
    %271 = vmatpush1.msra.mxu0 0.0
    %272 = vmatprep.subr.mxu0 0.0
    %273 = vmatpush1.msra.mxu0 0.0
    %274 = vmatprep.subr.mxu0 0.0
    %275 = vmatpush1.msra.mxu0 0.0
    %276 = vmatprep.subr.mxu0 0.0
    %277 = vmatpush1.msra.mxu0 0.0
    %278 = vmatprep.subr.mxu0 0.0
    %279 = vmatpush1.msra.mxu0 0.0
    %280 = vmatprep.subr.mxu0 0.0
    %281 = vmatpush1.msra.mxu0 %v153
    %282 = vmatprep.subr.mxu0 0.0
    %283 = vmatpush2.msra.mxu0 0.0
    %284 = vmatprep.subr.mxu0 0.0
    %285 = vmatpush2.msra.mxu0 0.0
    %286 = vmatprep.subr.mxu0 0.0
    %287 = vmatpush2.msra.mxu0 0.0
    %288 = vmatprep.subr.mxu0 0.0
    %289 = vmatpush2.msra.mxu0 0.0
    %290 = vmatprep.subr.mxu0 0.0
    %291 = vmatpush2.msra.mxu0 0.0
    %292 = vmatprep.subr.mxu0 0.0
    %293 = vmatpush2.msra.mxu0 0.0
    %294 = vmatprep.subr.mxu0 0.0
    %295 = vmatpush2.msra.mxu0 0.0
    %296 = vmatprep.subr.mxu0 0.0
    %297 = vmatpush2.msra.mxu0 0.0
    %298 = vmatprep.subr.mxu0 0.0
    %299 = vmatpush2.msra.mxu0 0.0
    %300 = vmatprep.subr.mxu0 0.0
    %301 = vmatpush2.msra.mxu0 0.0
    %302 = vmatprep.subr.mxu0 0.0
    %303 = vmatpush2.msra.mxu0 0.0
    %304 = vmatprep.subr.mxu0 0.0
    %305 = vmatpush2.msra.mxu0 0.0
    %306 = vmatprep.subr.mxu0 0.0
    %307 = vmatpush2.msra.mxu0 0.0
    %308 = vmatprep.subr.mxu0 0.0
    %309 = vmatpush2.msra.mxu0 0.0
    %310 = vmatprep.subr.mxu0 0.0
    %311 = vmatpush2.msra.mxu0 0.0
    %312 = vmatprep.subr.mxu0 0.0
    %313 = vmatpush2.msra.mxu0 0.0
    %314 = vmatprep.mubr.f32.mxu0 0.0
    %315 = vmatmul.mubr.f32.gmra.mxu0 %v248
    %v316 = vpop.f32.mrf.mxu0
    %v317 = vadd.f32 0.0, %v316
    %v318 = vpop.f32.mrf.mxu0
    %319 = vdwg.mxu0
    %s320 = scalar_lea.vmem [#allocation2], 128
    %v321 = vld [vmem:[%s320] sm:$0xff]
    %v322 = vld [vmem:[%s320 + $0x8] sm:$0xff]
    %v323 = vld [vmem:[%s320 + $0x10] sm:$0xff]
    %v324 = vld [vmem:[%s320 + $0x18] sm:$0xff]
    %v325 = vld [vmem:[%s320 + $0x20] sm:$0xff]
    %v326 = vld [vmem:[%s320 + $0x28] sm:$0xff]
    %v327 = vld [vmem:[%s320 + $0x30] sm:$0xff]
    %v328 = vld [vmem:[%s320 + $0x38] sm:$0xff]
    %v329 = vld [vmem:[%s320 + $0x40] sm:$0xff]
    %v330 = vld [vmem:[%s320 + $0x48] sm:$0xff]
    %v331 = vld [vmem:[%s320 + $0x50] sm:$0xff]
    %v332 = vld [vmem:[%s320 + $0x58] sm:$0xff]
    %v333 = vld [vmem:[%s320 + $0x60] sm:$0xff]
    %v334 = vld [vmem:[%s320 + $0x68] sm:$0xff]
    %v335 = vld [vmem:[%s320 + $0x70] sm:$0xff]
    %v336 = vld [vmem:[%s320 + $0x78] sm:$0xff]
    %337 = vmatprep.subr.mxu0 0.0
    %338 = vmatpush1.msra.mxu0 %v336
    %339 = vmatprep.subr.mxu0 0.0
    %340 = vmatpush1.msra.mxu0 %v335
    %341 = vmatprep.subr.mxu0 0.0
    %342 = vmatpush1.msra.mxu0 %v334
    %343 = vmatprep.subr.mxu0 0.0
    %344 = vmatpush1.msra.mxu0 %v333
    %345 = vmatprep.subr.mxu0 0.0
    %346 = vmatpush1.msra.mxu0 %v332
    %347 = vmatprep.subr.mxu0 0.0
    %348 = vmatpush1.msra.mxu0 %v331
    %349 = vmatprep.subr.mxu0 0.0
    %350 = vmatpush1.msra.mxu0 %v330
    %351 = vmatprep.subr.mxu0 0.0
    %352 = vmatpush1.msra.mxu0 %v329
    %353 = vmatprep.subr.mxu0 0.0
    %354 = vmatpush1.msra.mxu0 %v328
    %355 = vmatprep.subr.mxu0 0.0
    %356 = vmatpush1.msra.mxu0 %v327
    %357 = vmatprep.subr.mxu0 0.0
    %358 = vmatpush1.msra.mxu0 %v326
    %359 = vmatprep.subr.mxu0 0.0
    %360 = vmatpush1.msra.mxu0 %v325
    %361 = vmatprep.subr.mxu0 0.0
    %362 = vmatpush1.msra.mxu0 %v324
    %363 = vmatprep.subr.mxu0 0.0
    %364 = vmatpush1.msra.mxu0 %v323
    %365 = vmatprep.subr.mxu0 0.0
    %366 = vmatpush1.msra.mxu0 %v322
    %367 = vmatprep.subr.mxu0 0.0
    %368 = vmatpush1.msra.mxu0 %v321
    %369 = vmatprep.subr.mxu0 0.0
    %370 = vmatpush2.msra.mxu0 0.0
    %371 = vmatprep.subr.mxu0 0.0
    %372 = vmatpush2.msra.mxu0 0.0
    %373 = vmatprep.subr.mxu0 0.0
    %374 = vmatpush2.msra.mxu0 0.0
    %375 = vmatprep.subr.mxu0 0.0
    %376 = vmatpush2.msra.mxu0 0.0
    %377 = vmatprep.subr.mxu0 0.0
    %378 = vmatpush2.msra.mxu0 0.0
    %379 = vmatprep.subr.mxu0 0.0
    %380 = vmatpush2.msra.mxu0 0.0
    %381 = vmatprep.subr.mxu0 0.0
    %382 = vmatpush2.msra.mxu0 0.0
    %383 = vmatprep.subr.mxu0 0.0
    %384 = vmatpush2.msra.mxu0 0.0
    %385 = vmatprep.subr.mxu0 0.0
    %386 = vmatpush2.msra.mxu0 0.0
    %387 = vmatprep.subr.mxu0 0.0
    %388 = vmatpush2.msra.mxu0 0.0
    %389 = vmatprep.subr.mxu0 0.0
    %390 = vmatpush2.msra.mxu0 0.0
    %391 = vmatprep.subr.mxu0 0.0
    %392 = vmatpush2.msra.mxu0 0.0
    %393 = vmatprep.subr.mxu0 0.0
    %394 = vmatpush2.msra.mxu0 0.0
    %395 = vmatprep.subr.mxu0 0.0
    %396 = vmatpush2.msra.mxu0 0.0
    %397 = vmatprep.subr.mxu0 0.0
    %398 = vmatpush2.msra.mxu0 0.0
    %399 = vmatprep.subr.mxu0 0.0
    %400 = vmatpush2.msra.mxu0 0.0
    %401 = vmatprep.mubr.f32.mxu0 0.0
    %402 = vmatmul.mubr.f32.gmra.mxu0 %v317
    %v403 = vpop.f32.mrf.mxu0
    %v404 = vadd.f32 0.0, %v403
    %v405 = vpop.f32.mrf.mxu0
    %406 = vdwg.mxu0
    %407 = vmatprep.subr.mxu0 0.0
    %408 = vmatpush1.msra.mxu0 %v244
    %409 = vmatprep.subr.mxu0 0.0
    %410 = vmatpush1.msra.mxu0 %v243
    %411 = vmatprep.subr.mxu0 0.0
    %412 = vmatpush1.msra.mxu0 %v242
    %413 = vmatprep.subr.mxu0 0.0
    %414 = vmatpush1.msra.mxu0 %v241
    %415 = vmatprep.subr.mxu0 0.0
    %416 = vmatpush1.msra.mxu0 %v240
    %417 = vmatprep.subr.mxu0 0.0
    %418 = vmatpush1.msra.mxu0 %v239
    %419 = vmatprep.subr.mxu0 0.0
    %420 = vmatpush1.msra.mxu0 %v238
    %421 = vmatprep.subr.mxu0 0.0
    %422 = vmatpush1.msra.mxu0 %v237
    %423 = vmatprep.subr.mxu0 0.0
    %424 = vmatpush1.msra.mxu0 %v236
    %425 = vmatprep.subr.mxu0 0.0
    %426 = vmatpush1.msra.mxu0 %v235
    %427 = vmatprep.subr.mxu0 0.0
    %428 = vmatpush1.msra.mxu0 %v234
    %429 = vmatprep.subr.mxu0 0.0
    %430 = vmatpush1.msra.mxu0 %v233
    %431 = vmatprep.subr.mxu0 0.0
    %432 = vmatpush1.msra.mxu0 %v232
    %433 = vmatprep.subr.mxu0 0.0
    %434 = vmatpush1.msra.mxu0 %v231
    %435 = vmatprep.subr.mxu0 0.0
    %436 = vmatpush1.msra.mxu0 %v230
    %437 = vmatprep.subr.mxu0 0.0
    %438 = vmatpush1.msra.mxu0 %v229
    %439 = vmatprep.subr.mxu0 0.0
    %440 = vmatpush2.msra.mxu0 0.0
    %441 = vmatprep.subr.mxu0 0.0
    %442 = vmatpush2.msra.mxu0 0.0
    %443 = vmatprep.subr.mxu0 0.0
    %444 = vmatpush2.msra.mxu0 0.0
    %445 = vmatprep.subr.mxu0 0.0
    %446 = vmatpush2.msra.mxu0 0.0
    %447 = vmatprep.subr.mxu0 0.0
    %448 = vmatpush2.msra.mxu0 0.0
    %449 = vmatprep.subr.mxu0 0.0
    %450 = vmatpush2.msra.mxu0 0.0
    %451 = vmatprep.subr.mxu0 0.0
    %452 = vmatpush2.msra.mxu0 0.0
    %453 = vmatprep.subr.mxu0 0.0
    %454 = vmatpush2.msra.mxu0 0.0
    %455 = vmatprep.subr.mxu0 0.0
    %456 = vmatpush2.msra.mxu0 0.0
    %457 = vmatprep.subr.mxu0 0.0
    %458 = vmatpush2.msra.mxu0 0.0
    %459 = vmatprep.subr.mxu0 0.0
    %460 = vmatpush2.msra.mxu0 0.0
    %461 = vmatprep.subr.mxu0 0.0
    %462 = vmatpush2.msra.mxu0 0.0
    %463 = vmatprep.subr.mxu0 0.0
    %464 = vmatpush2.msra.mxu0 0.0
    %465 = vmatprep.subr.mxu0 0.0
    %466 = vmatpush2.msra.mxu0 0.0
    %467 = vmatprep.subr.mxu0 0.0
    %468 = vmatpush2.msra.mxu0 0.0
    %469 = vmatprep.subr.mxu0 0.0
    %470 = vmatpush2.msra.mxu0 0.0
    %471 = vmatprep.mubr.f32.mxu0 0.0
    %472 = vmatmul.mubr.f32.gmra.mxu0 %v226
    %v473 = vpop.f32.mrf.mxu0
    %v474 = vadd.f32 %v404, %v473
    %v475 = vpop.f32.mrf.mxu0
    %476 = vdwg.mxu0
    %s477 = scalar_lea.vmem [#allocation4], 16
    %v478 = vld [vmem:[%s477] sm:$0xff]
    %v480 = vsel %vm155, %v478, 0
    %482 = vmatprep.subr.mxu0 0.0
    %483 = vmatpush1.msra.mxu0 0.0
    %484 = vmatprep.subr.mxu0 0.0
    %485 = vmatpush1.msra.mxu0 0.0
    %486 = vmatprep.subr.mxu0 0.0
    %487 = vmatpush1.msra.mxu0 0.0
    %488 = vmatprep.subr.mxu0 0.0
    %489 = vmatpush1.msra.mxu0 0.0
    %490 = vmatprep.subr.mxu0 0.0
    %491 = vmatpush1.msra.mxu0 0.0
    %492 = vmatprep.subr.mxu0 0.0
    %493 = vmatpush1.msra.mxu0 0.0
    %494 = vmatprep.subr.mxu0 0.0
    %495 = vmatpush1.msra.mxu0 0.0
    %496 = vmatprep.subr.mxu0 0.0
    %497 = vmatpush1.msra.mxu0 0.0
    %498 = vmatprep.subr.mxu0 0.0
    %499 = vmatpush1.msra.mxu0 0.0
    %500 = vmatprep.subr.mxu0 0.0
    %501 = vmatpush1.msra.mxu0 0.0
    %502 = vmatprep.subr.mxu0 0.0
    %503 = vmatpush1.msra.mxu0 0.0
    %504 = vmatprep.subr.mxu0 0.0
    %505 = vmatpush1.msra.mxu0 0.0
    %506 = vmatprep.subr.mxu0 0.0
    %507 = vmatpush1.msra.mxu0 0.0
    %508 = vmatprep.subr.mxu0 0.0
    %509 = vmatpush1.msra.mxu0 0.0
    %510 = vmatprep.subr.mxu0 0.0
    %511 = vmatpush1.msra.mxu0 0.0
    %512 = vmatprep.subr.mxu0 0.0
    %513 = vmatpush1.msra.mxu0 %v153
    %514 = vmatprep.subr.mxu0 0.0
    %515 = vmatpush2.msra.mxu0 0.0
    %516 = vmatprep.subr.mxu0 0.0
    %517 = vmatpush2.msra.mxu0 0.0
    %518 = vmatprep.subr.mxu0 0.0
    %519 = vmatpush2.msra.mxu0 0.0
    %520 = vmatprep.subr.mxu0 0.0
    %521 = vmatpush2.msra.mxu0 0.0
    %522 = vmatprep.subr.mxu0 0.0
    %523 = vmatpush2.msra.mxu0 0.0
    %524 = vmatprep.subr.mxu0 0.0
    %525 = vmatpush2.msra.mxu0 0.0
    %526 = vmatprep.subr.mxu0 0.0
    %527 = vmatpush2.msra.mxu0 0.0
    %528 = vmatprep.subr.mxu0 0.0
    %529 = vmatpush2.msra.mxu0 0.0
    %530 = vmatprep.subr.mxu0 0.0
    %531 = vmatpush2.msra.mxu0 0.0
    %532 = vmatprep.subr.mxu0 0.0
    %533 = vmatpush2.msra.mxu0 0.0
    %534 = vmatprep.subr.mxu0 0.0
    %535 = vmatpush2.msra.mxu0 0.0
    %536 = vmatprep.subr.mxu0 0.0
    %537 = vmatpush2.msra.mxu0 0.0
    %538 = vmatprep.subr.mxu0 0.0
    %539 = vmatpush2.msra.mxu0 0.0
    %540 = vmatprep.subr.mxu0 0.0
    %541 = vmatpush2.msra.mxu0 0.0
    %542 = vmatprep.subr.mxu0 0.0
    %543 = vmatpush2.msra.mxu0 0.0
    %544 = vmatprep.subr.mxu0 0.0
    %545 = vmatpush2.msra.mxu0 0.0
    %546 = vmatprep.mubr.f32.mxu0 0.0
    %547 = vmatmul.mubr.f32.gmra.mxu0 %v480
    %v548 = vpop.f32.mrf.mxu0
    %v549 = vadd.f32 0.0, %v548
    %v550 = vpop.f32.mrf.mxu0
    %551 = vdwg.mxu0
    %s552 = scalar_lea.vmem [#allocation2], 256
    %v553 = vld [vmem:[%s552] sm:$0xff]
    %v554 = vld [vmem:[%s552 + $0x8] sm:$0xff]
    %v555 = vld [vmem:[%s552 + $0x10] sm:$0xff]
    %v556 = vld [vmem:[%s552 + $0x18] sm:$0xff]
    %v557 = vld [vmem:[%s552 + $0x20] sm:$0xff]
    %v558 = vld [vmem:[%s552 + $0x28] sm:$0xff]
    %v559 = vld [vmem:[%s552 + $0x30] sm:$0xff]
    %v560 = vld [vmem:[%s552 + $0x38] sm:$0xff]
    %v561 = vld [vmem:[%s552 + $0x40] sm:$0xff]
    %v562 = vld [vmem:[%s552 + $0x48] sm:$0xff]
    %v563 = vld [vmem:[%s552 + $0x50] sm:$0xff]
    %v564 = vld [vmem:[%s552 + $0x58] sm:$0xff]
    %v565 = vld [vmem:[%s552 + $0x60] sm:$0xff]
    %v566 = vld [vmem:[%s552 + $0x68] sm:$0xff]
    %v567 = vld [vmem:[%s552 + $0x70] sm:$0xff]
    %v568 = vld [vmem:[%s552 + $0x78] sm:$0xff]
    %569 = vmatprep.subr.mxu0 0.0
    %570 = vmatpush1.msra.mxu0 %v568
    %571 = vmatprep.subr.mxu0 0.0
    %572 = vmatpush1.msra.mxu0 %v567
    %573 = vmatprep.subr.mxu0 0.0
    %574 = vmatpush1.msra.mxu0 %v566
    %575 = vmatprep.subr.mxu0 0.0
    %576 = vmatpush1.msra.mxu0 %v565
    %577 = vmatprep.subr.mxu0 0.0
    %578 = vmatpush1.msra.mxu0 %v564
    %579 = vmatprep.subr.mxu0 0.0
    %580 = vmatpush1.msra.mxu0 %v563
    %581 = vmatprep.subr.mxu0 0.0
    %582 = vmatpush1.msra.mxu0 %v562
    %583 = vmatprep.subr.mxu0 0.0
    %584 = vmatpush1.msra.mxu0 %v561
    %585 = vmatprep.subr.mxu0 0.0
    %586 = vmatpush1.msra.mxu0 %v560
    %587 = vmatprep.subr.mxu0 0.0
    %588 = vmatpush1.msra.mxu0 %v559
    %589 = vmatprep.subr.mxu0 0.0
    %590 = vmatpush1.msra.mxu0 %v558
    %591 = vmatprep.subr.mxu0 0.0
    %592 = vmatpush1.msra.mxu0 %v557
    %593 = vmatprep.subr.mxu0 0.0
    %594 = vmatpush1.msra.mxu0 %v556
    %595 = vmatprep.subr.mxu0 0.0
    %596 = vmatpush1.msra.mxu0 %v555
    %597 = vmatprep.subr.mxu0 0.0
    %598 = vmatpush1.msra.mxu0 %v554
    %599 = vmatprep.subr.mxu0 0.0
    %600 = vmatpush1.msra.mxu0 %v553
    %601 = vmatprep.subr.mxu0 0.0
    %602 = vmatpush2.msra.mxu0 0.0
    %603 = vmatprep.subr.mxu0 0.0
    %604 = vmatpush2.msra.mxu0 0.0
    %605 = vmatprep.subr.mxu0 0.0
    %606 = vmatpush2.msra.mxu0 0.0
    %607 = vmatprep.subr.mxu0 0.0
    %608 = vmatpush2.msra.mxu0 0.0
    %609 = vmatprep.subr.mxu0 0.0
    %610 = vmatpush2.msra.mxu0 0.0
    %611 = vmatprep.subr.mxu0 0.0
    %612 = vmatpush2.msra.mxu0 0.0
    %613 = vmatprep.subr.mxu0 0.0
    %614 = vmatpush2.msra.mxu0 0.0
    %615 = vmatprep.subr.mxu0 0.0
    %616 = vmatpush2.msra.mxu0 0.0
    %617 = vmatprep.subr.mxu0 0.0
    %618 = vmatpush2.msra.mxu0 0.0
    %619 = vmatprep.subr.mxu0 0.0
    %620 = vmatpush2.msra.mxu0 0.0
    %621 = vmatprep.subr.mxu0 0.0
    %622 = vmatpush2.msra.mxu0 0.0
    %623 = vmatprep.subr.mxu0 0.0
    %624 = vmatpush2.msra.mxu0 0.0
    %625 = vmatprep.subr.mxu0 0.0
    %626 = vmatpush2.msra.mxu0 0.0
    %627 = vmatprep.subr.mxu0 0.0
    %628 = vmatpush2.msra.mxu0 0.0
    %629 = vmatprep.subr.mxu0 0.0
    %630 = vmatpush2.msra.mxu0 0.0
    %631 = vmatprep.subr.mxu0 0.0
    %632 = vmatpush2.msra.mxu0 0.0
    %633 = vmatprep.mubr.f32.mxu0 0.0
    %634 = vmatmul.mubr.f32.gmra.mxu0 %v549
    %v635 = vpop.f32.mrf.mxu0
    %v636 = vadd.f32 0.0, %v635
    %v637 = vpop.f32.mrf.mxu0
    %638 = vdwg.mxu0
    %v639 = vadd.f32 %v474, %v636
    %s640 = scalar_lea.vmem [#allocation4], 24
    %v641 = vld [vmem:[%s640] sm:$0xff]
    %v643 = vsel %vm155, %v641, 0
    %645 = vmatprep.subr.mxu0 0.0
    %646 = vmatpush1.msra.mxu0 0.0
    %647 = vmatprep.subr.mxu0 0.0
    %648 = vmatpush1.msra.mxu0 0.0
    %649 = vmatprep.subr.mxu0 0.0
    %650 = vmatpush1.msra.mxu0 0.0
    %651 = vmatprep.subr.mxu0 0.0
    %652 = vmatpush1.msra.mxu0 0.0
    %653 = vmatprep.subr.mxu0 0.0
    %654 = vmatpush1.msra.mxu0 0.0
    %655 = vmatprep.subr.mxu0 0.0
    %656 = vmatpush1.msra.mxu0 0.0
    %657 = vmatprep.subr.mxu0 0.0
    %658 = vmatpush1.msra.mxu0 0.0
    %659 = vmatprep.subr.mxu0 0.0
    %660 = vmatpush1.msra.mxu0 0.0
    %661 = vmatprep.subr.mxu0 0.0
    %662 = vmatpush1.msra.mxu0 0.0
    %663 = vmatprep.subr.mxu0 0.0
    %664 = vmatpush1.msra.mxu0 0.0
    %665 = vmatprep.subr.mxu0 0.0
    %666 = vmatpush1.msra.mxu0 0.0
    %667 = vmatprep.subr.mxu0 0.0
    %668 = vmatpush1.msra.mxu0 0.0
    %669 = vmatprep.subr.mxu0 0.0
    %670 = vmatpush1.msra.mxu0 0.0
    %671 = vmatprep.subr.mxu0 0.0
    %672 = vmatpush1.msra.mxu0 0.0
    %673 = vmatprep.subr.mxu0 0.0
    %674 = vmatpush1.msra.mxu0 0.0
    %675 = vmatprep.subr.mxu0 0.0
    %676 = vmatpush1.msra.mxu0 %v153
    %677 = vmatprep.subr.mxu0 0.0
    %678 = vmatpush2.msra.mxu0 0.0
    %679 = vmatprep.subr.mxu0 0.0
    %680 = vmatpush2.msra.mxu0 0.0
    %681 = vmatprep.subr.mxu0 0.0
    %682 = vmatpush2.msra.mxu0 0.0
    %683 = vmatprep.subr.mxu0 0.0
    %684 = vmatpush2.msra.mxu0 0.0
    %685 = vmatprep.subr.mxu0 0.0
    %686 = vmatpush2.msra.mxu0 0.0
    %687 = vmatprep.subr.mxu0 0.0
    %688 = vmatpush2.msra.mxu0 0.0
    %689 = vmatprep.subr.mxu0 0.0
    %690 = vmatpush2.msra.mxu0 0.0
    %691 = vmatprep.subr.mxu0 0.0
    %692 = vmatpush2.msra.mxu0 0.0
    %693 = vmatprep.subr.mxu0 0.0
    %694 = vmatpush2.msra.mxu0 0.0
    %695 = vmatprep.subr.mxu0 0.0
    %696 = vmatpush2.msra.mxu0 0.0
    %697 = vmatprep.subr.mxu0 0.0
    %698 = vmatpush2.msra.mxu0 0.0
    %699 = vmatprep.subr.mxu0 0.0
    %700 = vmatpush2.msra.mxu0 0.0
    %701 = vmatprep.subr.mxu0 0.0
    %702 = vmatpush2.msra.mxu0 0.0
    %703 = vmatprep.subr.mxu0 0.0
    %704 = vmatpush2.msra.mxu0 0.0
    %705 = vmatprep.subr.mxu0 0.0
    %706 = vmatpush2.msra.mxu0 0.0
    %707 = vmatprep.subr.mxu0 0.0
    %708 = vmatpush2.msra.mxu0 0.0
    %709 = vmatprep.mubr.f32.mxu0 0.0
    %710 = vmatmul.mubr.f32.gmra.mxu0 %v643
    %v711 = vpop.f32.mrf.mxu0
    %v712 = vadd.f32 0.0, %v711
    %v713 = vpop.f32.mrf.mxu0
    %714 = vdwg.mxu0
    %s715 = scalar_lea.vmem [#allocation2], 384
    %v716 = vld [vmem:[%s715] sm:$0xff]
    %v717 = vld [vmem:[%s715 + $0x8] sm:$0xff]
    %v718 = vld [vmem:[%s715 + $0x10] sm:$0xff]
    %v719 = vld [vmem:[%s715 + $0x18] sm:$0xff]
    %v720 = vld [vmem:[%s715 + $0x20] sm:$0xff]
    %v721 = vld [vmem:[%s715 + $0x28] sm:$0xff]
    %v722 = vld [vmem:[%s715 + $0x30] sm:$0xff]
    %v723 = vld [vmem:[%s715 + $0x38] sm:$0xff]
    %v724 = vld [vmem:[%s715 + $0x40] sm:$0xff]
    %v725 = vld [vmem:[%s715 + $0x48] sm:$0xff]
    %v726 = vld [vmem:[%s715 + $0x50] sm:$0xff]
    %v727 = vld [vmem:[%s715 + $0x58] sm:$0xff]
    %v728 = vld [vmem:[%s715 + $0x60] sm:$0xff]
    %v729 = vld [vmem:[%s715 + $0x68] sm:$0xff]
    %v730 = vld [vmem:[%s715 + $0x70] sm:$0xff]
    %v731 = vld [vmem:[%s715 + $0x78] sm:$0xff]
    %732 = vmatprep.subr.mxu0 0.0
    %733 = vmatpush1.msra.mxu0 %v731
    %734 = vmatprep.subr.mxu0 0.0
    %735 = vmatpush1.msra.mxu0 %v730
    %736 = vmatprep.subr.mxu0 0.0
    %737 = vmatpush1.msra.mxu0 %v729
    %738 = vmatprep.subr.mxu0 0.0
    %739 = vmatpush1.msra.mxu0 %v728
    %740 = vmatprep.subr.mxu0 0.0
    %741 = vmatpush1.msra.mxu0 %v727
    %742 = vmatprep.subr.mxu0 0.0
    %743 = vmatpush1.msra.mxu0 %v726
    %744 = vmatprep.subr.mxu0 0.0
    %745 = vmatpush1.msra.mxu0 %v725
    %746 = vmatprep.subr.mxu0 0.0
    %747 = vmatpush1.msra.mxu0 %v724
    %748 = vmatprep.subr.mxu0 0.0
    %749 = vmatpush1.msra.mxu0 %v723
    %750 = vmatprep.subr.mxu0 0.0
    %751 = vmatpush1.msra.mxu0 %v722
    %752 = vmatprep.subr.mxu0 0.0
    %753 = vmatpush1.msra.mxu0 %v721
    %754 = vmatprep.subr.mxu0 0.0
    %755 = vmatpush1.msra.mxu0 %v720
    %756 = vmatprep.subr.mxu0 0.0
    %757 = vmatpush1.msra.mxu0 %v719
    %758 = vmatprep.subr.mxu0 0.0
    %759 = vmatpush1.msra.mxu0 %v718
    %760 = vmatprep.subr.mxu0 0.0
    %761 = vmatpush1.msra.mxu0 %v717
    %762 = vmatprep.subr.mxu0 0.0
    %763 = vmatpush1.msra.mxu0 %v716
    %764 = vmatprep.subr.mxu0 0.0
    %765 = vmatpush2.msra.mxu0 0.0
    %766 = vmatprep.subr.mxu0 0.0
    %767 = vmatpush2.msra.mxu0 0.0
    %768 = vmatprep.subr.mxu0 0.0
    %769 = vmatpush2.msra.mxu0 0.0
    %770 = vmatprep.subr.mxu0 0.0
    %771 = vmatpush2.msra.mxu0 0.0
    %772 = vmatprep.subr.mxu0 0.0
    %773 = vmatpush2.msra.mxu0 0.0
    %774 = vmatprep.subr.mxu0 0.0
    %775 = vmatpush2.msra.mxu0 0.0
    %776 = vmatprep.subr.mxu0 0.0
    %777 = vmatpush2.msra.mxu0 0.0
    %778 = vmatprep.subr.mxu0 0.0
    %779 = vmatpush2.msra.mxu0 0.0
    %780 = vmatprep.subr.mxu0 0.0
    %781 = vmatpush2.msra.mxu0 0.0
    %782 = vmatprep.subr.mxu0 0.0
    %783 = vmatpush2.msra.mxu0 0.0
    %784 = vmatprep.subr.mxu0 0.0
    %785 = vmatpush2.msra.mxu0 0.0
    %786 = vmatprep.subr.mxu0 0.0
    %787 = vmatpush2.msra.mxu0 0.0
    %788 = vmatprep.subr.mxu0 0.0
    %789 = vmatpush2.msra.mxu0 0.0
    %790 = vmatprep.subr.mxu0 0.0
    %791 = vmatpush2.msra.mxu0 0.0
    %792 = vmatprep.subr.mxu0 0.0
    %793 = vmatpush2.msra.mxu0 0.0
    %794 = vmatprep.subr.mxu0 0.0
    %795 = vmatpush2.msra.mxu0 0.0
    %796 = vmatprep.mubr.f32.mxu0 0.0
    %797 = vmatmul.mubr.f32.gmra.mxu0 %v712
    %v798 = vpop.f32.mrf.mxu0
    %v799 = vadd.f32 0.0, %v798
    %v800 = vpop.f32.mrf.mxu0
    %801 = vdwg.mxu0
    %v802 = vadd.f32 %v639, %v799
    %v803 = vld [vmem:[%s3] sm:$0xff]
    %805 = vset.pattern.permute.xlu0 0
    %806 = vperm.xlu0 %805, %v803
    %v807 = vpop.permute.xlu0 %806
    %v809 = vadd.f32 %v802, %v807
    %vm810 = vcmp.gt.f32.partialorder %v809, 0.0
    %v811 = vmul.f32 %v809, 1.442695
    %v812 = vpow.pop %v811
    %v813 = vsub.f32 %v812, 1.0
    %v814 = vsel %vm810, %v809, %v813
    %v815 = vld [vmem:[%s4] sm:$0xff]
    %v816 = vld [vmem:[%s4 + $0x8] sm:$0xff]
    %v817 = vld [vmem:[%s4 + $0x10] sm:$0xff]
    %v818 = vld [vmem:[%s4 + $0x18] sm:$0xff]
    %v819 = vld [vmem:[%s4 + $0x20] sm:$0xff]
    %v820 = vld [vmem:[%s4 + $0x28] sm:$0xff]
    %v821 = vld [vmem:[%s4 + $0x30] sm:$0xff]
    %v822 = vld [vmem:[%s4 + $0x38] sm:$0xff]
    %v823 = vld [vmem:[%s4 + $0x40] sm:$0xff]
    %v824 = vld [vmem:[%s4 + $0x48] sm:$0xff]
    %v825 = vld [vmem:[%s4 + $0x50] sm:$0xff]
    %v826 = vld [vmem:[%s4 + $0x58] sm:$0xff]
    %v827 = vld [vmem:[%s4 + $0x60] sm:$0xff]
    %v828 = vld [vmem:[%s4 + $0x68] sm:$0xff]
    %v829 = vld [vmem:[%s4 + $0x70] sm:$0xff]
    %v830 = vld [vmem:[%s4 + $0x78] sm:$0xff]
    %831 = vmatprep.subr.mxu0 0.0
    %832 = vmatpush1.msra.mxu0 %v830
    %833 = vmatprep.subr.mxu0 0.0
    %834 = vmatpush1.msra.mxu0 %v829
    %835 = vmatprep.subr.mxu0 0.0
    %836 = vmatpush1.msra.mxu0 %v828
    %837 = vmatprep.subr.mxu0 0.0
    %838 = vmatpush1.msra.mxu0 %v827
    %839 = vmatprep.subr.mxu0 0.0
    %840 = vmatpush1.msra.mxu0 %v826
    %841 = vmatprep.subr.mxu0 0.0
    %842 = vmatpush1.msra.mxu0 %v825
    %843 = vmatprep.subr.mxu0 0.0
    %844 = vmatpush1.msra.mxu0 %v824
    %845 = vmatprep.subr.mxu0 0.0
    %846 = vmatpush1.msra.mxu0 %v823
    %847 = vmatprep.subr.mxu0 0.0
    %848 = vmatpush1.msra.mxu0 %v822
    %849 = vmatprep.subr.mxu0 0.0
    %850 = vmatpush1.msra.mxu0 %v821
    %851 = vmatprep.subr.mxu0 0.0
    %852 = vmatpush1.msra.mxu0 %v820
    %853 = vmatprep.subr.mxu0 0.0
    %854 = vmatpush1.msra.mxu0 %v819
    %855 = vmatprep.subr.mxu0 0.0
    %856 = vmatpush1.msra.mxu0 %v818
    %857 = vmatprep.subr.mxu0 0.0
    %858 = vmatpush1.msra.mxu0 %v817
    %859 = vmatprep.subr.mxu0 0.0
    %860 = vmatpush1.msra.mxu0 %v816
    %861 = vmatprep.subr.mxu0 0.0
    %862 = vmatpush1.msra.mxu0 %v815
    %863 = vmatprep.subr.mxu0 0.0
    %864 = vmatpush2.msra.mxu0 0.0
    %865 = vmatprep.subr.mxu0 0.0
    %866 = vmatpush2.msra.mxu0 0.0
    %867 = vmatprep.subr.mxu0 0.0
    %868 = vmatpush2.msra.mxu0 0.0
    %869 = vmatprep.subr.mxu0 0.0
    %870 = vmatpush2.msra.mxu0 0.0
    %871 = vmatprep.subr.mxu0 0.0
    %872 = vmatpush2.msra.mxu0 0.0
    %873 = vmatprep.subr.mxu0 0.0
    %874 = vmatpush2.msra.mxu0 0.0
    %875 = vmatprep.subr.mxu0 0.0
    %876 = vmatpush2.msra.mxu0 0.0
    %877 = vmatprep.subr.mxu0 0.0
    %878 = vmatpush2.msra.mxu0 0.0
    %879 = vmatprep.subr.mxu0 0.0
    %880 = vmatpush2.msra.mxu0 0.0
    %881 = vmatprep.subr.mxu0 0.0
    %882 = vmatpush2.msra.mxu0 0.0
    %883 = vmatprep.subr.mxu0 0.0
    %884 = vmatpush2.msra.mxu0 0.0
    %885 = vmatprep.subr.mxu0 0.0
    %886 = vmatpush2.msra.mxu0 0.0
    %887 = vmatprep.subr.mxu0 0.0
    %888 = vmatpush2.msra.mxu0 0.0
    %889 = vmatprep.subr.mxu0 0.0
    %890 = vmatpush2.msra.mxu0 0.0
    %891 = vmatprep.subr.mxu0 0.0
    %892 = vmatpush2.msra.mxu0 0.0
    %893 = vmatprep.subr.mxu0 0.0
    %894 = vmatpush2.msra.mxu0 0.0
    %895 = vmatprep.mubr.f32.mxu0 0.0
    %896 = vmatmul.mubr.f32.gmra.mxu0 %v814
    %v897 = vpop.f32.mrf.mxu0
    %v898 = vadd.f32 0.0, %v897
    %v899 = vpop.f32.mrf.mxu0
    %900 = vdwg.mxu0
    %v901 = vld [vmem:[#allocation6] sm:$0xff]
    %v903 = vsel %vm155, %v901, 0
    %905 = vmatprep.subr.mxu0 0.0
    %906 = vmatpush1.msra.mxu0 0.0
    %907 = vmatprep.subr.mxu0 0.0
    %908 = vmatpush1.msra.mxu0 0.0
    %909 = vmatprep.subr.mxu0 0.0
    %910 = vmatpush1.msra.mxu0 0.0
    %911 = vmatprep.subr.mxu0 0.0
    %912 = vmatpush1.msra.mxu0 0.0
    %913 = vmatprep.subr.mxu0 0.0
    %914 = vmatpush1.msra.mxu0 0.0
    %915 = vmatprep.subr.mxu0 0.0
    %916 = vmatpush1.msra.mxu0 0.0
    %917 = vmatprep.subr.mxu0 0.0
    %918 = vmatpush1.msra.mxu0 0.0
    %919 = vmatprep.subr.mxu0 0.0
    %920 = vmatpush1.msra.mxu0 0.0
    %921 = vmatprep.subr.mxu0 0.0
    %922 = vmatpush1.msra.mxu0 0.0
    %923 = vmatprep.subr.mxu0 0.0
    %924 = vmatpush1.msra.mxu0 0.0
    %925 = vmatprep.subr.mxu0 0.0
    %926 = vmatpush1.msra.mxu0 0.0
    %927 = vmatprep.subr.mxu0 0.0
    %928 = vmatpush1.msra.mxu0 0.0
    %929 = vmatprep.subr.mxu0 0.0
    %930 = vmatpush1.msra.mxu0 0.0
    %931 = vmatprep.subr.mxu0 0.0
    %932 = vmatpush1.msra.mxu0 0.0
    %933 = vmatprep.subr.mxu0 0.0
    %934 = vmatpush1.msra.mxu0 0.0
    %935 = vmatprep.subr.mxu0 0.0
    %936 = vmatpush1.msra.mxu0 %v898
    %937 = vmatprep.subr.mxu0 0.0
    %938 = vmatpush2.msra.mxu0 0.0
    %939 = vmatprep.subr.mxu0 0.0
    %940 = vmatpush2.msra.mxu0 0.0
    %941 = vmatprep.subr.mxu0 0.0
    %942 = vmatpush2.msra.mxu0 0.0
    %943 = vmatprep.subr.mxu0 0.0
    %944 = vmatpush2.msra.mxu0 0.0
    %945 = vmatprep.subr.mxu0 0.0
    %946 = vmatpush2.msra.mxu0 0.0
    %947 = vmatprep.subr.mxu0 0.0
    %948 = vmatpush2.msra.mxu0 0.0
    %949 = vmatprep.subr.mxu0 0.0
    %950 = vmatpush2.msra.mxu0 0.0
    %951 = vmatprep.subr.mxu0 0.0
    %952 = vmatpush2.msra.mxu0 0.0
    %953 = vmatprep.subr.mxu0 0.0
    %954 = vmatpush2.msra.mxu0 0.0
    %955 = vmatprep.subr.mxu0 0.0
    %956 = vmatpush2.msra.mxu0 0.0
    %957 = vmatprep.subr.mxu0 0.0
    %958 = vmatpush2.msra.mxu0 0.0
    %959 = vmatprep.subr.mxu0 0.0
    %960 = vmatpush2.msra.mxu0 0.0
    %961 = vmatprep.subr.mxu0 0.0
    %962 = vmatpush2.msra.mxu0 0.0
    %963 = vmatprep.subr.mxu0 0.0
    %964 = vmatpush2.msra.mxu0 0.0
    %965 = vmatprep.subr.mxu0 0.0
    %966 = vmatpush2.msra.mxu0 0.0
    %967 = vmatprep.subr.mxu0 0.0
    %968 = vmatpush2.msra.mxu0 0.0
    %969 = vmatprep.mubr.f32.mxu0 0.0
    %970 = vmatmul.mubr.f32.gmra.mxu0 %v903
    %v971 = vpop.f32.mrf.mxu0
    %v972 = vadd.f32 0.0, %v971
    %v973 = vpop.f32.mrf.mxu0
    %974 = vdwg.mxu0
    %v975 = vld [vmem:[#allocation7] sm:$0xff]
    %v976 = vld [vmem:[#allocation7 + $0x8] sm:$0xff]
    %v977 = vld [vmem:[#allocation7 + $0x10] sm:$0xff]
    %v978 = vld [vmem:[#allocation7 + $0x18] sm:$0xff]
    %s979 = scalar_lea.vmem [#allocation6], 8
    %v980 = vld [vmem:[%s979] sm:$0xff]
    %v982 = vsel %vm155, %v980, 0
    %984 = vmatprep.subr.mxu0 0.0
    %985 = vmatpush1.msra.mxu0 0.0
    %986 = vmatprep.subr.mxu0 0.0
    %987 = vmatpush1.msra.mxu0 0.0
    %988 = vmatprep.subr.mxu0 0.0
    %989 = vmatpush1.msra.mxu0 0.0
    %990 = vmatprep.subr.mxu0 0.0
    %991 = vmatpush1.msra.mxu0 0.0
    %992 = vmatprep.subr.mxu0 0.0
    %993 = vmatpush1.msra.mxu0 0.0
    %994 = vmatprep.subr.mxu0 0.0
    %995 = vmatpush1.msra.mxu0 0.0
    %996 = vmatprep.subr.mxu0 0.0
    %997 = vmatpush1.msra.mxu0 0.0
    %998 = vmatprep.subr.mxu0 0.0
    %999 = vmatpush1.msra.mxu0 0.0
    %1000 = vmatprep.subr.mxu0 0.0
    %1001 = vmatpush1.msra.mxu0 0.0
    %1002 = vmatprep.subr.mxu0 0.0
    %1003 = vmatpush1.msra.mxu0 0.0
    %1004 = vmatprep.subr.mxu0 0.0
    %1005 = vmatpush1.msra.mxu0 0.0
    %1006 = vmatprep.subr.mxu0 0.0
    %1007 = vmatpush1.msra.mxu0 0.0
    %1008 = vmatprep.subr.mxu0 0.0
    %1009 = vmatpush1.msra.mxu0 0.0
    %1010 = vmatprep.subr.mxu0 0.0
    %1011 = vmatpush1.msra.mxu0 0.0
    %1012 = vmatprep.subr.mxu0 0.0
    %1013 = vmatpush1.msra.mxu0 0.0
    %1014 = vmatprep.subr.mxu0 0.0
    %1015 = vmatpush1.msra.mxu0 %v898
    %1016 = vmatprep.subr.mxu0 0.0
    %1017 = vmatpush2.msra.mxu0 0.0
    %1018 = vmatprep.subr.mxu0 0.0
    %1019 = vmatpush2.msra.mxu0 0.0
    %1020 = vmatprep.subr.mxu0 0.0
    %1021 = vmatpush2.msra.mxu0 0.0
    %1022 = vmatprep.subr.mxu0 0.0
    %1023 = vmatpush2.msra.mxu0 0.0
    %1024 = vmatprep.subr.mxu0 0.0
    %1025 = vmatpush2.msra.mxu0 0.0
    %1026 = vmatprep.subr.mxu0 0.0
    %1027 = vmatpush2.msra.mxu0 0.0
    %1028 = vmatprep.subr.mxu0 0.0
    %1029 = vmatpush2.msra.mxu0 0.0
    %1030 = vmatprep.subr.mxu0 0.0
    %1031 = vmatpush2.msra.mxu0 0.0
    %1032 = vmatprep.subr.mxu0 0.0
    %1033 = vmatpush2.msra.mxu0 0.0
    %1034 = vmatprep.subr.mxu0 0.0
    %1035 = vmatpush2.msra.mxu0 0.0
    %1036 = vmatprep.subr.mxu0 0.0
    %1037 = vmatpush2.msra.mxu0 0.0
    %1038 = vmatprep.subr.mxu0 0.0
    %1039 = vmatpush2.msra.mxu0 0.0
    %1040 = vmatprep.subr.mxu0 0.0
    %1041 = vmatpush2.msra.mxu0 0.0
    %1042 = vmatprep.subr.mxu0 0.0
    %1043 = vmatpush2.msra.mxu0 0.0
    %1044 = vmatprep.subr.mxu0 0.0
    %1045 = vmatpush2.msra.mxu0 0.0
    %1046 = vmatprep.subr.mxu0 0.0
    %1047 = vmatpush2.msra.mxu0 0.0
    %1048 = vmatprep.mubr.f32.mxu0 0.0
    %1049 = vmatmul.mubr.f32.gmra.mxu0 %v982
    %v1050 = vpop.f32.mrf.mxu0
    %v1051 = vadd.f32 0.0, %v1050
    %v1052 = vpop.f32.mrf.mxu0
    %1053 = vdwg.mxu0
    %s1054 = scalar_lea.vmem [#allocation7], 32
    %v1055 = vld [vmem:[%s1054] sm:$0xff]
    %v1056 = vld [vmem:[%s1054 + $0x8] sm:$0xff]
    %v1057 = vld [vmem:[%s1054 + $0x10] sm:$0xff]
    %v1058 = vld [vmem:[%s1054 + $0x18] sm:$0xff]
    %vm1059 = vcmask 261120
    %v1061 = vsel %vm1059, %v1051, 0
    %1063 = vmatprep.subr.mxu0 0.0
    %1064 = vmatpush1.msra.mxu0 0.0
    %1065 = vmatprep.subr.mxu0 0.0
    %1066 = vmatpush1.msra.mxu0 0.0
    %1067 = vmatprep.subr.mxu0 0.0
    %1068 = vmatpush1.msra.mxu0 0.0
    %1069 = vmatprep.subr.mxu0 0.0
    %1070 = vmatpush1.msra.mxu0 0.0
    %1071 = vmatprep.subr.mxu0 0.0
    %1072 = vmatpush1.msra.mxu0 0.0
    %1073 = vmatprep.subr.mxu0 0.0
    %1074 = vmatpush1.msra.mxu0 0.0
    %1075 = vmatprep.subr.mxu0 0.0
    %1076 = vmatpush1.msra.mxu0 0.0
    %1077 = vmatprep.subr.mxu0 0.0
    %1078 = vmatpush1.msra.mxu0 0.0
    %1079 = vmatprep.subr.mxu0 0.0
    %1080 = vmatpush1.msra.mxu0 0.0
    %1081 = vmatprep.subr.mxu0 0.0
    %1082 = vmatpush1.msra.mxu0 0.0
    %1083 = vmatprep.subr.mxu0 0.0
    %1084 = vmatpush1.msra.mxu0 0.0
    %1085 = vmatprep.subr.mxu0 0.0
    %1086 = vmatpush1.msra.mxu0 0.0
    %1087 = vmatprep.subr.mxu0 0.0
    %1088 = vmatpush1.msra.mxu0 %v1058
    %1089 = vmatprep.subr.mxu0 0.0
    %1090 = vmatpush1.msra.mxu0 %v1057
    %1091 = vmatprep.subr.mxu0 0.0
    %1092 = vmatpush1.msra.mxu0 %v1056
    %1093 = vmatprep.subr.mxu0 0.0
    %1094 = vmatpush1.msra.mxu0 %v1055
    %1095 = vmatprep.subr.mxu0 0.0
    %1096 = vmatpush2.msra.mxu0 0.0
    %1097 = vmatprep.subr.mxu0 0.0
    %1098 = vmatpush2.msra.mxu0 0.0
    %1099 = vmatprep.subr.mxu0 0.0
    %1100 = vmatpush2.msra.mxu0 0.0
    %1101 = vmatprep.subr.mxu0 0.0
    %1102 = vmatpush2.msra.mxu0 0.0
    %1103 = vmatprep.subr.mxu0 0.0
    %1104 = vmatpush2.msra.mxu0 0.0
    %1105 = vmatprep.subr.mxu0 0.0
    %1106 = vmatpush2.msra.mxu0 0.0
    %1107 = vmatprep.subr.mxu0 0.0
    %1108 = vmatpush2.msra.mxu0 0.0
    %1109 = vmatprep.subr.mxu0 0.0
    %1110 = vmatpush2.msra.mxu0 0.0
    %1111 = vmatprep.subr.mxu0 0.0
    %1112 = vmatpush2.msra.mxu0 0.0
    %1113 = vmatprep.subr.mxu0 0.0
    %1114 = vmatpush2.msra.mxu0 0.0
    %1115 = vmatprep.subr.mxu0 0.0
    %1116 = vmatpush2.msra.mxu0 0.0
    %1117 = vmatprep.subr.mxu0 0.0
    %1118 = vmatpush2.msra.mxu0 0.0
    %1119 = vmatprep.subr.mxu0 0.0
    %1120 = vmatpush2.msra.mxu0 0.0
    %1121 = vmatprep.subr.mxu0 0.0
    %1122 = vmatpush2.msra.mxu0 0.0
    %1123 = vmatprep.subr.mxu0 0.0
    %1124 = vmatpush2.msra.mxu0 0.0
    %1125 = vmatprep.subr.mxu0 0.0
    %1126 = vmatpush2.msra.mxu0 0.0
    %1127 = vmatprep.mubr.f32.mxu0 0.0
    %1128 = vmatmul.mubr.f32.gmra.mxu0 %v1061
    %v1129 = vpop.f32.mrf.mxu0
    %v1130 = vadd.f32 0.0, %v1129
    %v1131 = vpop.f32.mrf.mxu0
    %1132 = vdwg.mxu0
    %v1134 = vsel %vm1059, %v972, 0
    %1136 = vmatprep.subr.mxu0 0.0
    %1137 = vmatpush1.msra.mxu0 0.0
    %1138 = vmatprep.subr.mxu0 0.0
    %1139 = vmatpush1.msra.mxu0 0.0
    %1140 = vmatprep.subr.mxu0 0.0
    %1141 = vmatpush1.msra.mxu0 0.0
    %1142 = vmatprep.subr.mxu0 0.0
    %1143 = vmatpush1.msra.mxu0 0.0
    %1144 = vmatprep.subr.mxu0 0.0
    %1145 = vmatpush1.msra.mxu0 0.0
    %1146 = vmatprep.subr.mxu0 0.0
    %1147 = vmatpush1.msra.mxu0 0.0
    %1148 = vmatprep.subr.mxu0 0.0
    %1149 = vmatpush1.msra.mxu0 0.0
    %1150 = vmatprep.subr.mxu0 0.0
    %1151 = vmatpush1.msra.mxu0 0.0
    %1152 = vmatprep.subr.mxu0 0.0
    %1153 = vmatpush1.msra.mxu0 0.0
    %1154 = vmatprep.subr.mxu0 0.0
    %1155 = vmatpush1.msra.mxu0 0.0
    %1156 = vmatprep.subr.mxu0 0.0
    %1157 = vmatpush1.msra.mxu0 0.0
    %1158 = vmatprep.subr.mxu0 0.0
    %1159 = vmatpush1.msra.mxu0 0.0
    %1160 = vmatprep.subr.mxu0 0.0
    %1161 = vmatpush1.msra.mxu0 %v978
    %1162 = vmatprep.subr.mxu0 0.0
    %1163 = vmatpush1.msra.mxu0 %v977
    %1164 = vmatprep.subr.mxu0 0.0
    %1165 = vmatpush1.msra.mxu0 %v976
    %1166 = vmatprep.subr.mxu0 0.0
    %1167 = vmatpush1.msra.mxu0 %v975
    %1168 = vmatprep.subr.mxu0 0.0
    %1169 = vmatpush2.msra.mxu0 0.0
    %1170 = vmatprep.subr.mxu0 0.0
    %1171 = vmatpush2.msra.mxu0 0.0
    %1172 = vmatprep.subr.mxu0 0.0
    %1173 = vmatpush2.msra.mxu0 0.0
    %1174 = vmatprep.subr.mxu0 0.0
    %1175 = vmatpush2.msra.mxu0 0.0
    %1176 = vmatprep.subr.mxu0 0.0
    %1177 = vmatpush2.msra.mxu0 0.0
    %1178 = vmatprep.subr.mxu0 0.0
    %1179 = vmatpush2.msra.mxu0 0.0
    %1180 = vmatprep.subr.mxu0 0.0
    %1181 = vmatpush2.msra.mxu0 0.0
    %1182 = vmatprep.subr.mxu0 0.0
    %1183 = vmatpush2.msra.mxu0 0.0
    %1184 = vmatprep.subr.mxu0 0.0
    %1185 = vmatpush2.msra.mxu0 0.0
    %1186 = vmatprep.subr.mxu0 0.0
    %1187 = vmatpush2.msra.mxu0 0.0
    %1188 = vmatprep.subr.mxu0 0.0
    %1189 = vmatpush2.msra.mxu0 0.0
    %1190 = vmatprep.subr.mxu0 0.0
    %1191 = vmatpush2.msra.mxu0 0.0
    %1192 = vmatprep.subr.mxu0 0.0
    %1193 = vmatpush2.msra.mxu0 0.0
    %1194 = vmatprep.subr.mxu0 0.0
    %1195 = vmatpush2.msra.mxu0 0.0
    %1196 = vmatprep.subr.mxu0 0.0
    %1197 = vmatpush2.msra.mxu0 0.0
    %1198 = vmatprep.subr.mxu0 0.0
    %1199 = vmatpush2.msra.mxu0 0.0
    %1200 = vmatprep.mubr.f32.mxu0 0.0
    %1201 = vmatmul.mubr.f32.gmra.mxu0 %v1134
    %v1202 = vpop.f32.mrf.mxu0
    %v1203 = vadd.f32 %v1130, %v1202
    %v1204 = vpop.f32.mrf.mxu0
    %1205 = vdwg.mxu0
    %s1206 = scalar_lea.vmem [#allocation6], 16
    %v1207 = vld [vmem:[%s1206] sm:$0xff]
    %v1209 = vsel %vm155, %v1207, 0
    %1211 = vmatprep.subr.mxu0 0.0
    %1212 = vmatpush1.msra.mxu0 0.0
    %1213 = vmatprep.subr.mxu0 0.0
    %1214 = vmatpush1.msra.mxu0 0.0
    %1215 = vmatprep.subr.mxu0 0.0
    %1216 = vmatpush1.msra.mxu0 0.0
    %1217 = vmatprep.subr.mxu0 0.0
    %1218 = vmatpush1.msra.mxu0 0.0
    %1219 = vmatprep.subr.mxu0 0.0
    %1220 = vmatpush1.msra.mxu0 0.0
    %1221 = vmatprep.subr.mxu0 0.0
    %1222 = vmatpush1.msra.mxu0 0.0
    %1223 = vmatprep.subr.mxu0 0.0
    %1224 = vmatpush1.msra.mxu0 0.0
    %1225 = vmatprep.subr.mxu0 0.0
    %1226 = vmatpush1.msra.mxu0 0.0
    %1227 = vmatprep.subr.mxu0 0.0
    %1228 = vmatpush1.msra.mxu0 0.0
    %1229 = vmatprep.subr.mxu0 0.0
    %1230 = vmatpush1.msra.mxu0 0.0
    %1231 = vmatprep.subr.mxu0 0.0
    %1232 = vmatpush1.msra.mxu0 0.0
    %1233 = vmatprep.subr.mxu0 0.0
    %1234 = vmatpush1.msra.mxu0 0.0
    %1235 = vmatprep.subr.mxu0 0.0
    %1236 = vmatpush1.msra.mxu0 0.0
    %1237 = vmatprep.subr.mxu0 0.0
    %1238 = vmatpush1.msra.mxu0 0.0
    %1239 = vmatprep.subr.mxu0 0.0
    %1240 = vmatpush1.msra.mxu0 0.0
    %1241 = vmatprep.subr.mxu0 0.0
    %1242 = vmatpush1.msra.mxu0 %v898
    %1243 = vmatprep.subr.mxu0 0.0
    %1244 = vmatpush2.msra.mxu0 0.0
    %1245 = vmatprep.subr.mxu0 0.0
    %1246 = vmatpush2.msra.mxu0 0.0
    %1247 = vmatprep.subr.mxu0 0.0
    %1248 = vmatpush2.msra.mxu0 0.0
    %1249 = vmatprep.subr.mxu0 0.0
    %1250 = vmatpush2.msra.mxu0 0.0
    %1251 = vmatprep.subr.mxu0 0.0
    %1252 = vmatpush2.msra.mxu0 0.0
    %1253 = vmatprep.subr.mxu0 0.0
    %1254 = vmatpush2.msra.mxu0 0.0
    %1255 = vmatprep.subr.mxu0 0.0
    %1256 = vmatpush2.msra.mxu0 0.0
    %1257 = vmatprep.subr.mxu0 0.0
    %1258 = vmatpush2.msra.mxu0 0.0
    %1259 = vmatprep.subr.mxu0 0.0
    %1260 = vmatpush2.msra.mxu0 0.0
    %1261 = vmatprep.subr.mxu0 0.0
    %1262 = vmatpush2.msra.mxu0 0.0
    %1263 = vmatprep.subr.mxu0 0.0
    %1264 = vmatpush2.msra.mxu0 0.0
    %1265 = vmatprep.subr.mxu0 0.0
    %1266 = vmatpush2.msra.mxu0 0.0
    %1267 = vmatprep.subr.mxu0 0.0
    %1268 = vmatpush2.msra.mxu0 0.0
    %1269 = vmatprep.subr.mxu0 0.0
    %1270 = vmatpush2.msra.mxu0 0.0
    %1271 = vmatprep.subr.mxu0 0.0
    %1272 = vmatpush2.msra.mxu0 0.0
    %1273 = vmatprep.subr.mxu0 0.0
    %1274 = vmatpush2.msra.mxu0 0.0
    %1275 = vmatprep.mubr.f32.mxu0 0.0
    %1276 = vmatmul.mubr.f32.gmra.mxu0 %v1209
    %v1277 = vpop.f32.mrf.mxu0
    %v1278 = vadd.f32 0.0, %v1277
    %v1279 = vpop.f32.mrf.mxu0
    %1280 = vdwg.mxu0
    %s1281 = scalar_lea.vmem [#allocation7], 64
    %v1282 = vld [vmem:[%s1281] sm:$0xff]
    %v1283 = vld [vmem:[%s1281 + $0x8] sm:$0xff]
    %v1284 = vld [vmem:[%s1281 + $0x10] sm:$0xff]
    %v1285 = vld [vmem:[%s1281 + $0x18] sm:$0xff]
    %v1287 = vsel %vm1059, %v1278, 0
    %1289 = vmatprep.subr.mxu0 0.0
    %1290 = vmatpush1.msra.mxu0 0.0
    %1291 = vmatprep.subr.mxu0 0.0
    %1292 = vmatpush1.msra.mxu0 0.0
    %1293 = vmatprep.subr.mxu0 0.0
    %1294 = vmatpush1.msra.mxu0 0.0
    %1295 = vmatprep.subr.mxu0 0.0
    %1296 = vmatpush1.msra.mxu0 0.0
    %1297 = vmatprep.subr.mxu0 0.0
    %1298 = vmatpush1.msra.mxu0 0.0
    %1299 = vmatprep.subr.mxu0 0.0
    %1300 = vmatpush1.msra.mxu0 0.0
    %1301 = vmatprep.subr.mxu0 0.0
    %1302 = vmatpush1.msra.mxu0 0.0
    %1303 = vmatprep.subr.mxu0 0.0
    %1304 = vmatpush1.msra.mxu0 0.0
    %1305 = vmatprep.subr.mxu0 0.0
    %1306 = vmatpush1.msra.mxu0 0.0
    %1307 = vmatprep.subr.mxu0 0.0
    %1308 = vmatpush1.msra.mxu0 0.0
    %1309 = vmatprep.subr.mxu0 0.0
    %1310 = vmatpush1.msra.mxu0 0.0
    %1311 = vmatprep.subr.mxu0 0.0
    %1312 = vmatpush1.msra.mxu0 0.0
    %1313 = vmatprep.subr.mxu0 0.0
    %1314 = vmatpush1.msra.mxu0 %v1285
    %1315 = vmatprep.subr.mxu0 0.0
    %1316 = vmatpush1.msra.mxu0 %v1284
    %1317 = vmatprep.subr.mxu0 0.0
    %1318 = vmatpush1.msra.mxu0 %v1283
    %1319 = vmatprep.subr.mxu0 0.0
    %1320 = vmatpush1.msra.mxu0 %v1282
    %1321 = vmatprep.subr.mxu0 0.0
    %1322 = vmatpush2.msra.mxu0 0.0
    %1323 = vmatprep.subr.mxu0 0.0
    %1324 = vmatpush2.msra.mxu0 0.0
    %1325 = vmatprep.subr.mxu0 0.0
    %1326 = vmatpush2.msra.mxu0 0.0
    %1327 = vmatprep.subr.mxu0 0.0
    %1328 = vmatpush2.msra.mxu0 0.0
    %1329 = vmatprep.subr.mxu0 0.0
    %1330 = vmatpush2.msra.mxu0 0.0
    %1331 = vmatprep.subr.mxu0 0.0
    %1332 = vmatpush2.msra.mxu0 0.0
    %1333 = vmatprep.subr.mxu0 0.0
    %1334 = vmatpush2.msra.mxu0 0.0
    %1335 = vmatprep.subr.mxu0 0.0
    %1336 = vmatpush2.msra.mxu0 0.0
    %1337 = vmatprep.subr.mxu0 0.0
    %1338 = vmatpush2.msra.mxu0 0.0
    %1339 = vmatprep.subr.mxu0 0.0
    %1340 = vmatpush2.msra.mxu0 0.0
    %1341 = vmatprep.subr.mxu0 0.0
    %1342 = vmatpush2.msra.mxu0 0.0
    %1343 = vmatprep.subr.mxu0 0.0
    %1344 = vmatpush2.msra.mxu0 0.0
    %1345 = vmatprep.subr.mxu0 0.0
    %1346 = vmatpush2.msra.mxu0 0.0
    %1347 = vmatprep.subr.mxu0 0.0
    %1348 = vmatpush2.msra.mxu0 0.0
    %1349 = vmatprep.subr.mxu0 0.0
    %1350 = vmatpush2.msra.mxu0 0.0
    %1351 = vmatprep.subr.mxu0 0.0
    %1352 = vmatpush2.msra.mxu0 0.0
    %1353 = vmatprep.mubr.f32.mxu0 0.0
    %1354 = vmatmul.mubr.f32.gmra.mxu0 %v1287
    %v1355 = vpop.f32.mrf.mxu0
    %v1356 = vadd.f32 0.0, %v1355
    %v1357 = vpop.f32.mrf.mxu0
    %1358 = vdwg.mxu0
    %v1359 = vadd.f32 %v1203, %v1356
    %s1360 = scalar_lea.vmem [#allocation6], 24
    %v1361 = vld [vmem:[%s1360] sm:$0xff]
    %v1363 = vsel %vm155, %v1361, 0
    %1365 = vmatprep.subr.mxu0 0.0
    %1366 = vmatpush1.msra.mxu0 0.0
    %1367 = vmatprep.subr.mxu0 0.0
    %1368 = vmatpush1.msra.mxu0 0.0
    %1369 = vmatprep.subr.mxu0 0.0
    %1370 = vmatpush1.msra.mxu0 0.0
    %1371 = vmatprep.subr.mxu0 0.0
    %1372 = vmatpush1.msra.mxu0 0.0
    %1373 = vmatprep.subr.mxu0 0.0
    %1374 = vmatpush1.msra.mxu0 0.0
    %1375 = vmatprep.subr.mxu0 0.0
    %1376 = vmatpush1.msra.mxu0 0.0
    %1377 = vmatprep.subr.mxu0 0.0
    %1378 = vmatpush1.msra.mxu0 0.0
    %1379 = vmatprep.subr.mxu0 0.0
    %1380 = vmatpush1.msra.mxu0 0.0
    %1381 = vmatprep.subr.mxu0 0.0
    %1382 = vmatpush1.msra.mxu0 0.0
    %1383 = vmatprep.subr.mxu0 0.0
    %1384 = vmatpush1.msra.mxu0 0.0
    %1385 = vmatprep.subr.mxu0 0.0
    %1386 = vmatpush1.msra.mxu0 0.0
    %1387 = vmatprep.subr.mxu0 0.0
    %1388 = vmatpush1.msra.mxu0 0.0
    %1389 = vmatprep.subr.mxu0 0.0
    %1390 = vmatpush1.msra.mxu0 0.0
    %1391 = vmatprep.subr.mxu0 0.0
    %1392 = vmatpush1.msra.mxu0 0.0
    %1393 = vmatprep.subr.mxu0 0.0
    %1394 = vmatpush1.msra.mxu0 0.0
    %1395 = vmatprep.subr.mxu0 0.0
    %1396 = vmatpush1.msra.mxu0 %v898
    %1397 = vmatprep.subr.mxu0 0.0
    %1398 = vmatpush2.msra.mxu0 0.0
    %1399 = vmatprep.subr.mxu0 0.0
    %1400 = vmatpush2.msra.mxu0 0.0
    %1401 = vmatprep.subr.mxu0 0.0
    %1402 = vmatpush2.msra.mxu0 0.0
    %1403 = vmatprep.subr.mxu0 0.0
    %1404 = vmatpush2.msra.mxu0 0.0
    %1405 = vmatprep.subr.mxu0 0.0
    %1406 = vmatpush2.msra.mxu0 0.0
    %1407 = vmatprep.subr.mxu0 0.0
    %1408 = vmatpush2.msra.mxu0 0.0
    %1409 = vmatprep.subr.mxu0 0.0
    %1410 = vmatpush2.msra.mxu0 0.0
    %1411 = vmatprep.subr.mxu0 0.0
    %1412 = vmatpush2.msra.mxu0 0.0
    %1413 = vmatprep.subr.mxu0 0.0
    %1414 = vmatpush2.msra.mxu0 0.0
    %1415 = vmatprep.subr.mxu0 0.0
    %1416 = vmatpush2.msra.mxu0 0.0
    %1417 = vmatprep.subr.mxu0 0.0
    %1418 = vmatpush2.msra.mxu0 0.0
    %1419 = vmatprep.subr.mxu0 0.0
    %1420 = vmatpush2.msra.mxu0 0.0
    %1421 = vmatprep.subr.mxu0 0.0
    %1422 = vmatpush2.msra.mxu0 0.0
    %1423 = vmatprep.subr.mxu0 0.0
    %1424 = vmatpush2.msra.mxu0 0.0
    %1425 = vmatprep.subr.mxu0 0.0
    %1426 = vmatpush2.msra.mxu0 0.0
    %1427 = vmatprep.subr.mxu0 0.0
    %1428 = vmatpush2.msra.mxu0 0.0
    %1429 = vmatprep.mubr.f32.mxu0 0.0
    %1430 = vmatmul.mubr.f32.gmra.mxu0 %v1363
    %v1431 = vpop.f32.mrf.mxu0
    %v1432 = vadd.f32 0.0, %v1431
    %v1433 = vpop.f32.mrf.mxu0
    %1434 = vdwg.mxu0
    %s1435 = scalar_lea.vmem [#allocation7], 96
    %v1436 = vld [vmem:[%s1435] sm:$0xff]
    %v1437 = vld [vmem:[%s1435 + $0x8] sm:$0xff]
    %v1438 = vld [vmem:[%s1435 + $0x10] sm:$0xff]
    %v1439 = vld [vmem:[%s1435 + $0x18] sm:$0xff]
    %v1441 = vsel %vm1059, %v1432, 0
    %1443 = vmatprep.subr.mxu0 0.0
    %1444 = vmatpush1.msra.mxu0 0.0
    %1445 = vmatprep.subr.mxu0 0.0
    %1446 = vmatpush1.msra.mxu0 0.0
    %1447 = vmatprep.subr.mxu0 0.0
    %1448 = vmatpush1.msra.mxu0 0.0
    %1449 = vmatprep.subr.mxu0 0.0
    %1450 = vmatpush1.msra.mxu0 0.0
    %1451 = vmatprep.subr.mxu0 0.0
    %1452 = vmatpush1.msra.mxu0 0.0
    %1453 = vmatprep.subr.mxu0 0.0
    %1454 = vmatpush1.msra.mxu0 0.0
    %1455 = vmatprep.subr.mxu0 0.0
    %1456 = vmatpush1.msra.mxu0 0.0
    %1457 = vmatprep.subr.mxu0 0.0
    %1458 = vmatpush1.msra.mxu0 0.0
    %1459 = vmatprep.subr.mxu0 0.0
    %1460 = vmatpush1.msra.mxu0 0.0
    %1461 = vmatprep.subr.mxu0 0.0
    %1462 = vmatpush1.msra.mxu0 0.0
    %1463 = vmatprep.subr.mxu0 0.0
    %1464 = vmatpush1.msra.mxu0 0.0
    %1465 = vmatprep.subr.mxu0 0.0
    %1466 = vmatpush1.msra.mxu0 0.0
    %1467 = vmatprep.subr.mxu0 0.0
    %1468 = vmatpush1.msra.mxu0 %v1439
    %1469 = vmatprep.subr.mxu0 0.0
    %1470 = vmatpush1.msra.mxu0 %v1438
    %1471 = vmatprep.subr.mxu0 0.0
    %1472 = vmatpush1.msra.mxu0 %v1437
    %1473 = vmatprep.subr.mxu0 0.0
    %1474 = vmatpush1.msra.mxu0 %v1436
    %1475 = vmatprep.subr.mxu0 0.0
    %1476 = vmatpush2.msra.mxu0 0.0
    %1477 = vmatprep.subr.mxu0 0.0
    %1478 = vmatpush2.msra.mxu0 0.0
    %1479 = vmatprep.subr.mxu0 0.0
    %1480 = vmatpush2.msra.mxu0 0.0
    %1481 = vmatprep.subr.mxu0 0.0
    %1482 = vmatpush2.msra.mxu0 0.0
    %1483 = vmatprep.subr.mxu0 0.0
    %1484 = vmatpush2.msra.mxu0 0.0
    %1485 = vmatprep.subr.mxu0 0.0
    %1486 = vmatpush2.msra.mxu0 0.0
    %1487 = vmatprep.subr.mxu0 0.0
    %1488 = vmatpush2.msra.mxu0 0.0
    %1489 = vmatprep.subr.mxu0 0.0
    %1490 = vmatpush2.msra.mxu0 0.0
    %1491 = vmatprep.subr.mxu0 0.0
    %1492 = vmatpush2.msra.mxu0 0.0
    %1493 = vmatprep.subr.mxu0 0.0
    %1494 = vmatpush2.msra.mxu0 0.0
    %1495 = vmatprep.subr.mxu0 0.0
    %1496 = vmatpush2.msra.mxu0 0.0
    %1497 = vmatprep.subr.mxu0 0.0
    %1498 = vmatpush2.msra.mxu0 0.0
    %1499 = vmatprep.subr.mxu0 0.0
    %1500 = vmatpush2.msra.mxu0 0.0
    %1501 = vmatprep.subr.mxu0 0.0
    %1502 = vmatpush2.msra.mxu0 0.0
    %1503 = vmatprep.subr.mxu0 0.0
    %1504 = vmatpush2.msra.mxu0 0.0
    %1505 = vmatprep.subr.mxu0 0.0
    %1506 = vmatpush2.msra.mxu0 0.0
    %1507 = vmatprep.mubr.f32.mxu0 0.0
    %1508 = vmatmul.mubr.f32.gmra.mxu0 %v1441
    %v1509 = vpop.f32.mrf.mxu0
    %v1510 = vadd.f32 0.0, %v1509
    %v1511 = vpop.f32.mrf.mxu0
    %1512 = vdwg.mxu0
    %v1513 = vadd.f32 %v1359, %v1510
    %s1514 = scalar_lea.vmem [#allocation6], 32
    %v1515 = vld [vmem:[%s1514] sm:$0xff]
    %v1517 = vsel %vm155, %v1515, 0
    %1519 = vmatprep.subr.mxu0 0.0
    %1520 = vmatpush1.msra.mxu0 0.0
    %1521 = vmatprep.subr.mxu0 0.0
    %1522 = vmatpush1.msra.mxu0 0.0
    %1523 = vmatprep.subr.mxu0 0.0
    %1524 = vmatpush1.msra.mxu0 0.0
    %1525 = vmatprep.subr.mxu0 0.0
    %1526 = vmatpush1.msra.mxu0 0.0
    %1527 = vmatprep.subr.mxu0 0.0
    %1528 = vmatpush1.msra.mxu0 0.0
    %1529 = vmatprep.subr.mxu0 0.0
    %1530 = vmatpush1.msra.mxu0 0.0
    %1531 = vmatprep.subr.mxu0 0.0
    %1532 = vmatpush1.msra.mxu0 0.0
    %1533 = vmatprep.subr.mxu0 0.0
    %1534 = vmatpush1.msra.mxu0 0.0
    %1535 = vmatprep.subr.mxu0 0.0
    %1536 = vmatpush1.msra.mxu0 0.0
    %1537 = vmatprep.subr.mxu0 0.0
    %1538 = vmatpush1.msra.mxu0 0.0
    %1539 = vmatprep.subr.mxu0 0.0
    %1540 = vmatpush1.msra.mxu0 0.0
    %1541 = vmatprep.subr.mxu0 0.0
    %1542 = vmatpush1.msra.mxu0 0.0
    %1543 = vmatprep.subr.mxu0 0.0
    %1544 = vmatpush1.msra.mxu0 0.0
    %1545 = vmatprep.subr.mxu0 0.0
    %1546 = vmatpush1.msra.mxu0 0.0
    %1547 = vmatprep.subr.mxu0 0.0
    %1548 = vmatpush1.msra.mxu0 0.0
    %1549 = vmatprep.subr.mxu0 0.0
    %1550 = vmatpush1.msra.mxu0 %v898
    %1551 = vmatprep.subr.mxu0 0.0
    %1552 = vmatpush2.msra.mxu0 0.0
    %1553 = vmatprep.subr.mxu0 0.0
    %1554 = vmatpush2.msra.mxu0 0.0
    %1555 = vmatprep.subr.mxu0 0.0
    %1556 = vmatpush2.msra.mxu0 0.0
    %1557 = vmatprep.subr.mxu0 0.0
    %1558 = vmatpush2.msra.mxu0 0.0
    %1559 = vmatprep.subr.mxu0 0.0
    %1560 = vmatpush2.msra.mxu0 0.0
    %1561 = vmatprep.subr.mxu0 0.0
    %1562 = vmatpush2.msra.mxu0 0.0
    %1563 = vmatprep.subr.mxu0 0.0
    %1564 = vmatpush2.msra.mxu0 0.0
    %1565 = vmatprep.subr.mxu0 0.0
    %1566 = vmatpush2.msra.mxu0 0.0
    %1567 = vmatprep.subr.mxu0 0.0
    %1568 = vmatpush2.msra.mxu0 0.0
    %1569 = vmatprep.subr.mxu0 0.0
    %1570 = vmatpush2.msra.mxu0 0.0
    %1571 = vmatprep.subr.mxu0 0.0
    %1572 = vmatpush2.msra.mxu0 0.0
    %1573 = vmatprep.subr.mxu0 0.0
    %1574 = vmatpush2.msra.mxu0 0.0
    %1575 = vmatprep.subr.mxu0 0.0
    %1576 = vmatpush2.msra.mxu0 0.0
    %1577 = vmatprep.subr.mxu0 0.0
    %1578 = vmatpush2.msra.mxu0 0.0
    %1579 = vmatprep.subr.mxu0 0.0
    %1580 = vmatpush2.msra.mxu0 0.0
    %1581 = vmatprep.subr.mxu0 0.0
    %1582 = vmatpush2.msra.mxu0 0.0
    %1583 = vmatprep.mubr.f32.mxu0 0.0
    %1584 = vmatmul.mubr.f32.gmra.mxu0 %v1517
    %v1585 = vpop.f32.mrf.mxu0
    %v1586 = vadd.f32 0.0, %v1585
    %v1587 = vpop.f32.mrf.mxu0
    %1588 = vdwg.mxu0
    %s1589 = scalar_lea.vmem [#allocation7], 128
    %v1590 = vld [vmem:[%s1589] sm:$0xff]
    %v1591 = vld [vmem:[%s1589 + $0x8] sm:$0xff]
    %v1592 = vld [vmem:[%s1589 + $0x10] sm:$0xff]
    %v1593 = vld [vmem:[%s1589 + $0x18] sm:$0xff]
    %v1595 = vsel %vm1059, %v1586, 0
    %1597 = vmatprep.subr.mxu0 0.0
    %1598 = vmatpush1.msra.mxu0 0.0
    %1599 = vmatprep.subr.mxu0 0.0
    %1600 = vmatpush1.msra.mxu0 0.0
    %1601 = vmatprep.subr.mxu0 0.0
    %1602 = vmatpush1.msra.mxu0 0.0
    %1603 = vmatprep.subr.mxu0 0.0
    %1604 = vmatpush1.msra.mxu0 0.0
    %1605 = vmatprep.subr.mxu0 0.0
    %1606 = vmatpush1.msra.mxu0 0.0
    %1607 = vmatprep.subr.mxu0 0.0
    %1608 = vmatpush1.msra.mxu0 0.0
    %1609 = vmatprep.subr.mxu0 0.0
    %1610 = vmatpush1.msra.mxu0 0.0
    %1611 = vmatprep.subr.mxu0 0.0
    %1612 = vmatpush1.msra.mxu0 0.0
    %1613 = vmatprep.subr.mxu0 0.0
    %1614 = vmatpush1.msra.mxu0 0.0
    %1615 = vmatprep.subr.mxu0 0.0
    %1616 = vmatpush1.msra.mxu0 0.0
    %1617 = vmatprep.subr.mxu0 0.0
    %1618 = vmatpush1.msra.mxu0 0.0
    %1619 = vmatprep.subr.mxu0 0.0
    %1620 = vmatpush1.msra.mxu0 0.0
    %1621 = vmatprep.subr.mxu0 0.0
    %1622 = vmatpush1.msra.mxu0 %v1593
    %1623 = vmatprep.subr.mxu0 0.0
    %1624 = vmatpush1.msra.mxu0 %v1592
    %1625 = vmatprep.subr.mxu0 0.0
    %1626 = vmatpush1.msra.mxu0 %v1591
    %1627 = vmatprep.subr.mxu0 0.0
    %1628 = vmatpush1.msra.mxu0 %v1590
    %1629 = vmatprep.subr.mxu0 0.0
    %1630 = vmatpush2.msra.mxu0 0.0
    %1631 = vmatprep.subr.mxu0 0.0
    %1632 = vmatpush2.msra.mxu0 0.0
    %1633 = vmatprep.subr.mxu0 0.0
    %1634 = vmatpush2.msra.mxu0 0.0
    %1635 = vmatprep.subr.mxu0 0.0
    %1636 = vmatpush2.msra.mxu0 0.0
    %1637 = vmatprep.subr.mxu0 0.0
    %1638 = vmatpush2.msra.mxu0 0.0
    %1639 = vmatprep.subr.mxu0 0.0
    %1640 = vmatpush2.msra.mxu0 0.0
    %1641 = vmatprep.subr.mxu0 0.0
    %1642 = vmatpush2.msra.mxu0 0.0
    %1643 = vmatprep.subr.mxu0 0.0
    %1644 = vmatpush2.msra.mxu0 0.0
    %1645 = vmatprep.subr.mxu0 0.0
    %1646 = vmatpush2.msra.mxu0 0.0
    %1647 = vmatprep.subr.mxu0 0.0
    %1648 = vmatpush2.msra.mxu0 0.0
    %1649 = vmatprep.subr.mxu0 0.0
    %1650 = vmatpush2.msra.mxu0 0.0
    %1651 = vmatprep.subr.mxu0 0.0
    %1652 = vmatpush2.msra.mxu0 0.0
    %1653 = vmatprep.subr.mxu0 0.0
    %1654 = vmatpush2.msra.mxu0 0.0
    %1655 = vmatprep.subr.mxu0 0.0
    %1656 = vmatpush2.msra.mxu0 0.0
    %1657 = vmatprep.subr.mxu0 0.0
    %1658 = vmatpush2.msra.mxu0 0.0
    %1659 = vmatprep.subr.mxu0 0.0
    %1660 = vmatpush2.msra.mxu0 0.0
    %1661 = vmatprep.mubr.f32.mxu0 0.0
    %1662 = vmatmul.mubr.f32.gmra.mxu0 %v1595
    %v1663 = vpop.f32.mrf.mxu0
    %v1664 = vadd.f32 0.0, %v1663
    %v1665 = vpop.f32.mrf.mxu0
    %1666 = vdwg.mxu0
    %v1667 = vadd.f32 %v1513, %v1664
    %s1668 = scalar_lea.vmem [#allocation6], 40
    %v1669 = vld [vmem:[%s1668] sm:$0xff]
    %v1671 = vsel %vm155, %v1669, 0
    %1673 = vmatprep.subr.mxu0 0.0
    %1674 = vmatpush1.msra.mxu0 0.0
    %1675 = vmatprep.subr.mxu0 0.0
    %1676 = vmatpush1.msra.mxu0 0.0
    %1677 = vmatprep.subr.mxu0 0.0
    %1678 = vmatpush1.msra.mxu0 0.0
    %1679 = vmatprep.subr.mxu0 0.0
    %1680 = vmatpush1.msra.mxu0 0.0
    %1681 = vmatprep.subr.mxu0 0.0
    %1682 = vmatpush1.msra.mxu0 0.0
    %1683 = vmatprep.subr.mxu0 0.0
    %1684 = vmatpush1.msra.mxu0 0.0
    %1685 = vmatprep.subr.mxu0 0.0
    %1686 = vmatpush1.msra.mxu0 0.0
    %1687 = vmatprep.subr.mxu0 0.0
    %1688 = vmatpush1.msra.mxu0 0.0
    %1689 = vmatprep.subr.mxu0 0.0
    %1690 = vmatpush1.msra.mxu0 0.0
    %1691 = vmatprep.subr.mxu0 0.0
    %1692 = vmatpush1.msra.mxu0 0.0
    %1693 = vmatprep.subr.mxu0 0.0
    %1694 = vmatpush1.msra.mxu0 0.0
    %1695 = vmatprep.subr.mxu0 0.0
    %1696 = vmatpush1.msra.mxu0 0.0
    %1697 = vmatprep.subr.mxu0 0.0
    %1698 = vmatpush1.msra.mxu0 0.0
    %1699 = vmatprep.subr.mxu0 0.0
    %1700 = vmatpush1.msra.mxu0 0.0
    %1701 = vmatprep.subr.mxu0 0.0
    %1702 = vmatpush1.msra.mxu0 0.0
    %1703 = vmatprep.subr.mxu0 0.0
    %1704 = vmatpush1.msra.mxu0 %v898
    %1705 = vmatprep.subr.mxu0 0.0
    %1706 = vmatpush2.msra.mxu0 0.0
    %1707 = vmatprep.subr.mxu0 0.0
    %1708 = vmatpush2.msra.mxu0 0.0
    %1709 = vmatprep.subr.mxu0 0.0
    %1710 = vmatpush2.msra.mxu0 0.0
    %1711 = vmatprep.subr.mxu0 0.0
    %1712 = vmatpush2.msra.mxu0 0.0
    %1713 = vmatprep.subr.mxu0 0.0
    %1714 = vmatpush2.msra.mxu0 0.0
    %1715 = vmatprep.subr.mxu0 0.0
    %1716 = vmatpush2.msra.mxu0 0.0
    %1717 = vmatprep.subr.mxu0 0.0
    %1718 = vmatpush2.msra.mxu0 0.0
    %1719 = vmatprep.subr.mxu0 0.0
    %1720 = vmatpush2.msra.mxu0 0.0
    %1721 = vmatprep.subr.mxu0 0.0
    %1722 = vmatpush2.msra.mxu0 0.0
    %1723 = vmatprep.subr.mxu0 0.0
    %1724 = vmatpush2.msra.mxu0 0.0
    %1725 = vmatprep.subr.mxu0 0.0
    %1726 = vmatpush2.msra.mxu0 0.0
    %1727 = vmatprep.subr.mxu0 0.0
    %1728 = vmatpush2.msra.mxu0 0.0
    %1729 = vmatprep.subr.mxu0 0.0
    %1730 = vmatpush2.msra.mxu0 0.0
    %1731 = vmatprep.subr.mxu0 0.0
    %1732 = vmatpush2.msra.mxu0 0.0
    %1733 = vmatprep.subr.mxu0 0.0
    %1734 = vmatpush2.msra.mxu0 0.0
    %1735 = vmatprep.subr.mxu0 0.0
    %1736 = vmatpush2.msra.mxu0 0.0
    %1737 = vmatprep.mubr.f32.mxu0 0.0
    %1738 = vmatmul.mubr.f32.gmra.mxu0 %v1671
    %v1739 = vpop.f32.mrf.mxu0
    %v1740 = vadd.f32 0.0, %v1739
    %v1741 = vpop.f32.mrf.mxu0
    %1742 = vdwg.mxu0
    %s1743 = scalar_lea.vmem [#allocation7], 160
    %v1744 = vld [vmem:[%s1743] sm:$0xff]
    %v1745 = vld [vmem:[%s1743 + $0x8] sm:$0xff]
    %v1746 = vld [vmem:[%s1743 + $0x10] sm:$0xff]
    %v1747 = vld [vmem:[%s1743 + $0x18] sm:$0xff]
    %v1749 = vsel %vm1059, %v1740, 0
    %1751 = vmatprep.subr.mxu0 0.0
    %1752 = vmatpush1.msra.mxu0 0.0
    %1753 = vmatprep.subr.mxu0 0.0
    %1754 = vmatpush1.msra.mxu0 0.0
    %1755 = vmatprep.subr.mxu0 0.0
    %1756 = vmatpush1.msra.mxu0 0.0
    %1757 = vmatprep.subr.mxu0 0.0
    %1758 = vmatpush1.msra.mxu0 0.0
    %1759 = vmatprep.subr.mxu0 0.0
    %1760 = vmatpush1.msra.mxu0 0.0
    %1761 = vmatprep.subr.mxu0 0.0
    %1762 = vmatpush1.msra.mxu0 0.0
    %1763 = vmatprep.subr.mxu0 0.0
    %1764 = vmatpush1.msra.mxu0 0.0
    %1765 = vmatprep.subr.mxu0 0.0
    %1766 = vmatpush1.msra.mxu0 0.0
    %1767 = vmatprep.subr.mxu0 0.0
    %1768 = vmatpush1.msra.mxu0 0.0
    %1769 = vmatprep.subr.mxu0 0.0
    %1770 = vmatpush1.msra.mxu0 0.0
    %1771 = vmatprep.subr.mxu0 0.0
    %1772 = vmatpush1.msra.mxu0 0.0
    %1773 = vmatprep.subr.mxu0 0.0
    %1774 = vmatpush1.msra.mxu0 0.0
    %1775 = vmatprep.subr.mxu0 0.0
    %1776 = vmatpush1.msra.mxu0 %v1747
    %1777 = vmatprep.subr.mxu0 0.0
    %1778 = vmatpush1.msra.mxu0 %v1746
    %1779 = vmatprep.subr.mxu0 0.0
    %1780 = vmatpush1.msra.mxu0 %v1745
    %1781 = vmatprep.subr.mxu0 0.0
    %1782 = vmatpush1.msra.mxu0 %v1744
    %1783 = vmatprep.subr.mxu0 0.0
    %1784 = vmatpush2.msra.mxu0 0.0
    %1785 = vmatprep.subr.mxu0 0.0
    %1786 = vmatpush2.msra.mxu0 0.0
    %1787 = vmatprep.subr.mxu0 0.0
    %1788 = vmatpush2.msra.mxu0 0.0
    %1789 = vmatprep.subr.mxu0 0.0
    %1790 = vmatpush2.msra.mxu0 0.0
    %1791 = vmatprep.subr.mxu0 0.0
    %1792 = vmatpush2.msra.mxu0 0.0
    %1793 = vmatprep.subr.mxu0 0.0
    %1794 = vmatpush2.msra.mxu0 0.0
    %1795 = vmatprep.subr.mxu0 0.0
    %1796 = vmatpush2.msra.mxu0 0.0
    %1797 = vmatprep.subr.mxu0 0.0
    %1798 = vmatpush2.msra.mxu0 0.0
    %1799 = vmatprep.subr.mxu0 0.0
    %1800 = vmatpush2.msra.mxu0 0.0
    %1801 = vmatprep.subr.mxu0 0.0
    %1802 = vmatpush2.msra.mxu0 0.0
    %1803 = vmatprep.subr.mxu0 0.0
    %1804 = vmatpush2.msra.mxu0 0.0
    %1805 = vmatprep.subr.mxu0 0.0
    %1806 = vmatpush2.msra.mxu0 0.0
    %1807 = vmatprep.subr.mxu0 0.0
    %1808 = vmatpush2.msra.mxu0 0.0
    %1809 = vmatprep.subr.mxu0 0.0
    %1810 = vmatpush2.msra.mxu0 0.0
    %1811 = vmatprep.subr.mxu0 0.0
    %1812 = vmatpush2.msra.mxu0 0.0
    %1813 = vmatprep.subr.mxu0 0.0
    %1814 = vmatpush2.msra.mxu0 0.0
    %1815 = vmatprep.mubr.f32.mxu0 0.0
    %1816 = vmatmul.mubr.f32.gmra.mxu0 %v1749
    %v1817 = vpop.f32.mrf.mxu0
    %v1818 = vadd.f32 0.0, %v1817
    %v1819 = vpop.f32.mrf.mxu0
    %1820 = vdwg.mxu0
    %v1821 = vadd.f32 %v1667, %v1818
    %s1822 = scalar_lea.vmem [#allocation6], 48
    %v1823 = vld [vmem:[%s1822] sm:$0xff]
    %v1825 = vsel %vm155, %v1823, 0
    %1827 = vmatprep.subr.mxu0 0.0
    %1828 = vmatpush1.msra.mxu0 0.0
    %1829 = vmatprep.subr.mxu0 0.0
    %1830 = vmatpush1.msra.mxu0 0.0
    %1831 = vmatprep.subr.mxu0 0.0
    %1832 = vmatpush1.msra.mxu0 0.0
    %1833 = vmatprep.subr.mxu0 0.0
    %1834 = vmatpush1.msra.mxu0 0.0
    %1835 = vmatprep.subr.mxu0 0.0
    %1836 = vmatpush1.msra.mxu0 0.0
    %1837 = vmatprep.subr.mxu0 0.0
    %1838 = vmatpush1.msra.mxu0 0.0
    %1839 = vmatprep.subr.mxu0 0.0
    %1840 = vmatpush1.msra.mxu0 0.0
    %1841 = vmatprep.subr.mxu0 0.0
    %1842 = vmatpush1.msra.mxu0 0.0
    %1843 = vmatprep.subr.mxu0 0.0
    %1844 = vmatpush1.msra.mxu0 0.0
    %1845 = vmatprep.subr.mxu0 0.0
    %1846 = vmatpush1.msra.mxu0 0.0
    %1847 = vmatprep.subr.mxu0 0.0
    %1848 = vmatpush1.msra.mxu0 0.0
    %1849 = vmatprep.subr.mxu0 0.0
    %1850 = vmatpush1.msra.mxu0 0.0
    %1851 = vmatprep.subr.mxu0 0.0
    %1852 = vmatpush1.msra.mxu0 0.0
    %1853 = vmatprep.subr.mxu0 0.0
    %1854 = vmatpush1.msra.mxu0 0.0
    %1855 = vmatprep.subr.mxu0 0.0
    %1856 = vmatpush1.msra.mxu0 0.0
    %1857 = vmatprep.subr.mxu0 0.0
    %1858 = vmatpush1.msra.mxu0 %v898
    %1859 = vmatprep.subr.mxu0 0.0
    %1860 = vmatpush2.msra.mxu0 0.0
    %1861 = vmatprep.subr.mxu0 0.0
    %1862 = vmatpush2.msra.mxu0 0.0
    %1863 = vmatprep.subr.mxu0 0.0
    %1864 = vmatpush2.msra.mxu0 0.0
    %1865 = vmatprep.subr.mxu0 0.0
    %1866 = vmatpush2.msra.mxu0 0.0
    %1867 = vmatprep.subr.mxu0 0.0
    %1868 = vmatpush2.msra.mxu0 0.0
    %1869 = vmatprep.subr.mxu0 0.0
    %1870 = vmatpush2.msra.mxu0 0.0
    %1871 = vmatprep.subr.mxu0 0.0
    %1872 = vmatpush2.msra.mxu0 0.0
    %1873 = vmatprep.subr.mxu0 0.0
    %1874 = vmatpush2.msra.mxu0 0.0
    %1875 = vmatprep.subr.mxu0 0.0
    %1876 = vmatpush2.msra.mxu0 0.0
    %1877 = vmatprep.subr.mxu0 0.0
    %1878 = vmatpush2.msra.mxu0 0.0
    %1879 = vmatprep.subr.mxu0 0.0
    %1880 = vmatpush2.msra.mxu0 0.0
    %1881 = vmatprep.subr.mxu0 0.0
    %1882 = vmatpush2.msra.mxu0 0.0
    %1883 = vmatprep.subr.mxu0 0.0
    %1884 = vmatpush2.msra.mxu0 0.0
    %1885 = vmatprep.subr.mxu0 0.0
    %1886 = vmatpush2.msra.mxu0 0.0
    %1887 = vmatprep.subr.mxu0 0.0
    %1888 = vmatpush2.msra.mxu0 0.0
    %1889 = vmatprep.subr.mxu0 0.0
    %1890 = vmatpush2.msra.mxu0 0.0
    %1891 = vmatprep.mubr.f32.mxu0 0.0
    %1892 = vmatmul.mubr.f32.gmra.mxu0 %v1825
    %v1893 = vpop.f32.mrf.mxu0
    %v1894 = vadd.f32 0.0, %v1893
    %v1895 = vpop.f32.mrf.mxu0
    %1896 = vdwg.mxu0
    %s1897 = scalar_lea.vmem [#allocation7], 192
    %v1898 = vld [vmem:[%s1897] sm:$0xff]
    %v1899 = vld [vmem:[%s1897 + $0x8] sm:$0xff]
    %v1900 = vld [vmem:[%s1897 + $0x10] sm:$0xff]
    %v1901 = vld [vmem:[%s1897 + $0x18] sm:$0xff]
    %v1903 = vsel %vm1059, %v1894, 0
    %1905 = vmatprep.subr.mxu0 0.0
    %1906 = vmatpush1.msra.mxu0 0.0
    %1907 = vmatprep.subr.mxu0 0.0
    %1908 = vmatpush1.msra.mxu0 0.0
    %1909 = vmatprep.subr.mxu0 0.0
    %1910 = vmatpush1.msra.mxu0 0.0
    %1911 = vmatprep.subr.mxu0 0.0
    %1912 = vmatpush1.msra.mxu0 0.0
    %1913 = vmatprep.subr.mxu0 0.0
    %1914 = vmatpush1.msra.mxu0 0.0
    %1915 = vmatprep.subr.mxu0 0.0
    %1916 = vmatpush1.msra.mxu0 0.0
    %1917 = vmatprep.subr.mxu0 0.0
    %1918 = vmatpush1.msra.mxu0 0.0
    %1919 = vmatprep.subr.mxu0 0.0
    %1920 = vmatpush1.msra.mxu0 0.0
    %1921 = vmatprep.subr.mxu0 0.0
    %1922 = vmatpush1.msra.mxu0 0.0
    %1923 = vmatprep.subr.mxu0 0.0
    %1924 = vmatpush1.msra.mxu0 0.0
    %1925 = vmatprep.subr.mxu0 0.0
    %1926 = vmatpush1.msra.mxu0 0.0
    %1927 = vmatprep.subr.mxu0 0.0
    %1928 = vmatpush1.msra.mxu0 0.0
    %1929 = vmatprep.subr.mxu0 0.0
    %1930 = vmatpush1.msra.mxu0 %v1901
    %1931 = vmatprep.subr.mxu0 0.0
    %1932 = vmatpush1.msra.mxu0 %v1900
    %1933 = vmatprep.subr.mxu0 0.0
    %1934 = vmatpush1.msra.mxu0 %v1899
    %1935 = vmatprep.subr.mxu0 0.0
    %1936 = vmatpush1.msra.mxu0 %v1898
    %1937 = vmatprep.subr.mxu0 0.0
    %1938 = vmatpush2.msra.mxu0 0.0
    %1939 = vmatprep.subr.mxu0 0.0
    %1940 = vmatpush2.msra.mxu0 0.0
    %1941 = vmatprep.subr.mxu0 0.0
    %1942 = vmatpush2.msra.mxu0 0.0
    %1943 = vmatprep.subr.mxu0 0.0
    %1944 = vmatpush2.msra.mxu0 0.0
    %1945 = vmatprep.subr.mxu0 0.0
    %1946 = vmatpush2.msra.mxu0 0.0
    %1947 = vmatprep.subr.mxu0 0.0
    %1948 = vmatpush2.msra.mxu0 0.0
    %1949 = vmatprep.subr.mxu0 0.0
    %1950 = vmatpush2.msra.mxu0 0.0
    %1951 = vmatprep.subr.mxu0 0.0
    %1952 = vmatpush2.msra.mxu0 0.0
    %1953 = vmatprep.subr.mxu0 0.0
    %1954 = vmatpush2.msra.mxu0 0.0
    %1955 = vmatprep.subr.mxu0 0.0
    %1956 = vmatpush2.msra.mxu0 0.0
    %1957 = vmatprep.subr.mxu0 0.0
    %1958 = vmatpush2.msra.mxu0 0.0
    %1959 = vmatprep.subr.mxu0 0.0
    %1960 = vmatpush2.msra.mxu0 0.0
    %1961 = vmatprep.subr.mxu0 0.0
    %1962 = vmatpush2.msra.mxu0 0.0
    %1963 = vmatprep.subr.mxu0 0.0
    %1964 = vmatpush2.msra.mxu0 0.0
    %1965 = vmatprep.subr.mxu0 0.0
    %1966 = vmatpush2.msra.mxu0 0.0
    %1967 = vmatprep.subr.mxu0 0.0
    %1968 = vmatpush2.msra.mxu0 0.0
    %1969 = vmatprep.mubr.f32.mxu0 0.0
    %1970 = vmatmul.mubr.f32.gmra.mxu0 %v1903
    %v1971 = vpop.f32.mrf.mxu0
    %v1972 = vadd.f32 0.0, %v1971
    %v1973 = vpop.f32.mrf.mxu0
    %1974 = vdwg.mxu0
    %v1975 = vadd.f32 %v1821, %v1972
    %s1976 = scalar_lea.vmem [#allocation6], 56
    %v1977 = vld [vmem:[%s1976] sm:$0xff]
    %v1979 = vsel %vm155, %v1977, 0
    %1981 = vmatprep.subr.mxu0 0.0
    %1982 = vmatpush1.msra.mxu0 0.0
    %1983 = vmatprep.subr.mxu0 0.0
    %1984 = vmatpush1.msra.mxu0 0.0
    %1985 = vmatprep.subr.mxu0 0.0
    %1986 = vmatpush1.msra.mxu0 0.0
    %1987 = vmatprep.subr.mxu0 0.0
    %1988 = vmatpush1.msra.mxu0 0.0
    %1989 = vmatprep.subr.mxu0 0.0
    %1990 = vmatpush1.msra.mxu0 0.0
    %1991 = vmatprep.subr.mxu0 0.0
    %1992 = vmatpush1.msra.mxu0 0.0
    %1993 = vmatprep.subr.mxu0 0.0
    %1994 = vmatpush1.msra.mxu0 0.0
    %1995 = vmatprep.subr.mxu0 0.0
    %1996 = vmatpush1.msra.mxu0 0.0
    %1997 = vmatprep.subr.mxu0 0.0
    %1998 = vmatpush1.msra.mxu0 0.0
    %1999 = vmatprep.subr.mxu0 0.0
    %2000 = vmatpush1.msra.mxu0 0.0
    %2001 = vmatprep.subr.mxu0 0.0
    %2002 = vmatpush1.msra.mxu0 0.0
    %2003 = vmatprep.subr.mxu0 0.0
    %2004 = vmatpush1.msra.mxu0 0.0
    %2005 = vmatprep.subr.mxu0 0.0
    %2006 = vmatpush1.msra.mxu0 0.0
    %2007 = vmatprep.subr.mxu0 0.0
    %2008 = vmatpush1.msra.mxu0 0.0
    %2009 = vmatprep.subr.mxu0 0.0
    %2010 = vmatpush1.msra.mxu0 0.0
    %2011 = vmatprep.subr.mxu0 0.0
    %2012 = vmatpush1.msra.mxu0 %v898
    %2013 = vmatprep.subr.mxu0 0.0
    %2014 = vmatpush2.msra.mxu0 0.0
    %2015 = vmatprep.subr.mxu0 0.0
    %2016 = vmatpush2.msra.mxu0 0.0
    %2017 = vmatprep.subr.mxu0 0.0
    %2018 = vmatpush2.msra.mxu0 0.0
    %2019 = vmatprep.subr.mxu0 0.0
    %2020 = vmatpush2.msra.mxu0 0.0
    %2021 = vmatprep.subr.mxu0 0.0
    %2022 = vmatpush2.msra.mxu0 0.0
    %2023 = vmatprep.subr.mxu0 0.0
    %2024 = vmatpush2.msra.mxu0 0.0
    %2025 = vmatprep.subr.mxu0 0.0
    %2026 = vmatpush2.msra.mxu0 0.0
    %2027 = vmatprep.subr.mxu0 0.0
    %2028 = vmatpush2.msra.mxu0 0.0
    %2029 = vmatprep.subr.mxu0 0.0
    %2030 = vmatpush2.msra.mxu0 0.0
    %2031 = vmatprep.subr.mxu0 0.0
    %2032 = vmatpush2.msra.mxu0 0.0
    %2033 = vmatprep.subr.mxu0 0.0
    %2034 = vmatpush2.msra.mxu0 0.0
    %2035 = vmatprep.subr.mxu0 0.0
    %2036 = vmatpush2.msra.mxu0 0.0
    %2037 = vmatprep.subr.mxu0 0.0
    %2038 = vmatpush2.msra.mxu0 0.0
    %2039 = vmatprep.subr.mxu0 0.0
    %2040 = vmatpush2.msra.mxu0 0.0
    %2041 = vmatprep.subr.mxu0 0.0
    %2042 = vmatpush2.msra.mxu0 0.0
    %2043 = vmatprep.subr.mxu0 0.0
    %2044 = vmatpush2.msra.mxu0 0.0
    %2045 = vmatprep.mubr.f32.mxu0 0.0
    %2046 = vmatmul.mubr.f32.gmra.mxu0 %v1979
    %v2047 = vpop.f32.mrf.mxu0
    %v2048 = vadd.f32 0.0, %v2047
    %v2049 = vpop.f32.mrf.mxu0
    %2050 = vdwg.mxu0
    %s2051 = scalar_lea.vmem [#allocation7], 224
    %v2052 = vld [vmem:[%s2051] sm:$0xff]
    %v2053 = vld [vmem:[%s2051 + $0x8] sm:$0xff]
    %v2054 = vld [vmem:[%s2051 + $0x10] sm:$0xff]
    %v2055 = vld [vmem:[%s2051 + $0x18] sm:$0xff]
    %v2057 = vsel %vm1059, %v2048, 0
    %2059 = vmatprep.subr.mxu0 0.0
    %2060 = vmatpush1.msra.mxu0 0.0
    %2061 = vmatprep.subr.mxu0 0.0
    %2062 = vmatpush1.msra.mxu0 0.0
    %2063 = vmatprep.subr.mxu0 0.0
    %2064 = vmatpush1.msra.mxu0 0.0
    %2065 = vmatprep.subr.mxu0 0.0
    %2066 = vmatpush1.msra.mxu0 0.0
    %2067 = vmatprep.subr.mxu0 0.0
    %2068 = vmatpush1.msra.mxu0 0.0
    %2069 = vmatprep.subr.mxu0 0.0
    %2070 = vmatpush1.msra.mxu0 0.0
    %2071 = vmatprep.subr.mxu0 0.0
    %2072 = vmatpush1.msra.mxu0 0.0
    %2073 = vmatprep.subr.mxu0 0.0
    %2074 = vmatpush1.msra.mxu0 0.0
    %2075 = vmatprep.subr.mxu0 0.0
    %2076 = vmatpush1.msra.mxu0 0.0
    %2077 = vmatprep.subr.mxu0 0.0
    %2078 = vmatpush1.msra.mxu0 0.0
    %2079 = vmatprep.subr.mxu0 0.0
    %2080 = vmatpush1.msra.mxu0 0.0
    %2081 = vmatprep.subr.mxu0 0.0
    %2082 = vmatpush1.msra.mxu0 0.0
    %2083 = vmatprep.subr.mxu0 0.0
    %2084 = vmatpush1.msra.mxu0 %v2055
    %2085 = vmatprep.subr.mxu0 0.0
    %2086 = vmatpush1.msra.mxu0 %v2054
    %2087 = vmatprep.subr.mxu0 0.0
    %2088 = vmatpush1.msra.mxu0 %v2053
    %2089 = vmatprep.subr.mxu0 0.0
    %2090 = vmatpush1.msra.mxu0 %v2052
    %2091 = vmatprep.subr.mxu0 0.0
    %2092 = vmatpush2.msra.mxu0 0.0
    %2093 = vmatprep.subr.mxu0 0.0
    %2094 = vmatpush2.msra.mxu0 0.0
    %2095 = vmatprep.subr.mxu0 0.0
    %2096 = vmatpush2.msra.mxu0 0.0
    %2097 = vmatprep.subr.mxu0 0.0
    %2098 = vmatpush2.msra.mxu0 0.0
    %2099 = vmatprep.subr.mxu0 0.0
    %2100 = vmatpush2.msra.mxu0 0.0
    %2101 = vmatprep.subr.mxu0 0.0
    %2102 = vmatpush2.msra.mxu0 0.0
    %2103 = vmatprep.subr.mxu0 0.0
    %2104 = vmatpush2.msra.mxu0 0.0
    %2105 = vmatprep.subr.mxu0 0.0
    %2106 = vmatpush2.msra.mxu0 0.0
    %2107 = vmatprep.subr.mxu0 0.0
    %2108 = vmatpush2.msra.mxu0 0.0
    %2109 = vmatprep.subr.mxu0 0.0
    %2110 = vmatpush2.msra.mxu0 0.0
    %2111 = vmatprep.subr.mxu0 0.0
    %2112 = vmatpush2.msra.mxu0 0.0
    %2113 = vmatprep.subr.mxu0 0.0
    %2114 = vmatpush2.msra.mxu0 0.0
    %2115 = vmatprep.subr.mxu0 0.0
    %2116 = vmatpush2.msra.mxu0 0.0
    %2117 = vmatprep.subr.mxu0 0.0
    %2118 = vmatpush2.msra.mxu0 0.0
    %2119 = vmatprep.subr.mxu0 0.0
    %2120 = vmatpush2.msra.mxu0 0.0
    %2121 = vmatprep.subr.mxu0 0.0
    %2122 = vmatpush2.msra.mxu0 0.0
    %2123 = vmatprep.mubr.f32.mxu0 0.0
    %2124 = vmatmul.mubr.f32.gmra.mxu0 %v2057
    %v2125 = vpop.f32.mrf.mxu0
    %v2126 = vadd.f32 0.0, %v2125
    %v2127 = vpop.f32.mrf.mxu0
    %2128 = vdwg.mxu0
    %v2129 = vadd.f32 %v1975, %v2126
    %v2130 = vld [vmem:[%s6] sm:$0xff]
    %2132 = vset.pattern.permute.xlu0 0
    %2133 = vperm.xlu0 %2132, %v2130
    %v2134 = vpop.permute.xlu0 %2133
    %v2136 = vadd.f32 %v2129, %v2134
    %vm2137 = vcmp.gt.f32.partialorder %v2136, 0.0
    %v2138 = vmul.f32 %v2136, 1.442695
    %v2139 = vpow.pop %v2138
    %v2140 = vsub.f32 %v2139, 1.0
    %v2141 = vsel %vm2137, %v2136, %v2140
    %v2142 = vld [vmem:[#allocation10] sm:$0xff]
    %v2143 = vld [vmem:[#allocation10 + $0x8] sm:$0xff]
    %v2144 = vld [vmem:[#allocation10 + $0x10] sm:$0xff]
    %v2145 = vld [vmem:[%s10] sm:$0xff]
    %s2146 = scalar_lea.vmem [#allocation10], 24
    %v2147 = vld [vmem:[%s2146] sm:$0xff]
    %v2148 = vld [vmem:[%s2146 + $0x8] sm:$0xff]
    %v2149 = vld [vmem:[%s2146 + $0x10] sm:$0xff]
    %s2150 = scalar_lea.vmem %s10, 8
    %v2151 = vld [vmem:[%s2150] sm:$0xff]
    %2153 = vset.pattern.permute.xlu0 0
    %2154 = vperm.xlu0 %2153, %v2145
    %v2155 = vpop.permute.xlu0 %2154
    %v2158 = vsel %vm155, %v2143, 0
    %2160 = vmatprep.subr.mxu0 0.0
    %2161 = vmatpush1.msra.mxu0 0.0
    %2162 = vmatprep.subr.mxu0 0.0
    %2163 = vmatpush1.msra.mxu0 0.0
    %2164 = vmatprep.subr.mxu0 0.0
    %2165 = vmatpush1.msra.mxu0 0.0
    %2166 = vmatprep.subr.mxu0 0.0
    %2167 = vmatpush1.msra.mxu0 0.0
    %2168 = vmatprep.subr.mxu0 0.0
    %2169 = vmatpush1.msra.mxu0 0.0
    %2170 = vmatprep.subr.mxu0 0.0
    %2171 = vmatpush1.msra.mxu0 0.0
    %2172 = vmatprep.subr.mxu0 0.0
    %2173 = vmatpush1.msra.mxu0 0.0
    %2174 = vmatprep.subr.mxu0 0.0
    %2175 = vmatpush1.msra.mxu0 0.0
    %2176 = vmatprep.subr.mxu0 0.0
    %2177 = vmatpush1.msra.mxu0 0.0
    %2178 = vmatprep.subr.mxu0 0.0
    %2179 = vmatpush1.msra.mxu0 0.0
    %2180 = vmatprep.subr.mxu0 0.0
    %2181 = vmatpush1.msra.mxu0 0.0
    %2182 = vmatprep.subr.mxu0 0.0
    %2183 = vmatpush1.msra.mxu0 0.0
    %2184 = vmatprep.subr.mxu0 0.0
    %2185 = vmatpush1.msra.mxu0 0.0
    %2186 = vmatprep.subr.mxu0 0.0
    %2187 = vmatpush1.msra.mxu0 0.0
    %2188 = vmatprep.subr.mxu0 0.0
    %2189 = vmatpush1.msra.mxu0 0.0
    %2190 = vmatprep.subr.mxu0 0.0
    %2191 = vmatpush1.msra.mxu0 %v2141
    %2192 = vmatprep.subr.mxu0 0.0
    %2193 = vmatpush2.msra.mxu0 0.0
    %2194 = vmatprep.subr.mxu0 0.0
    %2195 = vmatpush2.msra.mxu0 0.0
    %2196 = vmatprep.subr.mxu0 0.0
    %2197 = vmatpush2.msra.mxu0 0.0
    %2198 = vmatprep.subr.mxu0 0.0
    %2199 = vmatpush2.msra.mxu0 0.0
    %2200 = vmatprep.subr.mxu0 0.0
    %2201 = vmatpush2.msra.mxu0 0.0
    %2202 = vmatprep.subr.mxu0 0.0
    %2203 = vmatpush2.msra.mxu0 0.0
    %2204 = vmatprep.subr.mxu0 0.0
    %2205 = vmatpush2.msra.mxu0 0.0
    %2206 = vmatprep.subr.mxu0 0.0
    %2207 = vmatpush2.msra.mxu0 0.0
    %2208 = vmatprep.subr.mxu0 0.0
    %2209 = vmatpush2.msra.mxu0 0.0
    %2210 = vmatprep.subr.mxu0 0.0
    %2211 = vmatpush2.msra.mxu0 0.0
    %2212 = vmatprep.subr.mxu0 0.0
    %2213 = vmatpush2.msra.mxu0 0.0
    %2214 = vmatprep.subr.mxu0 0.0
    %2215 = vmatpush2.msra.mxu0 0.0
    %2216 = vmatprep.subr.mxu0 0.0
    %2217 = vmatpush2.msra.mxu0 0.0
    %2218 = vmatprep.subr.mxu0 0.0
    %2219 = vmatpush2.msra.mxu0 0.0
    %2220 = vmatprep.subr.mxu0 0.0
    %2221 = vmatpush2.msra.mxu0 0.0
    %2222 = vmatprep.subr.mxu0 0.0
    %2223 = vmatpush2.msra.mxu0 0.0
    %2224 = vmatprep.mubr.f32.mxu0 0.0
    %2225 = vmatmul.mubr.f32.gmra.mxu0 %v2158
    %v2226 = vpop.f32.mrf.mxu0
    %v2227 = vadd.f32 %v2155, %v2226
    %v2228 = vpop.f32.mrf.mxu0
    %2229 = vdwg.mxu0
    %v2231 = vsel %vm155, %v2142, 0
    %2233 = vmatprep.subr.mxu0 0.0
    %2234 = vmatpush1.msra.mxu0 0.0
    %2235 = vmatprep.subr.mxu0 0.0
    %2236 = vmatpush1.msra.mxu0 0.0
    %2237 = vmatprep.subr.mxu0 0.0
    %2238 = vmatpush1.msra.mxu0 0.0
    %2239 = vmatprep.subr.mxu0 0.0
    %2240 = vmatpush1.msra.mxu0 0.0
    %2241 = vmatprep.subr.mxu0 0.0
    %2242 = vmatpush1.msra.mxu0 0.0
    %2243 = vmatprep.subr.mxu0 0.0
    %2244 = vmatpush1.msra.mxu0 0.0
    %2245 = vmatprep.subr.mxu0 0.0
    %2246 = vmatpush1.msra.mxu0 0.0
    %2247 = vmatprep.subr.mxu0 0.0
    %2248 = vmatpush1.msra.mxu0 0.0
    %2249 = vmatprep.subr.mxu0 0.0
    %2250 = vmatpush1.msra.mxu0 0.0
    %2251 = vmatprep.subr.mxu0 0.0
    %2252 = vmatpush1.msra.mxu0 0.0
    %2253 = vmatprep.subr.mxu0 0.0
    %2254 = vmatpush1.msra.mxu0 0.0
    %2255 = vmatprep.subr.mxu0 0.0
    %2256 = vmatpush1.msra.mxu0 0.0
    %2257 = vmatprep.subr.mxu0 0.0
    %2258 = vmatpush1.msra.mxu0 0.0
    %2259 = vmatprep.subr.mxu0 0.0
    %2260 = vmatpush1.msra.mxu0 0.0
    %2261 = vmatprep.subr.mxu0 0.0
    %2262 = vmatpush1.msra.mxu0 0.0
    %2263 = vmatprep.subr.mxu0 0.0
    %2264 = vmatpush1.msra.mxu0 %v2141
    %2265 = vmatprep.subr.mxu0 0.0
    %2266 = vmatpush2.msra.mxu0 0.0
    %2267 = vmatprep.subr.mxu0 0.0
    %2268 = vmatpush2.msra.mxu0 0.0
    %2269 = vmatprep.subr.mxu0 0.0
    %2270 = vmatpush2.msra.mxu0 0.0
    %2271 = vmatprep.subr.mxu0 0.0
    %2272 = vmatpush2.msra.mxu0 0.0
    %2273 = vmatprep.subr.mxu0 0.0
    %2274 = vmatpush2.msra.mxu0 0.0
    %2275 = vmatprep.subr.mxu0 0.0
    %2276 = vmatpush2.msra.mxu0 0.0
    %2277 = vmatprep.subr.mxu0 0.0
    %2278 = vmatpush2.msra.mxu0 0.0
    %2279 = vmatprep.subr.mxu0 0.0
    %2280 = vmatpush2.msra.mxu0 0.0
    %2281 = vmatprep.subr.mxu0 0.0
    %2282 = vmatpush2.msra.mxu0 0.0
    %2283 = vmatprep.subr.mxu0 0.0
    %2284 = vmatpush2.msra.mxu0 0.0
    %2285 = vmatprep.subr.mxu0 0.0
    %2286 = vmatpush2.msra.mxu0 0.0
    %2287 = vmatprep.subr.mxu0 0.0
    %2288 = vmatpush2.msra.mxu0 0.0
    %2289 = vmatprep.subr.mxu0 0.0
    %2290 = vmatpush2.msra.mxu0 0.0
    %2291 = vmatprep.subr.mxu0 0.0
    %2292 = vmatpush2.msra.mxu0 0.0
    %2293 = vmatprep.subr.mxu0 0.0
    %2294 = vmatpush2.msra.mxu0 0.0
    %2295 = vmatprep.subr.mxu0 0.0
    %2296 = vmatpush2.msra.mxu0 0.0
    %2297 = vmatprep.mubr.f32.mxu0 0.0
    %2298 = vmatmul.mubr.f32.gmra.mxu0 %v2231
    %v2299 = vpop.f32.mrf.mxu0
    %v2300 = vadd.f32 0.0, %v2299
    %v2301 = vpop.f32.mrf.mxu0
    %2302 = vdwg.mxu0
    %v2303 = vld [vmem:[#allocation9] sm:$0xff]
    %v2304 = vld [vmem:[#allocation9 + $0x8] sm:$0xff]
    %v2305 = vld [vmem:[#allocation9 + $0x10] sm:$0xff]
    %v2306 = vld [vmem:[#allocation9 + $0x18] sm:$0xff]
    %v2307 = vld [vmem:[#allocation9 + $0x20] sm:$0x3]
    %vm2308 = vcmask 277504
    %v2310 = vsel %vm2308, %v2300, 0
    %vm2312 = vcmask 1041408
    %v2314 = vsel %vm2312, %v2307, 0
    %2316 = vmatprep.subr.mxu0 0.0
    %2317 = vmatpush1.msra.mxu0 0.0
    %2318 = vmatprep.subr.mxu0 0.0
    %2319 = vmatpush1.msra.mxu0 0.0
    %2320 = vmatprep.subr.mxu0 0.0
    %2321 = vmatpush1.msra.mxu0 0.0
    %2322 = vmatprep.subr.mxu0 0.0
    %2323 = vmatpush1.msra.mxu0 0.0
    %2324 = vmatprep.subr.mxu0 0.0
    %2325 = vmatpush1.msra.mxu0 0.0
    %2326 = vmatprep.subr.mxu0 0.0
    %2327 = vmatpush1.msra.mxu0 0.0
    %2328 = vmatprep.subr.mxu0 0.0
    %2329 = vmatpush1.msra.mxu0 0.0
    %2330 = vmatprep.subr.mxu0 0.0
    %2331 = vmatpush1.msra.mxu0 0.0
    %2332 = vmatprep.subr.mxu0 0.0
    %2333 = vmatpush1.msra.mxu0 0.0
    %2334 = vmatprep.subr.mxu0 0.0
    %2335 = vmatpush1.msra.mxu0 0.0
    %2336 = vmatprep.subr.mxu0 0.0
    %2337 = vmatpush1.msra.mxu0 0.0
    %2338 = vmatprep.subr.mxu0 0.0
    %2339 = vmatpush1.msra.mxu0 %v2314
    %2340 = vmatprep.subr.mxu0 0.0
    %2341 = vmatpush1.msra.mxu0 %v2306
    %2342 = vmatprep.subr.mxu0 0.0
    %2343 = vmatpush1.msra.mxu0 %v2305
    %2344 = vmatprep.subr.mxu0 0.0
    %2345 = vmatpush1.msra.mxu0 %v2304
    %2346 = vmatprep.subr.mxu0 0.0
    %2347 = vmatpush1.msra.mxu0 %v2303
    %2348 = vmatprep.subr.mxu0 0.0
    %2349 = vmatpush2.msra.mxu0 0.0
    %2350 = vmatprep.subr.mxu0 0.0
    %2351 = vmatpush2.msra.mxu0 0.0
    %2352 = vmatprep.subr.mxu0 0.0
    %2353 = vmatpush2.msra.mxu0 0.0
    %2354 = vmatprep.subr.mxu0 0.0
    %2355 = vmatpush2.msra.mxu0 0.0
    %2356 = vmatprep.subr.mxu0 0.0
    %2357 = vmatpush2.msra.mxu0 0.0
    %2358 = vmatprep.subr.mxu0 0.0
    %2359 = vmatpush2.msra.mxu0 0.0
    %2360 = vmatprep.subr.mxu0 0.0
    %2361 = vmatpush2.msra.mxu0 0.0
    %2362 = vmatprep.subr.mxu0 0.0
    %2363 = vmatpush2.msra.mxu0 0.0
    %2364 = vmatprep.subr.mxu0 0.0
    %2365 = vmatpush2.msra.mxu0 0.0
    %2366 = vmatprep.subr.mxu0 0.0
    %2367 = vmatpush2.msra.mxu0 0.0
    %2368 = vmatprep.subr.mxu0 0.0
    %2369 = vmatpush2.msra.mxu0 0.0
    %2370 = vmatprep.subr.mxu0 0.0
    %2371 = vmatpush2.msra.mxu0 0.0
    %2372 = vmatprep.subr.mxu0 0.0
    %2373 = vmatpush2.msra.mxu0 0.0
    %2374 = vmatprep.subr.mxu0 0.0
    %2375 = vmatpush2.msra.mxu0 0.0
    %2376 = vmatprep.subr.mxu0 0.0
    %2377 = vmatpush2.msra.mxu0 0.0
    %2378 = vmatprep.subr.mxu0 0.0
    %2379 = vmatpush2.msra.mxu0 0.0
    %2380 = vmatprep.mubr.f32.mxu0 0.0
    %2381 = vmatmul.mubr.f32.gmra.mxu0 %v2310
    %v2382 = vpop.f32.mrf.mxu0
    %v2383 = vadd.f32 0.0, %v2382
    %v2384 = vpop.f32.mrf.mxu0
    %2385 = vdwg.mxu0
    %v2386 = vadd.f32 %v2227, %v2383
    %v2388 = vsel %vm155, %v2144, 0
    %2390 = vmatprep.subr.mxu0 0.0
    %2391 = vmatpush1.msra.mxu0 0.0
    %2392 = vmatprep.subr.mxu0 0.0
    %2393 = vmatpush1.msra.mxu0 0.0
    %2394 = vmatprep.subr.mxu0 0.0
    %2395 = vmatpush1.msra.mxu0 0.0
    %2396 = vmatprep.subr.mxu0 0.0
    %2397 = vmatpush1.msra.mxu0 0.0
    %2398 = vmatprep.subr.mxu0 0.0
    %2399 = vmatpush1.msra.mxu0 0.0
    %2400 = vmatprep.subr.mxu0 0.0
    %2401 = vmatpush1.msra.mxu0 0.0
    %2402 = vmatprep.subr.mxu0 0.0
    %2403 = vmatpush1.msra.mxu0 0.0
    %2404 = vmatprep.subr.mxu0 0.0
    %2405 = vmatpush1.msra.mxu0 0.0
    %2406 = vmatprep.subr.mxu0 0.0
    %2407 = vmatpush1.msra.mxu0 0.0
    %2408 = vmatprep.subr.mxu0 0.0
    %2409 = vmatpush1.msra.mxu0 0.0
    %2410 = vmatprep.subr.mxu0 0.0
    %2411 = vmatpush1.msra.mxu0 0.0
    %2412 = vmatprep.subr.mxu0 0.0
    %2413 = vmatpush1.msra.mxu0 0.0
    %2414 = vmatprep.subr.mxu0 0.0
    %2415 = vmatpush1.msra.mxu0 0.0
    %2416 = vmatprep.subr.mxu0 0.0
    %2417 = vmatpush1.msra.mxu0 0.0
    %2418 = vmatprep.subr.mxu0 0.0
    %2419 = vmatpush1.msra.mxu0 0.0
    %2420 = vmatprep.subr.mxu0 0.0
    %2421 = vmatpush1.msra.mxu0 %v2141
    %2422 = vmatprep.subr.mxu0 0.0
    %2423 = vmatpush2.msra.mxu0 0.0
    %2424 = vmatprep.subr.mxu0 0.0
    %2425 = vmatpush2.msra.mxu0 0.0
    %2426 = vmatprep.subr.mxu0 0.0
    %2427 = vmatpush2.msra.mxu0 0.0
    %2428 = vmatprep.subr.mxu0 0.0
    %2429 = vmatpush2.msra.mxu0 0.0
    %2430 = vmatprep.subr.mxu0 0.0
    %2431 = vmatpush2.msra.mxu0 0.0
    %2432 = vmatprep.subr.mxu0 0.0
    %2433 = vmatpush2.msra.mxu0 0.0
    %2434 = vmatprep.subr.mxu0 0.0
    %2435 = vmatpush2.msra.mxu0 0.0
    %2436 = vmatprep.subr.mxu0 0.0
    %2437 = vmatpush2.msra.mxu0 0.0
    %2438 = vmatprep.subr.mxu0 0.0
    %2439 = vmatpush2.msra.mxu0 0.0
    %2440 = vmatprep.subr.mxu0 0.0
    %2441 = vmatpush2.msra.mxu0 0.0
    %2442 = vmatprep.subr.mxu0 0.0
    %2443 = vmatpush2.msra.mxu0 0.0
    %2444 = vmatprep.subr.mxu0 0.0
    %2445 = vmatpush2.msra.mxu0 0.0
    %2446 = vmatprep.subr.mxu0 0.0
    %2447 = vmatpush2.msra.mxu0 0.0
    %2448 = vmatprep.subr.mxu0 0.0
    %2449 = vmatpush2.msra.mxu0 0.0
    %2450 = vmatprep.subr.mxu0 0.0
    %2451 = vmatpush2.msra.mxu0 0.0
    %2452 = vmatprep.subr.mxu0 0.0
    %2453 = vmatpush2.msra.mxu0 0.0
    %2454 = vmatprep.mubr.f32.mxu0 0.0
    %2455 = vmatmul.mubr.f32.gmra.mxu0 %v2388
    %v2456 = vpop.f32.mrf.mxu0
    %v2457 = vadd.f32 0.0, %v2456
    %v2458 = vpop.f32.mrf.mxu0
    %2459 = vdwg.mxu0
    %s2460 = scalar_lea.vmem [#allocation9], 40
    %v2461 = vld [vmem:[%s2460] sm:$0xff]
    %v2462 = vld [vmem:[%s2460 + $0x8] sm:$0xff]
    %v2463 = vld [vmem:[%s2460 + $0x10] sm:$0xff]
    %v2464 = vld [vmem:[%s2460 + $0x18] sm:$0xff]
    %v2465 = vld [vmem:[%s2460 + $0x20] sm:$0x3]
    %v2467 = vsel %vm2308, %v2457, 0
    %v2470 = vsel %vm2312, %v2465, 0
    %2472 = vmatprep.subr.mxu0 0.0
    %2473 = vmatpush1.msra.mxu0 0.0
    %2474 = vmatprep.subr.mxu0 0.0
    %2475 = vmatpush1.msra.mxu0 0.0
    %2476 = vmatprep.subr.mxu0 0.0
    %2477 = vmatpush1.msra.mxu0 0.0
    %2478 = vmatprep.subr.mxu0 0.0
    %2479 = vmatpush1.msra.mxu0 0.0
    %2480 = vmatprep.subr.mxu0 0.0
    %2481 = vmatpush1.msra.mxu0 0.0
    %2482 = vmatprep.subr.mxu0 0.0
    %2483 = vmatpush1.msra.mxu0 0.0
    %2484 = vmatprep.subr.mxu0 0.0
    %2485 = vmatpush1.msra.mxu0 0.0
    %2486 = vmatprep.subr.mxu0 0.0
    %2487 = vmatpush1.msra.mxu0 0.0
    %2488 = vmatprep.subr.mxu0 0.0
    %2489 = vmatpush1.msra.mxu0 0.0
    %2490 = vmatprep.subr.mxu0 0.0
    %2491 = vmatpush1.msra.mxu0 0.0
    %2492 = vmatprep.subr.mxu0 0.0
    %2493 = vmatpush1.msra.mxu0 0.0
    %2494 = vmatprep.subr.mxu0 0.0
    %2495 = vmatpush1.msra.mxu0 %v2470
    %2496 = vmatprep.subr.mxu0 0.0
    %2497 = vmatpush1.msra.mxu0 %v2464
    %2498 = vmatprep.subr.mxu0 0.0
    %2499 = vmatpush1.msra.mxu0 %v2463
    %2500 = vmatprep.subr.mxu0 0.0
    %2501 = vmatpush1.msra.mxu0 %v2462
    %2502 = vmatprep.subr.mxu0 0.0
    %2503 = vmatpush1.msra.mxu0 %v2461
    %2504 = vmatprep.subr.mxu0 0.0
    %2505 = vmatpush2.msra.mxu0 0.0
    %2506 = vmatprep.subr.mxu0 0.0
    %2507 = vmatpush2.msra.mxu0 0.0
    %2508 = vmatprep.subr.mxu0 0.0
    %2509 = vmatpush2.msra.mxu0 0.0
    %2510 = vmatprep.subr.mxu0 0.0
    %2511 = vmatpush2.msra.mxu0 0.0
    %2512 = vmatprep.subr.mxu0 0.0
    %2513 = vmatpush2.msra.mxu0 0.0
    %2514 = vmatprep.subr.mxu0 0.0
    %2515 = vmatpush2.msra.mxu0 0.0
    %2516 = vmatprep.subr.mxu0 0.0
    %2517 = vmatpush2.msra.mxu0 0.0
    %2518 = vmatprep.subr.mxu0 0.0
    %2519 = vmatpush2.msra.mxu0 0.0
    %2520 = vmatprep.subr.mxu0 0.0
    %2521 = vmatpush2.msra.mxu0 0.0
    %2522 = vmatprep.subr.mxu0 0.0
    %2523 = vmatpush2.msra.mxu0 0.0
    %2524 = vmatprep.subr.mxu0 0.0
    %2525 = vmatpush2.msra.mxu0 0.0
    %2526 = vmatprep.subr.mxu0 0.0
    %2527 = vmatpush2.msra.mxu0 0.0
    %2528 = vmatprep.subr.mxu0 0.0
    %2529 = vmatpush2.msra.mxu0 0.0
    %2530 = vmatprep.subr.mxu0 0.0
    %2531 = vmatpush2.msra.mxu0 0.0
    %2532 = vmatprep.subr.mxu0 0.0
    %2533 = vmatpush2.msra.mxu0 0.0
    %2534 = vmatprep.subr.mxu0 0.0
    %2535 = vmatpush2.msra.mxu0 0.0
    %2536 = vmatprep.mubr.f32.mxu0 0.0
    %2537 = vmatmul.mubr.f32.gmra.mxu0 %v2467
    %v2538 = vpop.f32.mrf.mxu0
    %v2539 = vadd.f32 0.0, %v2538
    %v2540 = vpop.f32.mrf.mxu0
    %2541 = vdwg.mxu0
    %v2542 = vadd.f32 %v2386, %v2539
    %v2543 = vmax.f32 %v2542, 0.0
    %2545 = vset.pattern.permute.xlu0 0
    %2546 = vperm.xlu0 %2545, %v2151
    %v2547 = vpop.permute.xlu0 %2546
    %v2550 = vsel %vm155, %v2148, 0
    %2552 = vmatprep.subr.mxu0 0.0
    %2553 = vmatpush1.msra.mxu0 0.0
    %2554 = vmatprep.subr.mxu0 0.0
    %2555 = vmatpush1.msra.mxu0 0.0
    %2556 = vmatprep.subr.mxu0 0.0
    %2557 = vmatpush1.msra.mxu0 0.0
    %2558 = vmatprep.subr.mxu0 0.0
    %2559 = vmatpush1.msra.mxu0 0.0
    %2560 = vmatprep.subr.mxu0 0.0
    %2561 = vmatpush1.msra.mxu0 0.0
    %2562 = vmatprep.subr.mxu0 0.0
    %2563 = vmatpush1.msra.mxu0 0.0
    %2564 = vmatprep.subr.mxu0 0.0
    %2565 = vmatpush1.msra.mxu0 0.0
    %2566 = vmatprep.subr.mxu0 0.0
    %2567 = vmatpush1.msra.mxu0 0.0
    %2568 = vmatprep.subr.mxu0 0.0
    %2569 = vmatpush1.msra.mxu0 0.0
    %2570 = vmatprep.subr.mxu0 0.0
    %2571 = vmatpush1.msra.mxu0 0.0
    %2572 = vmatprep.subr.mxu0 0.0
    %2573 = vmatpush1.msra.mxu0 0.0
    %2574 = vmatprep.subr.mxu0 0.0
    %2575 = vmatpush1.msra.mxu0 0.0
    %2576 = vmatprep.subr.mxu0 0.0
    %2577 = vmatpush1.msra.mxu0 0.0
    %2578 = vmatprep.subr.mxu0 0.0
    %2579 = vmatpush1.msra.mxu0 0.0
    %2580 = vmatprep.subr.mxu0 0.0
    %2581 = vmatpush1.msra.mxu0 0.0
    %2582 = vmatprep.subr.mxu0 0.0
    %2583 = vmatpush1.msra.mxu0 %v2543
    %2584 = vmatprep.subr.mxu0 0.0
    %2585 = vmatpush2.msra.mxu0 0.0
    %2586 = vmatprep.subr.mxu0 0.0
    %2587 = vmatpush2.msra.mxu0 0.0
    %2588 = vmatprep.subr.mxu0 0.0
    %2589 = vmatpush2.msra.mxu0 0.0
    %2590 = vmatprep.subr.mxu0 0.0
    %2591 = vmatpush2.msra.mxu0 0.0
    %2592 = vmatprep.subr.mxu0 0.0
    %2593 = vmatpush2.msra.mxu0 0.0
    %2594 = vmatprep.subr.mxu0 0.0
    %2595 = vmatpush2.msra.mxu0 0.0
    %2596 = vmatprep.subr.mxu0 0.0
    %2597 = vmatpush2.msra.mxu0 0.0
    %2598 = vmatprep.subr.mxu0 0.0
    %2599 = vmatpush2.msra.mxu0 0.0
    %2600 = vmatprep.subr.mxu0 0.0
    %2601 = vmatpush2.msra.mxu0 0.0
    %2602 = vmatprep.subr.mxu0 0.0
    %2603 = vmatpush2.msra.mxu0 0.0
    %2604 = vmatprep.subr.mxu0 0.0
    %2605 = vmatpush2.msra.mxu0 0.0
    %2606 = vmatprep.subr.mxu0 0.0
    %2607 = vmatpush2.msra.mxu0 0.0
    %2608 = vmatprep.subr.mxu0 0.0
    %2609 = vmatpush2.msra.mxu0 0.0
    %2610 = vmatprep.subr.mxu0 0.0
    %2611 = vmatpush2.msra.mxu0 0.0
    %2612 = vmatprep.subr.mxu0 0.0
    %2613 = vmatpush2.msra.mxu0 0.0
    %2614 = vmatprep.subr.mxu0 0.0
    %2615 = vmatpush2.msra.mxu0 0.0
    %2616 = vmatprep.mubr.f32.mxu0 0.0
    %2617 = vmatmul.mubr.f32.gmra.mxu0 %v2550
    %v2618 = vpop.f32.mrf.mxu0
    %v2619 = vadd.f32 %v2547, %v2618
    %v2620 = vpop.f32.mrf.mxu0
    %2621 = vdwg.mxu0
    %v2623 = vsel %vm155, %v2147, 0
    %2625 = vmatprep.subr.mxu0 0.0
    %2626 = vmatpush1.msra.mxu0 0.0
    %2627 = vmatprep.subr.mxu0 0.0
    %2628 = vmatpush1.msra.mxu0 0.0
    %2629 = vmatprep.subr.mxu0 0.0
    %2630 = vmatpush1.msra.mxu0 0.0
    %2631 = vmatprep.subr.mxu0 0.0
    %2632 = vmatpush1.msra.mxu0 0.0
    %2633 = vmatprep.subr.mxu0 0.0
    %2634 = vmatpush1.msra.mxu0 0.0
    %2635 = vmatprep.subr.mxu0 0.0
    %2636 = vmatpush1.msra.mxu0 0.0
    %2637 = vmatprep.subr.mxu0 0.0
    %2638 = vmatpush1.msra.mxu0 0.0
    %2639 = vmatprep.subr.mxu0 0.0
    %2640 = vmatpush1.msra.mxu0 0.0
    %2641 = vmatprep.subr.mxu0 0.0
    %2642 = vmatpush1.msra.mxu0 0.0
    %2643 = vmatprep.subr.mxu0 0.0
    %2644 = vmatpush1.msra.mxu0 0.0
    %2645 = vmatprep.subr.mxu0 0.0
    %2646 = vmatpush1.msra.mxu0 0.0
    %2647 = vmatprep.subr.mxu0 0.0
    %2648 = vmatpush1.msra.mxu0 0.0
    %2649 = vmatprep.subr.mxu0 0.0
    %2650 = vmatpush1.msra.mxu0 0.0
    %2651 = vmatprep.subr.mxu0 0.0
    %2652 = vmatpush1.msra.mxu0 0.0
    %2653 = vmatprep.subr.mxu0 0.0
    %2654 = vmatpush1.msra.mxu0 0.0
    %2655 = vmatprep.subr.mxu0 0.0
    %2656 = vmatpush1.msra.mxu0 %v2543
    %2657 = vmatprep.subr.mxu0 0.0
    %2658 = vmatpush2.msra.mxu0 0.0
    %2659 = vmatprep.subr.mxu0 0.0
    %2660 = vmatpush2.msra.mxu0 0.0
    %2661 = vmatprep.subr.mxu0 0.0
    %2662 = vmatpush2.msra.mxu0 0.0
    %2663 = vmatprep.subr.mxu0 0.0
    %2664 = vmatpush2.msra.mxu0 0.0
    %2665 = vmatprep.subr.mxu0 0.0
    %2666 = vmatpush2.msra.mxu0 0.0
    %2667 = vmatprep.subr.mxu0 0.0
    %2668 = vmatpush2.msra.mxu0 0.0
    %2669 = vmatprep.subr.mxu0 0.0
    %2670 = vmatpush2.msra.mxu0 0.0
    %2671 = vmatprep.subr.mxu0 0.0
    %2672 = vmatpush2.msra.mxu0 0.0
    %2673 = vmatprep.subr.mxu0 0.0
    %2674 = vmatpush2.msra.mxu0 0.0
    %2675 = vmatprep.subr.mxu0 0.0
    %2676 = vmatpush2.msra.mxu0 0.0
    %2677 = vmatprep.subr.mxu0 0.0
    %2678 = vmatpush2.msra.mxu0 0.0
    %2679 = vmatprep.subr.mxu0 0.0
    %2680 = vmatpush2.msra.mxu0 0.0
    %2681 = vmatprep.subr.mxu0 0.0
    %2682 = vmatpush2.msra.mxu0 0.0
    %2683 = vmatprep.subr.mxu0 0.0
    %2684 = vmatpush2.msra.mxu0 0.0
    %2685 = vmatprep.subr.mxu0 0.0
    %2686 = vmatpush2.msra.mxu0 0.0
    %2687 = vmatprep.subr.mxu0 0.0
    %2688 = vmatpush2.msra.mxu0 0.0
    %2689 = vmatprep.mubr.f32.mxu0 0.0
    %2690 = vmatmul.mubr.f32.gmra.mxu0 %v2623
    %v2691 = vpop.f32.mrf.mxu0
    %v2692 = vadd.f32 0.0, %v2691
    %v2693 = vpop.f32.mrf.mxu0
    %2694 = vdwg.mxu0
    %v2696 = vsel %vm2308, %v2692, 0
    %2698 = vmatprep.subr.mxu0 0.0
    %2699 = vmatpush1.msra.mxu0 0.0
    %2700 = vmatprep.subr.mxu0 0.0
    %2701 = vmatpush1.msra.mxu0 0.0
    %2702 = vmatprep.subr.mxu0 0.0
    %2703 = vmatpush1.msra.mxu0 0.0
    %2704 = vmatprep.subr.mxu0 0.0
    %2705 = vmatpush1.msra.mxu0 0.0
    %2706 = vmatprep.subr.mxu0 0.0
    %2707 = vmatpush1.msra.mxu0 0.0
    %2708 = vmatprep.subr.mxu0 0.0
    %2709 = vmatpush1.msra.mxu0 0.0
    %2710 = vmatprep.subr.mxu0 0.0
    %2711 = vmatpush1.msra.mxu0 0.0
    %2712 = vmatprep.subr.mxu0 0.0
    %2713 = vmatpush1.msra.mxu0 0.0
    %2714 = vmatprep.subr.mxu0 0.0
    %2715 = vmatpush1.msra.mxu0 0.0
    %2716 = vmatprep.subr.mxu0 0.0
    %2717 = vmatpush1.msra.mxu0 0.0
    %2718 = vmatprep.subr.mxu0 0.0
    %2719 = vmatpush1.msra.mxu0 0.0
    %2720 = vmatprep.subr.mxu0 0.0
    %2721 = vmatpush1.msra.mxu0 %v2314
    %2722 = vmatprep.subr.mxu0 0.0
    %2723 = vmatpush1.msra.mxu0 %v2306
    %2724 = vmatprep.subr.mxu0 0.0
    %2725 = vmatpush1.msra.mxu0 %v2305
    %2726 = vmatprep.subr.mxu0 0.0
    %2727 = vmatpush1.msra.mxu0 %v2304
    %2728 = vmatprep.subr.mxu0 0.0
    %2729 = vmatpush1.msra.mxu0 %v2303
    %2730 = vmatprep.subr.mxu0 0.0
    %2731 = vmatpush2.msra.mxu0 0.0
    %2732 = vmatprep.subr.mxu0 0.0
    %2733 = vmatpush2.msra.mxu0 0.0
    %2734 = vmatprep.subr.mxu0 0.0
    %2735 = vmatpush2.msra.mxu0 0.0
    %2736 = vmatprep.subr.mxu0 0.0
    %2737 = vmatpush2.msra.mxu0 0.0
    %2738 = vmatprep.subr.mxu0 0.0
    %2739 = vmatpush2.msra.mxu0 0.0
    %2740 = vmatprep.subr.mxu0 0.0
    %2741 = vmatpush2.msra.mxu0 0.0
    %2742 = vmatprep.subr.mxu0 0.0
    %2743 = vmatpush2.msra.mxu0 0.0
    %2744 = vmatprep.subr.mxu0 0.0
    %2745 = vmatpush2.msra.mxu0 0.0
    %2746 = vmatprep.subr.mxu0 0.0
    %2747 = vmatpush2.msra.mxu0 0.0
    %2748 = vmatprep.subr.mxu0 0.0
    %2749 = vmatpush2.msra.mxu0 0.0
    %2750 = vmatprep.subr.mxu0 0.0
    %2751 = vmatpush2.msra.mxu0 0.0
    %2752 = vmatprep.subr.mxu0 0.0
    %2753 = vmatpush2.msra.mxu0 0.0
    %2754 = vmatprep.subr.mxu0 0.0
    %2755 = vmatpush2.msra.mxu0 0.0
    %2756 = vmatprep.subr.mxu0 0.0
    %2757 = vmatpush2.msra.mxu0 0.0
    %2758 = vmatprep.subr.mxu0 0.0
    %2759 = vmatpush2.msra.mxu0 0.0
    %2760 = vmatprep.subr.mxu0 0.0
    %2761 = vmatpush2.msra.mxu0 0.0
    %2762 = vmatprep.mubr.f32.mxu0 0.0
    %2763 = vmatmul.mubr.f32.gmra.mxu0 %v2696
    %v2764 = vpop.f32.mrf.mxu0
    %v2765 = vadd.f32 0.0, %v2764
    %v2766 = vpop.f32.mrf.mxu0
    %2767 = vdwg.mxu0
    %v2768 = vadd.f32 %v2619, %v2765
    %v2770 = vsel %vm155, %v2149, 0
    %2772 = vmatprep.subr.mxu0 0.0
    %2773 = vmatpush1.msra.mxu0 0.0
    %2774 = vmatprep.subr.mxu0 0.0
    %2775 = vmatpush1.msra.mxu0 0.0
    %2776 = vmatprep.subr.mxu0 0.0
    %2777 = vmatpush1.msra.mxu0 0.0
    %2778 = vmatprep.subr.mxu0 0.0
    %2779 = vmatpush1.msra.mxu0 0.0
    %2780 = vmatprep.subr.mxu0 0.0
    %2781 = vmatpush1.msra.mxu0 0.0
    %2782 = vmatprep.subr.mxu0 0.0
    %2783 = vmatpush1.msra.mxu0 0.0
    %2784 = vmatprep.subr.mxu0 0.0
    %2785 = vmatpush1.msra.mxu0 0.0
    %2786 = vmatprep.subr.mxu0 0.0
    %2787 = vmatpush1.msra.mxu0 0.0
    %2788 = vmatprep.subr.mxu0 0.0
    %2789 = vmatpush1.msra.mxu0 0.0
    %2790 = vmatprep.subr.mxu0 0.0
    %2791 = vmatpush1.msra.mxu0 0.0
    %2792 = vmatprep.subr.mxu0 0.0
    %2793 = vmatpush1.msra.mxu0 0.0
    %2794 = vmatprep.subr.mxu0 0.0
    %2795 = vmatpush1.msra.mxu0 0.0
    %2796 = vmatprep.subr.mxu0 0.0
    %2797 = vmatpush1.msra.mxu0 0.0
    %2798 = vmatprep.subr.mxu0 0.0
    %2799 = vmatpush1.msra.mxu0 0.0
    %2800 = vmatprep.subr.mxu0 0.0
    %2801 = vmatpush1.msra.mxu0 0.0
    %2802 = vmatprep.subr.mxu0 0.0
    %2803 = vmatpush1.msra.mxu0 %v2543
    %2804 = vmatprep.subr.mxu0 0.0
    %2805 = vmatpush2.msra.mxu0 0.0
    %2806 = vmatprep.subr.mxu0 0.0
    %2807 = vmatpush2.msra.mxu0 0.0
    %2808 = vmatprep.subr.mxu0 0.0
    %2809 = vmatpush2.msra.mxu0 0.0
    %2810 = vmatprep.subr.mxu0 0.0
    %2811 = vmatpush2.msra.mxu0 0.0
    %2812 = vmatprep.subr.mxu0 0.0
    %2813 = vmatpush2.msra.mxu0 0.0
    %2814 = vmatprep.subr.mxu0 0.0
    %2815 = vmatpush2.msra.mxu0 0.0
    %2816 = vmatprep.subr.mxu0 0.0
    %2817 = vmatpush2.msra.mxu0 0.0
    %2818 = vmatprep.subr.mxu0 0.0
    %2819 = vmatpush2.msra.mxu0 0.0
    %2820 = vmatprep.subr.mxu0 0.0
    %2821 = vmatpush2.msra.mxu0 0.0
    %2822 = vmatprep.subr.mxu0 0.0
    %2823 = vmatpush2.msra.mxu0 0.0
    %2824 = vmatprep.subr.mxu0 0.0
    %2825 = vmatpush2.msra.mxu0 0.0
    %2826 = vmatprep.subr.mxu0 0.0
    %2827 = vmatpush2.msra.mxu0 0.0
    %2828 = vmatprep.subr.mxu0 0.0
    %2829 = vmatpush2.msra.mxu0 0.0
    %2830 = vmatprep.subr.mxu0 0.0
    %2831 = vmatpush2.msra.mxu0 0.0
    %2832 = vmatprep.subr.mxu0 0.0
    %2833 = vmatpush2.msra.mxu0 0.0
    %2834 = vmatprep.subr.mxu0 0.0
    %2835 = vmatpush2.msra.mxu0 0.0
    %2836 = vmatprep.mubr.f32.mxu0 0.0
    %2837 = vmatmul.mubr.f32.gmra.mxu0 %v2770
    %v2838 = vpop.f32.mrf.mxu0
    %v2839 = vadd.f32 0.0, %v2838
    %v2840 = vpop.f32.mrf.mxu0
    %2841 = vdwg.mxu0
    %v2843 = vsel %vm2308, %v2839, 0
    %2845 = vmatprep.subr.mxu0 0.0
    %2846 = vmatpush1.msra.mxu0 0.0
    %2847 = vmatprep.subr.mxu0 0.0
    %2848 = vmatpush1.msra.mxu0 0.0
    %2849 = vmatprep.subr.mxu0 0.0
    %2850 = vmatpush1.msra.mxu0 0.0
    %2851 = vmatprep.subr.mxu0 0.0
    %2852 = vmatpush1.msra.mxu0 0.0
    %2853 = vmatprep.subr.mxu0 0.0
    %2854 = vmatpush1.msra.mxu0 0.0
    %2855 = vmatprep.subr.mxu0 0.0
    %2856 = vmatpush1.msra.mxu0 0.0
    %2857 = vmatprep.subr.mxu0 0.0
    %2858 = vmatpush1.msra.mxu0 0.0
    %2859 = vmatprep.subr.mxu0 0.0
    %2860 = vmatpush1.msra.mxu0 0.0
    %2861 = vmatprep.subr.mxu0 0.0
    %2862 = vmatpush1.msra.mxu0 0.0
    %2863 = vmatprep.subr.mxu0 0.0
    %2864 = vmatpush1.msra.mxu0 0.0
    %2865 = vmatprep.subr.mxu0 0.0
    %2866 = vmatpush1.msra.mxu0 0.0
    %2867 = vmatprep.subr.mxu0 0.0
    %2868 = vmatpush1.msra.mxu0 %v2470
    %2869 = vmatprep.subr.mxu0 0.0
    %2870 = vmatpush1.msra.mxu0 %v2464
    %2871 = vmatprep.subr.mxu0 0.0
    %2872 = vmatpush1.msra.mxu0 %v2463
    %2873 = vmatprep.subr.mxu0 0.0
    %2874 = vmatpush1.msra.mxu0 %v2462
    %2875 = vmatprep.subr.mxu0 0.0
    %2876 = vmatpush1.msra.mxu0 %v2461
    %2877 = vmatprep.subr.mxu0 0.0
    %2878 = vmatpush2.msra.mxu0 0.0
    %2879 = vmatprep.subr.mxu0 0.0
    %2880 = vmatpush2.msra.mxu0 0.0
    %2881 = vmatprep.subr.mxu0 0.0
    %2882 = vmatpush2.msra.mxu0 0.0
    %2883 = vmatprep.subr.mxu0 0.0
    %2884 = vmatpush2.msra.mxu0 0.0
    %2885 = vmatprep.subr.mxu0 0.0
    %2886 = vmatpush2.msra.mxu0 0.0
    %2887 = vmatprep.subr.mxu0 0.0
    %2888 = vmatpush2.msra.mxu0 0.0
    %2889 = vmatprep.subr.mxu0 0.0
    %2890 = vmatpush2.msra.mxu0 0.0
    %2891 = vmatprep.subr.mxu0 0.0
    %2892 = vmatpush2.msra.mxu0 0.0
    %2893 = vmatprep.subr.mxu0 0.0
    %2894 = vmatpush2.msra.mxu0 0.0
    %2895 = vmatprep.subr.mxu0 0.0
    %2896 = vmatpush2.msra.mxu0 0.0
    %2897 = vmatprep.subr.mxu0 0.0
    %2898 = vmatpush2.msra.mxu0 0.0
    %2899 = vmatprep.subr.mxu0 0.0
    %2900 = vmatpush2.msra.mxu0 0.0
    %2901 = vmatprep.subr.mxu0 0.0
    %2902 = vmatpush2.msra.mxu0 0.0
    %2903 = vmatprep.subr.mxu0 0.0
    %2904 = vmatpush2.msra.mxu0 0.0
    %2905 = vmatprep.subr.mxu0 0.0
    %2906 = vmatpush2.msra.mxu0 0.0
    %2907 = vmatprep.subr.mxu0 0.0
    %2908 = vmatpush2.msra.mxu0 0.0
    %2909 = vmatprep.mubr.f32.mxu0 0.0
    %2910 = vmatmul.mubr.f32.gmra.mxu0 %v2843
    %v2911 = vpop.f32.mrf.mxu0
    %v2912 = vadd.f32 0.0, %v2911
    %v2913 = vpop.f32.mrf.mxu0
    %2914 = vdwg.mxu0
    %v2915 = vadd.f32 %v2768, %v2912
    %v2916 = vadd.f32 %v2915, %v2141
    %v2917 = vmax.f32 %v2916, 0.0
    %s2918 = scalar_lea.vmem [#allocation10], 48
    %v2919 = vld [vmem:[%s2918] sm:$0xff]
    %v2920 = vld [vmem:[%s2918 + $0x8] sm:$0xff]
    %v2921 = vld [vmem:[%s2918 + $0x10] sm:$0xff]
    %s2922 = scalar_lea.vmem %s10, 16
    %v2923 = vld [vmem:[%s2922] sm:$0xff]
    %s2924 = scalar_lea.vmem [#allocation10], 72
    %v2925 = vld [vmem:[%s2924] sm:$0xff]
    %v2926 = vld [vmem:[%s2924 + $0x8] sm:$0xff]
    %v2927 = vld [vmem:[%s2924 + $0x10] sm:$0xff]
    %s2928 = scalar_lea.vmem %s10, 24
    %v2929 = vld [vmem:[%s2928] sm:$0xff]
    %2931 = vset.pattern.permute.xlu0 0
    %2932 = vperm.xlu0 %2931, %v2923
    %v2933 = vpop.permute.xlu0 %2932
    %v2936 = vsel %vm155, %v2920, 0
    %2938 = vmatprep.subr.mxu0 0.0
    %2939 = vmatpush1.msra.mxu0 0.0
    %2940 = vmatprep.subr.mxu0 0.0
    %2941 = vmatpush1.msra.mxu0 0.0
    %2942 = vmatprep.subr.mxu0 0.0
    %2943 = vmatpush1.msra.mxu0 0.0
    %2944 = vmatprep.subr.mxu0 0.0
    %2945 = vmatpush1.msra.mxu0 0.0
    %2946 = vmatprep.subr.mxu0 0.0
    %2947 = vmatpush1.msra.mxu0 0.0
    %2948 = vmatprep.subr.mxu0 0.0
    %2949 = vmatpush1.msra.mxu0 0.0
    %2950 = vmatprep.subr.mxu0 0.0
    %2951 = vmatpush1.msra.mxu0 0.0
    %2952 = vmatprep.subr.mxu0 0.0
    %2953 = vmatpush1.msra.mxu0 0.0
    %2954 = vmatprep.subr.mxu0 0.0
    %2955 = vmatpush1.msra.mxu0 0.0
    %2956 = vmatprep.subr.mxu0 0.0
    %2957 = vmatpush1.msra.mxu0 0.0
    %2958 = vmatprep.subr.mxu0 0.0
    %2959 = vmatpush1.msra.mxu0 0.0
    %2960 = vmatprep.subr.mxu0 0.0
    %2961 = vmatpush1.msra.mxu0 0.0
    %2962 = vmatprep.subr.mxu0 0.0
    %2963 = vmatpush1.msra.mxu0 0.0
    %2964 = vmatprep.subr.mxu0 0.0
    %2965 = vmatpush1.msra.mxu0 0.0
    %2966 = vmatprep.subr.mxu0 0.0
    %2967 = vmatpush1.msra.mxu0 0.0
    %2968 = vmatprep.subr.mxu0 0.0
    %2969 = vmatpush1.msra.mxu0 %v2917
    %2970 = vmatprep.subr.mxu0 0.0
    %2971 = vmatpush2.msra.mxu0 0.0
    %2972 = vmatprep.subr.mxu0 0.0
    %2973 = vmatpush2.msra.mxu0 0.0
    %2974 = vmatprep.subr.mxu0 0.0
    %2975 = vmatpush2.msra.mxu0 0.0
    %2976 = vmatprep.subr.mxu0 0.0
    %2977 = vmatpush2.msra.mxu0 0.0
    %2978 = vmatprep.subr.mxu0 0.0
    %2979 = vmatpush2.msra.mxu0 0.0
    %2980 = vmatprep.subr.mxu0 0.0
    %2981 = vmatpush2.msra.mxu0 0.0
    %2982 = vmatprep.subr.mxu0 0.0
    %2983 = vmatpush2.msra.mxu0 0.0
    %2984 = vmatprep.subr.mxu0 0.0
    %2985 = vmatpush2.msra.mxu0 0.0
    %2986 = vmatprep.subr.mxu0 0.0
    %2987 = vmatpush2.msra.mxu0 0.0
    %2988 = vmatprep.subr.mxu0 0.0
    %2989 = vmatpush2.msra.mxu0 0.0
    %2990 = vmatprep.subr.mxu0 0.0
    %2991 = vmatpush2.msra.mxu0 0.0
    %2992 = vmatprep.subr.mxu0 0.0
    %2993 = vmatpush2.msra.mxu0 0.0
    %2994 = vmatprep.subr.mxu0 0.0
    %2995 = vmatpush2.msra.mxu0 0.0
    %2996 = vmatprep.subr.mxu0 0.0
    %2997 = vmatpush2.msra.mxu0 0.0
    %2998 = vmatprep.subr.mxu0 0.0
    %2999 = vmatpush2.msra.mxu0 0.0
    %3000 = vmatprep.subr.mxu0 0.0
    %3001 = vmatpush2.msra.mxu0 0.0
    %3002 = vmatprep.mubr.f32.mxu0 0.0
    %3003 = vmatmul.mubr.f32.gmra.mxu0 %v2936
    %v3004 = vpop.f32.mrf.mxu0
    %v3005 = vadd.f32 %v2933, %v3004
    %v3006 = vpop.f32.mrf.mxu0
    %3007 = vdwg.mxu0
    %v3009 = vsel %vm155, %v2919, 0
    %3011 = vmatprep.subr.mxu0 0.0
    %3012 = vmatpush1.msra.mxu0 0.0
    %3013 = vmatprep.subr.mxu0 0.0
    %3014 = vmatpush1.msra.mxu0 0.0
    %3015 = vmatprep.subr.mxu0 0.0
    %3016 = vmatpush1.msra.mxu0 0.0
    %3017 = vmatprep.subr.mxu0 0.0
    %3018 = vmatpush1.msra.mxu0 0.0
    %3019 = vmatprep.subr.mxu0 0.0
    %3020 = vmatpush1.msra.mxu0 0.0
    %3021 = vmatprep.subr.mxu0 0.0
    %3022 = vmatpush1.msra.mxu0 0.0
    %3023 = vmatprep.subr.mxu0 0.0
    %3024 = vmatpush1.msra.mxu0 0.0
    %3025 = vmatprep.subr.mxu0 0.0
    %3026 = vmatpush1.msra.mxu0 0.0
    %3027 = vmatprep.subr.mxu0 0.0
    %3028 = vmatpush1.msra.mxu0 0.0
    %3029 = vmatprep.subr.mxu0 0.0
    %3030 = vmatpush1.msra.mxu0 0.0
    %3031 = vmatprep.subr.mxu0 0.0
    %3032 = vmatpush1.msra.mxu0 0.0
    %3033 = vmatprep.subr.mxu0 0.0
    %3034 = vmatpush1.msra.mxu0 0.0
    %3035 = vmatprep.subr.mxu0 0.0
    %3036 = vmatpush1.msra.mxu0 0.0
    %3037 = vmatprep.subr.mxu0 0.0
    %3038 = vmatpush1.msra.mxu0 0.0
    %3039 = vmatprep.subr.mxu0 0.0
    %3040 = vmatpush1.msra.mxu0 0.0
    %3041 = vmatprep.subr.mxu0 0.0
    %3042 = vmatpush1.msra.mxu0 %v2917
    %3043 = vmatprep.subr.mxu0 0.0
    %3044 = vmatpush2.msra.mxu0 0.0
    %3045 = vmatprep.subr.mxu0 0.0
    %3046 = vmatpush2.msra.mxu0 0.0
    %3047 = vmatprep.subr.mxu0 0.0
    %3048 = vmatpush2.msra.mxu0 0.0
    %3049 = vmatprep.subr.mxu0 0.0
    %3050 = vmatpush2.msra.mxu0 0.0
    %3051 = vmatprep.subr.mxu0 0.0
    %3052 = vmatpush2.msra.mxu0 0.0
    %3053 = vmatprep.subr.mxu0 0.0
    %3054 = vmatpush2.msra.mxu0 0.0
    %3055 = vmatprep.subr.mxu0 0.0
    %3056 = vmatpush2.msra.mxu0 0.0
    %3057 = vmatprep.subr.mxu0 0.0
    %3058 = vmatpush2.msra.mxu0 0.0
    %3059 = vmatprep.subr.mxu0 0.0
    %3060 = vmatpush2.msra.mxu0 0.0
    %3061 = vmatprep.subr.mxu0 0.0
    %3062 = vmatpush2.msra.mxu0 0.0
    %3063 = vmatprep.subr.mxu0 0.0
    %3064 = vmatpush2.msra.mxu0 0.0
    %3065 = vmatprep.subr.mxu0 0.0
    %3066 = vmatpush2.msra.mxu0 0.0
    %3067 = vmatprep.subr.mxu0 0.0
    %3068 = vmatpush2.msra.mxu0 0.0
    %3069 = vmatprep.subr.mxu0 0.0
    %3070 = vmatpush2.msra.mxu0 0.0
    %3071 = vmatprep.subr.mxu0 0.0
    %3072 = vmatpush2.msra.mxu0 0.0
    %3073 = vmatprep.subr.mxu0 0.0
    %3074 = vmatpush2.msra.mxu0 0.0
    %3075 = vmatprep.mubr.f32.mxu0 0.0
    %3076 = vmatmul.mubr.f32.gmra.mxu0 %v3009
    %v3077 = vpop.f32.mrf.mxu0
    %v3078 = vadd.f32 0.0, %v3077
    %v3079 = vpop.f32.mrf.mxu0
    %3080 = vdwg.mxu0
    %v3082 = vsel %vm2308, %v3078, 0
    %3084 = vmatprep.subr.mxu0 0.0
    %3085 = vmatpush1.msra.mxu0 0.0
    %3086 = vmatprep.subr.mxu0 0.0
    %3087 = vmatpush1.msra.mxu0 0.0
    %3088 = vmatprep.subr.mxu0 0.0
    %3089 = vmatpush1.msra.mxu0 0.0
    %3090 = vmatprep.subr.mxu0 0.0
    %3091 = vmatpush1.msra.mxu0 0.0
    %3092 = vmatprep.subr.mxu0 0.0
    %3093 = vmatpush1.msra.mxu0 0.0
    %3094 = vmatprep.subr.mxu0 0.0
    %3095 = vmatpush1.msra.mxu0 0.0
    %3096 = vmatprep.subr.mxu0 0.0
    %3097 = vmatpush1.msra.mxu0 0.0
    %3098 = vmatprep.subr.mxu0 0.0
    %3099 = vmatpush1.msra.mxu0 0.0
    %3100 = vmatprep.subr.mxu0 0.0
    %3101 = vmatpush1.msra.mxu0 0.0
    %3102 = vmatprep.subr.mxu0 0.0
    %3103 = vmatpush1.msra.mxu0 0.0
    %3104 = vmatprep.subr.mxu0 0.0
    %3105 = vmatpush1.msra.mxu0 0.0
    %3106 = vmatprep.subr.mxu0 0.0
    %3107 = vmatpush1.msra.mxu0 %v2314
    %3108 = vmatprep.subr.mxu0 0.0
    %3109 = vmatpush1.msra.mxu0 %v2306
    %3110 = vmatprep.subr.mxu0 0.0
    %3111 = vmatpush1.msra.mxu0 %v2305
    %3112 = vmatprep.subr.mxu0 0.0
    %3113 = vmatpush1.msra.mxu0 %v2304
    %3114 = vmatprep.subr.mxu0 0.0
    %3115 = vmatpush1.msra.mxu0 %v2303
    %3116 = vmatprep.subr.mxu0 0.0
    %3117 = vmatpush2.msra.mxu0 0.0
    %3118 = vmatprep.subr.mxu0 0.0
    %3119 = vmatpush2.msra.mxu0 0.0
    %3120 = vmatprep.subr.mxu0 0.0
    %3121 = vmatpush2.msra.mxu0 0.0
    %3122 = vmatprep.subr.mxu0 0.0
    %3123 = vmatpush2.msra.mxu0 0.0
    %3124 = vmatprep.subr.mxu0 0.0
    %3125 = vmatpush2.msra.mxu0 0.0
    %3126 = vmatprep.subr.mxu0 0.0
    %3127 = vmatpush2.msra.mxu0 0.0
    %3128 = vmatprep.subr.mxu0 0.0
    %3129 = vmatpush2.msra.mxu0 0.0
    %3130 = vmatprep.subr.mxu0 0.0
    %3131 = vmatpush2.msra.mxu0 0.0
    %3132 = vmatprep.subr.mxu0 0.0
    %3133 = vmatpush2.msra.mxu0 0.0
    %3134 = vmatprep.subr.mxu0 0.0
    %3135 = vmatpush2.msra.mxu0 0.0
    %3136 = vmatprep.subr.mxu0 0.0
    %3137 = vmatpush2.msra.mxu0 0.0
    %3138 = vmatprep.subr.mxu0 0.0
    %3139 = vmatpush2.msra.mxu0 0.0
    %3140 = vmatprep.subr.mxu0 0.0
    %3141 = vmatpush2.msra.mxu0 0.0
    %3142 = vmatprep.subr.mxu0 0.0
    %3143 = vmatpush2.msra.mxu0 0.0
    %3144 = vmatprep.subr.mxu0 0.0
    %3145 = vmatpush2.msra.mxu0 0.0
    %3146 = vmatprep.subr.mxu0 0.0
    %3147 = vmatpush2.msra.mxu0 0.0
    %3148 = vmatprep.mubr.f32.mxu0 0.0
    %3149 = vmatmul.mubr.f32.gmra.mxu0 %v3082
    %v3150 = vpop.f32.mrf.mxu0
    %v3151 = vadd.f32 0.0, %v3150
    %v3152 = vpop.f32.mrf.mxu0
    %3153 = vdwg.mxu0
    %v3154 = vadd.f32 %v3005, %v3151
    %v3156 = vsel %vm155, %v2921, 0
    %3158 = vmatprep.subr.mxu0 0.0
    %3159 = vmatpush1.msra.mxu0 0.0
    %3160 = vmatprep.subr.mxu0 0.0
    %3161 = vmatpush1.msra.mxu0 0.0
    %3162 = vmatprep.subr.mxu0 0.0
    %3163 = vmatpush1.msra.mxu0 0.0
    %3164 = vmatprep.subr.mxu0 0.0
    %3165 = vmatpush1.msra.mxu0 0.0
    %3166 = vmatprep.subr.mxu0 0.0
    %3167 = vmatpush1.msra.mxu0 0.0
    %3168 = vmatprep.subr.mxu0 0.0
    %3169 = vmatpush1.msra.mxu0 0.0
    %3170 = vmatprep.subr.mxu0 0.0
    %3171 = vmatpush1.msra.mxu0 0.0
    %3172 = vmatprep.subr.mxu0 0.0
    %3173 = vmatpush1.msra.mxu0 0.0
    %3174 = vmatprep.subr.mxu0 0.0
    %3175 = vmatpush1.msra.mxu0 0.0
    %3176 = vmatprep.subr.mxu0 0.0
    %3177 = vmatpush1.msra.mxu0 0.0
    %3178 = vmatprep.subr.mxu0 0.0
    %3179 = vmatpush1.msra.mxu0 0.0
    %3180 = vmatprep.subr.mxu0 0.0
    %3181 = vmatpush1.msra.mxu0 0.0
    %3182 = vmatprep.subr.mxu0 0.0
    %3183 = vmatpush1.msra.mxu0 0.0
    %3184 = vmatprep.subr.mxu0 0.0
    %3185 = vmatpush1.msra.mxu0 0.0
    %3186 = vmatprep.subr.mxu0 0.0
    %3187 = vmatpush1.msra.mxu0 0.0
    %3188 = vmatprep.subr.mxu0 0.0
    %3189 = vmatpush1.msra.mxu0 %v2917
    %3190 = vmatprep.subr.mxu0 0.0
    %3191 = vmatpush2.msra.mxu0 0.0
    %3192 = vmatprep.subr.mxu0 0.0
    %3193 = vmatpush2.msra.mxu0 0.0
    %3194 = vmatprep.subr.mxu0 0.0
    %3195 = vmatpush2.msra.mxu0 0.0
    %3196 = vmatprep.subr.mxu0 0.0
    %3197 = vmatpush2.msra.mxu0 0.0
    %3198 = vmatprep.subr.mxu0 0.0
    %3199 = vmatpush2.msra.mxu0 0.0
    %3200 = vmatprep.subr.mxu0 0.0
    %3201 = vmatpush2.msra.mxu0 0.0
    %3202 = vmatprep.subr.mxu0 0.0
    %3203 = vmatpush2.msra.mxu0 0.0
    %3204 = vmatprep.subr.mxu0 0.0
    %3205 = vmatpush2.msra.mxu0 0.0
    %3206 = vmatprep.subr.mxu0 0.0
    %3207 = vmatpush2.msra.mxu0 0.0
    %3208 = vmatprep.subr.mxu0 0.0
    %3209 = vmatpush2.msra.mxu0 0.0
    %3210 = vmatprep.subr.mxu0 0.0
    %3211 = vmatpush2.msra.mxu0 0.0
    %3212 = vmatprep.subr.mxu0 0.0
    %3213 = vmatpush2.msra.mxu0 0.0
    %3214 = vmatprep.subr.mxu0 0.0
    %3215 = vmatpush2.msra.mxu0 0.0
    %3216 = vmatprep.subr.mxu0 0.0
    %3217 = vmatpush2.msra.mxu0 0.0
    %3218 = vmatprep.subr.mxu0 0.0
    %3219 = vmatpush2.msra.mxu0 0.0
    %3220 = vmatprep.subr.mxu0 0.0
    %3221 = vmatpush2.msra.mxu0 0.0
    %3222 = vmatprep.mubr.f32.mxu0 0.0
    %3223 = vmatmul.mubr.f32.gmra.mxu0 %v3156
    %v3224 = vpop.f32.mrf.mxu0
    %v3225 = vadd.f32 0.0, %v3224
    %v3226 = vpop.f32.mrf.mxu0
    %3227 = vdwg.mxu0
    %v3229 = vsel %vm2308, %v3225, 0
    %3231 = vmatprep.subr.mxu0 0.0
    %3232 = vmatpush1.msra.mxu0 0.0
    %3233 = vmatprep.subr.mxu0 0.0
    %3234 = vmatpush1.msra.mxu0 0.0
    %3235 = vmatprep.subr.mxu0 0.0
    %3236 = vmatpush1.msra.mxu0 0.0
    %3237 = vmatprep.subr.mxu0 0.0
    %3238 = vmatpush1.msra.mxu0 0.0
    %3239 = vmatprep.subr.mxu0 0.0
    %3240 = vmatpush1.msra.mxu0 0.0
    %3241 = vmatprep.subr.mxu0 0.0
    %3242 = vmatpush1.msra.mxu0 0.0
    %3243 = vmatprep.subr.mxu0 0.0
    %3244 = vmatpush1.msra.mxu0 0.0
    %3245 = vmatprep.subr.mxu0 0.0
    %3246 = vmatpush1.msra.mxu0 0.0
    %3247 = vmatprep.subr.mxu0 0.0
    %3248 = vmatpush1.msra.mxu0 0.0
    %3249 = vmatprep.subr.mxu0 0.0
    %3250 = vmatpush1.msra.mxu0 0.0
    %3251 = vmatprep.subr.mxu0 0.0
    %3252 = vmatpush1.msra.mxu0 0.0
    %3253 = vmatprep.subr.mxu0 0.0
    %3254 = vmatpush1.msra.mxu0 %v2470
    %3255 = vmatprep.subr.mxu0 0.0
    %3256 = vmatpush1.msra.mxu0 %v2464
    %3257 = vmatprep.subr.mxu0 0.0
    %3258 = vmatpush1.msra.mxu0 %v2463
    %3259 = vmatprep.subr.mxu0 0.0
    %3260 = vmatpush1.msra.mxu0 %v2462
    %3261 = vmatprep.subr.mxu0 0.0
    %3262 = vmatpush1.msra.mxu0 %v2461
    %3263 = vmatprep.subr.mxu0 0.0
    %3264 = vmatpush2.msra.mxu0 0.0
    %3265 = vmatprep.subr.mxu0 0.0
    %3266 = vmatpush2.msra.mxu0 0.0
    %3267 = vmatprep.subr.mxu0 0.0
    %3268 = vmatpush2.msra.mxu0 0.0
    %3269 = vmatprep.subr.mxu0 0.0
    %3270 = vmatpush2.msra.mxu0 0.0
    %3271 = vmatprep.subr.mxu0 0.0
    %3272 = vmatpush2.msra.mxu0 0.0
    %3273 = vmatprep.subr.mxu0 0.0
    %3274 = vmatpush2.msra.mxu0 0.0
    %3275 = vmatprep.subr.mxu0 0.0
    %3276 = vmatpush2.msra.mxu0 0.0
    %3277 = vmatprep.subr.mxu0 0.0
    %3278 = vmatpush2.msra.mxu0 0.0
    %3279 = vmatprep.subr.mxu0 0.0
    %3280 = vmatpush2.msra.mxu0 0.0
    %3281 = vmatprep.subr.mxu0 0.0
    %3282 = vmatpush2.msra.mxu0 0.0
    %3283 = vmatprep.subr.mxu0 0.0
    %3284 = vmatpush2.msra.mxu0 0.0
    %3285 = vmatprep.subr.mxu0 0.0
    %3286 = vmatpush2.msra.mxu0 0.0
    %3287 = vmatprep.subr.mxu0 0.0
    %3288 = vmatpush2.msra.mxu0 0.0
    %3289 = vmatprep.subr.mxu0 0.0
    %3290 = vmatpush2.msra.mxu0 0.0
    %3291 = vmatprep.subr.mxu0 0.0
    %3292 = vmatpush2.msra.mxu0 0.0
    %3293 = vmatprep.subr.mxu0 0.0
    %3294 = vmatpush2.msra.mxu0 0.0
    %3295 = vmatprep.mubr.f32.mxu0 0.0
    %3296 = vmatmul.mubr.f32.gmra.mxu0 %v3229
    %v3297 = vpop.f32.mrf.mxu0
    %v3298 = vadd.f32 0.0, %v3297
    %v3299 = vpop.f32.mrf.mxu0
    %3300 = vdwg.mxu0
    %v3301 = vadd.f32 %v3154, %v3298
    %v3302 = vmax.f32 %v3301, 0.0
    %3304 = vset.pattern.permute.xlu0 0
    %3305 = vperm.xlu0 %3304, %v2929
    %v3306 = vpop.permute.xlu0 %3305
    %v3309 = vsel %vm155, %v2926, 0
    %3311 = vmatprep.subr.mxu0 0.0
    %3312 = vmatpush1.msra.mxu0 0.0
    %3313 = vmatprep.subr.mxu0 0.0
    %3314 = vmatpush1.msra.mxu0 0.0
    %3315 = vmatprep.subr.mxu0 0.0
    %3316 = vmatpush1.msra.mxu0 0.0
    %3317 = vmatprep.subr.mxu0 0.0
    %3318 = vmatpush1.msra.mxu0 0.0
    %3319 = vmatprep.subr.mxu0 0.0
    %3320 = vmatpush1.msra.mxu0 0.0
    %3321 = vmatprep.subr.mxu0 0.0
    %3322 = vmatpush1.msra.mxu0 0.0
    %3323 = vmatprep.subr.mxu0 0.0
    %3324 = vmatpush1.msra.mxu0 0.0
    %3325 = vmatprep.subr.mxu0 0.0
    %3326 = vmatpush1.msra.mxu0 0.0
    %3327 = vmatprep.subr.mxu0 0.0
    %3328 = vmatpush1.msra.mxu0 0.0
    %3329 = vmatprep.subr.mxu0 0.0
    %3330 = vmatpush1.msra.mxu0 0.0
    %3331 = vmatprep.subr.mxu0 0.0
    %3332 = vmatpush1.msra.mxu0 0.0
    %3333 = vmatprep.subr.mxu0 0.0
    %3334 = vmatpush1.msra.mxu0 0.0
    %3335 = vmatprep.subr.mxu0 0.0
    %3336 = vmatpush1.msra.mxu0 0.0
    %3337 = vmatprep.subr.mxu0 0.0
    %3338 = vmatpush1.msra.mxu0 0.0
    %3339 = vmatprep.subr.mxu0 0.0
    %3340 = vmatpush1.msra.mxu0 0.0
    %3341 = vmatprep.subr.mxu0 0.0
    %3342 = vmatpush1.msra.mxu0 %v3302
    %3343 = vmatprep.subr.mxu0 0.0
    %3344 = vmatpush2.msra.mxu0 0.0
    %3345 = vmatprep.subr.mxu0 0.0
    %3346 = vmatpush2.msra.mxu0 0.0
    %3347 = vmatprep.subr.mxu0 0.0
    %3348 = vmatpush2.msra.mxu0 0.0
    %3349 = vmatprep.subr.mxu0 0.0
    %3350 = vmatpush2.msra.mxu0 0.0
    %3351 = vmatprep.subr.mxu0 0.0
    %3352 = vmatpush2.msra.mxu0 0.0
    %3353 = vmatprep.subr.mxu0 0.0
    %3354 = vmatpush2.msra.mxu0 0.0
    %3355 = vmatprep.subr.mxu0 0.0
    %3356 = vmatpush2.msra.mxu0 0.0
    %3357 = vmatprep.subr.mxu0 0.0
    %3358 = vmatpush2.msra.mxu0 0.0
    %3359 = vmatprep.subr.mxu0 0.0
    %3360 = vmatpush2.msra.mxu0 0.0
    %3361 = vmatprep.subr.mxu0 0.0
    %3362 = vmatpush2.msra.mxu0 0.0
    %3363 = vmatprep.subr.mxu0 0.0
    %3364 = vmatpush2.msra.mxu0 0.0
    %3365 = vmatprep.subr.mxu0 0.0
    %3366 = vmatpush2.msra.mxu0 0.0
    %3367 = vmatprep.subr.mxu0 0.0
    %3368 = vmatpush2.msra.mxu0 0.0
    %3369 = vmatprep.subr.mxu0 0.0
    %3370 = vmatpush2.msra.mxu0 0.0
    %3371 = vmatprep.subr.mxu0 0.0
    %3372 = vmatpush2.msra.mxu0 0.0
    %3373 = vmatprep.subr.mxu0 0.0
    %3374 = vmatpush2.msra.mxu0 0.0
    %3375 = vmatprep.mubr.f32.mxu0 0.0
    %3376 = vmatmul.mubr.f32.gmra.mxu0 %v3309
    %v3377 = vpop.f32.mrf.mxu0
    %v3378 = vadd.f32 %v3306, %v3377
    %v3379 = vpop.f32.mrf.mxu0
    %3380 = vdwg.mxu0
    %v3382 = vsel %vm155, %v2925, 0
    %3384 = vmatprep.subr.mxu0 0.0
    %3385 = vmatpush1.msra.mxu0 0.0
    %3386 = vmatprep.subr.mxu0 0.0
    %3387 = vmatpush1.msra.mxu0 0.0
    %3388 = vmatprep.subr.mxu0 0.0
    %3389 = vmatpush1.msra.mxu0 0.0
    %3390 = vmatprep.subr.mxu0 0.0
    %3391 = vmatpush1.msra.mxu0 0.0
    %3392 = vmatprep.subr.mxu0 0.0
    %3393 = vmatpush1.msra.mxu0 0.0
    %3394 = vmatprep.subr.mxu0 0.0
    %3395 = vmatpush1.msra.mxu0 0.0
    %3396 = vmatprep.subr.mxu0 0.0
    %3397 = vmatpush1.msra.mxu0 0.0
    %3398 = vmatprep.subr.mxu0 0.0
    %3399 = vmatpush1.msra.mxu0 0.0
    %3400 = vmatprep.subr.mxu0 0.0
    %3401 = vmatpush1.msra.mxu0 0.0
    %3402 = vmatprep.subr.mxu0 0.0
    %3403 = vmatpush1.msra.mxu0 0.0
    %3404 = vmatprep.subr.mxu0 0.0
    %3405 = vmatpush1.msra.mxu0 0.0
    %3406 = vmatprep.subr.mxu0 0.0
    %3407 = vmatpush1.msra.mxu0 0.0
    %3408 = vmatprep.subr.mxu0 0.0
    %3409 = vmatpush1.msra.mxu0 0.0
    %3410 = vmatprep.subr.mxu0 0.0
    %3411 = vmatpush1.msra.mxu0 0.0
    %3412 = vmatprep.subr.mxu0 0.0
    %3413 = vmatpush1.msra.mxu0 0.0
    %3414 = vmatprep.subr.mxu0 0.0
    %3415 = vmatpush1.msra.mxu0 %v3302
    %3416 = vmatprep.subr.mxu0 0.0
    %3417 = vmatpush2.msra.mxu0 0.0
    %3418 = vmatprep.subr.mxu0 0.0
    %3419 = vmatpush2.msra.mxu0 0.0
    %3420 = vmatprep.subr.mxu0 0.0
    %3421 = vmatpush2.msra.mxu0 0.0
    %3422 = vmatprep.subr.mxu0 0.0
    %3423 = vmatpush2.msra.mxu0 0.0
    %3424 = vmatprep.subr.mxu0 0.0
    %3425 = vmatpush2.msra.mxu0 0.0
    %3426 = vmatprep.subr.mxu0 0.0
    %3427 = vmatpush2.msra.mxu0 0.0
    %3428 = vmatprep.subr.mxu0 0.0
    %3429 = vmatpush2.msra.mxu0 0.0
    %3430 = vmatprep.subr.mxu0 0.0
    %3431 = vmatpush2.msra.mxu0 0.0
    %3432 = vmatprep.subr.mxu0 0.0
    %3433 = vmatpush2.msra.mxu0 0.0
    %3434 = vmatprep.subr.mxu0 0.0
    %3435 = vmatpush2.msra.mxu0 0.0
    %3436 = vmatprep.subr.mxu0 0.0
    %3437 = vmatpush2.msra.mxu0 0.0
    %3438 = vmatprep.subr.mxu0 0.0
    %3439 = vmatpush2.msra.mxu0 0.0
    %3440 = vmatprep.subr.mxu0 0.0
    %3441 = vmatpush2.msra.mxu0 0.0
    %3442 = vmatprep.subr.mxu0 0.0
    %3443 = vmatpush2.msra.mxu0 0.0
    %3444 = vmatprep.subr.mxu0 0.0
    %3445 = vmatpush2.msra.mxu0 0.0
    %3446 = vmatprep.subr.mxu0 0.0
    %3447 = vmatpush2.msra.mxu0 0.0
    %3448 = vmatprep.mubr.f32.mxu0 0.0
    %3449 = vmatmul.mubr.f32.gmra.mxu0 %v3382
    %v3450 = vpop.f32.mrf.mxu0
    %v3451 = vadd.f32 0.0, %v3450
    %v3452 = vpop.f32.mrf.mxu0
    %3453 = vdwg.mxu0
    %v3455 = vsel %vm2308, %v3451, 0
    %3457 = vmatprep.subr.mxu0 0.0
    %3458 = vmatpush1.msra.mxu0 0.0
    %3459 = vmatprep.subr.mxu0 0.0
    %3460 = vmatpush1.msra.mxu0 0.0
    %3461 = vmatprep.subr.mxu0 0.0
    %3462 = vmatpush1.msra.mxu0 0.0
    %3463 = vmatprep.subr.mxu0 0.0
    %3464 = vmatpush1.msra.mxu0 0.0
    %3465 = vmatprep.subr.mxu0 0.0
    %3466 = vmatpush1.msra.mxu0 0.0
    %3467 = vmatprep.subr.mxu0 0.0
    %3468 = vmatpush1.msra.mxu0 0.0
    %3469 = vmatprep.subr.mxu0 0.0
    %3470 = vmatpush1.msra.mxu0 0.0
    %3471 = vmatprep.subr.mxu0 0.0
    %3472 = vmatpush1.msra.mxu0 0.0
    %3473 = vmatprep.subr.mxu0 0.0
    %3474 = vmatpush1.msra.mxu0 0.0
    %3475 = vmatprep.subr.mxu0 0.0
    %3476 = vmatpush1.msra.mxu0 0.0
    %3477 = vmatprep.subr.mxu0 0.0
    %3478 = vmatpush1.msra.mxu0 0.0
    %3479 = vmatprep.subr.mxu0 0.0
    %3480 = vmatpush1.msra.mxu0 %v2314
    %3481 = vmatprep.subr.mxu0 0.0
    %3482 = vmatpush1.msra.mxu0 %v2306
    %3483 = vmatprep.subr.mxu0 0.0
    %3484 = vmatpush1.msra.mxu0 %v2305
    %3485 = vmatprep.subr.mxu0 0.0
    %3486 = vmatpush1.msra.mxu0 %v2304
    %3487 = vmatprep.subr.mxu0 0.0
    %3488 = vmatpush1.msra.mxu0 %v2303
    %3489 = vmatprep.subr.mxu0 0.0
    %3490 = vmatpush2.msra.mxu0 0.0
    %3491 = vmatprep.subr.mxu0 0.0
    %3492 = vmatpush2.msra.mxu0 0.0
    %3493 = vmatprep.subr.mxu0 0.0
    %3494 = vmatpush2.msra.mxu0 0.0
    %3495 = vmatprep.subr.mxu0 0.0
    %3496 = vmatpush2.msra.mxu0 0.0
    %3497 = vmatprep.subr.mxu0 0.0
    %3498 = vmatpush2.msra.mxu0 0.0
    %3499 = vmatprep.subr.mxu0 0.0
    %3500 = vmatpush2.msra.mxu0 0.0
    %3501 = vmatprep.subr.mxu0 0.0
    %3502 = vmatpush2.msra.mxu0 0.0
    %3503 = vmatprep.subr.mxu0 0.0
    %3504 = vmatpush2.msra.mxu0 0.0
    %3505 = vmatprep.subr.mxu0 0.0
    %3506 = vmatpush2.msra.mxu0 0.0
    %3507 = vmatprep.subr.mxu0 0.0
    %3508 = vmatpush2.msra.mxu0 0.0
    %3509 = vmatprep.subr.mxu0 0.0
    %3510 = vmatpush2.msra.mxu0 0.0
    %3511 = vmatprep.subr.mxu0 0.0
    %3512 = vmatpush2.msra.mxu0 0.0
    %3513 = vmatprep.subr.mxu0 0.0
    %3514 = vmatpush2.msra.mxu0 0.0
    %3515 = vmatprep.subr.mxu0 0.0
    %3516 = vmatpush2.msra.mxu0 0.0
    %3517 = vmatprep.subr.mxu0 0.0
    %3518 = vmatpush2.msra.mxu0 0.0
    %3519 = vmatprep.subr.mxu0 0.0
    %3520 = vmatpush2.msra.mxu0 0.0
    %3521 = vmatprep.mubr.f32.mxu0 0.0
    %3522 = vmatmul.mubr.f32.gmra.mxu0 %v3455
    %v3523 = vpop.f32.mrf.mxu0
    %v3524 = vadd.f32 0.0, %v3523
    %v3525 = vpop.f32.mrf.mxu0
    %3526 = vdwg.mxu0
    %v3527 = vadd.f32 %v3378, %v3524
    %v3529 = vsel %vm155, %v2927, 0
    %3531 = vmatprep.subr.mxu0 0.0
    %3532 = vmatpush1.msra.mxu0 0.0
    %3533 = vmatprep.subr.mxu0 0.0
    %3534 = vmatpush1.msra.mxu0 0.0
    %3535 = vmatprep.subr.mxu0 0.0
    %3536 = vmatpush1.msra.mxu0 0.0
    %3537 = vmatprep.subr.mxu0 0.0
    %3538 = vmatpush1.msra.mxu0 0.0
    %3539 = vmatprep.subr.mxu0 0.0
    %3540 = vmatpush1.msra.mxu0 0.0
    %3541 = vmatprep.subr.mxu0 0.0
    %3542 = vmatpush1.msra.mxu0 0.0
    %3543 = vmatprep.subr.mxu0 0.0
    %3544 = vmatpush1.msra.mxu0 0.0
    %3545 = vmatprep.subr.mxu0 0.0
    %3546 = vmatpush1.msra.mxu0 0.0
    %3547 = vmatprep.subr.mxu0 0.0
    %3548 = vmatpush1.msra.mxu0 0.0
    %3549 = vmatprep.subr.mxu0 0.0
    %3550 = vmatpush1.msra.mxu0 0.0
    %3551 = vmatprep.subr.mxu0 0.0
    %3552 = vmatpush1.msra.mxu0 0.0
    %3553 = vmatprep.subr.mxu0 0.0
    %3554 = vmatpush1.msra.mxu0 0.0
    %3555 = vmatprep.subr.mxu0 0.0
    %3556 = vmatpush1.msra.mxu0 0.0
    %3557 = vmatprep.subr.mxu0 0.0
    %3558 = vmatpush1.msra.mxu0 0.0
    %3559 = vmatprep.subr.mxu0 0.0
    %3560 = vmatpush1.msra.mxu0 0.0
    %3561 = vmatprep.subr.mxu0 0.0
    %3562 = vmatpush1.msra.mxu0 %v3302
    %3563 = vmatprep.subr.mxu0 0.0
    %3564 = vmatpush2.msra.mxu0 0.0
    %3565 = vmatprep.subr.mxu0 0.0
    %3566 = vmatpush2.msra.mxu0 0.0
    %3567 = vmatprep.subr.mxu0 0.0
    %3568 = vmatpush2.msra.mxu0 0.0
    %3569 = vmatprep.subr.mxu0 0.0
    %3570 = vmatpush2.msra.mxu0 0.0
    %3571 = vmatprep.subr.mxu0 0.0
    %3572 = vmatpush2.msra.mxu0 0.0
    %3573 = vmatprep.subr.mxu0 0.0
    %3574 = vmatpush2.msra.mxu0 0.0
    %3575 = vmatprep.subr.mxu0 0.0
    %3576 = vmatpush2.msra.mxu0 0.0
    %3577 = vmatprep.subr.mxu0 0.0
    %3578 = vmatpush2.msra.mxu0 0.0
    %3579 = vmatprep.subr.mxu0 0.0
    %3580 = vmatpush2.msra.mxu0 0.0
    %3581 = vmatprep.subr.mxu0 0.0
    %3582 = vmatpush2.msra.mxu0 0.0
    %3583 = vmatprep.subr.mxu0 0.0
    %3584 = vmatpush2.msra.mxu0 0.0
    %3585 = vmatprep.subr.mxu0 0.0
    %3586 = vmatpush2.msra.mxu0 0.0
    %3587 = vmatprep.subr.mxu0 0.0
    %3588 = vmatpush2.msra.mxu0 0.0
    %3589 = vmatprep.subr.mxu0 0.0
    %3590 = vmatpush2.msra.mxu0 0.0
    %3591 = vmatprep.subr.mxu0 0.0
    %3592 = vmatpush2.msra.mxu0 0.0
    %3593 = vmatprep.subr.mxu0 0.0
    %3594 = vmatpush2.msra.mxu0 0.0
    %3595 = vmatprep.mubr.f32.mxu0 0.0
    %3596 = vmatmul.mubr.f32.gmra.mxu0 %v3529
    %v3597 = vpop.f32.mrf.mxu0
    %v3598 = vadd.f32 0.0, %v3597
    %v3599 = vpop.f32.mrf.mxu0
    %3600 = vdwg.mxu0
    %v3602 = vsel %vm2308, %v3598, 0
    %3604 = vmatprep.subr.mxu0 0.0
    %3605 = vmatpush1.msra.mxu0 0.0
    %3606 = vmatprep.subr.mxu0 0.0
    %3607 = vmatpush1.msra.mxu0 0.0
    %3608 = vmatprep.subr.mxu0 0.0
    %3609 = vmatpush1.msra.mxu0 0.0
    %3610 = vmatprep.subr.mxu0 0.0
    %3611 = vmatpush1.msra.mxu0 0.0
    %3612 = vmatprep.subr.mxu0 0.0
    %3613 = vmatpush1.msra.mxu0 0.0
    %3614 = vmatprep.subr.mxu0 0.0
    %3615 = vmatpush1.msra.mxu0 0.0
    %3616 = vmatprep.subr.mxu0 0.0
    %3617 = vmatpush1.msra.mxu0 0.0
    %3618 = vmatprep.subr.mxu0 0.0
    %3619 = vmatpush1.msra.mxu0 0.0
    %3620 = vmatprep.subr.mxu0 0.0
    %3621 = vmatpush1.msra.mxu0 0.0
    %3622 = vmatprep.subr.mxu0 0.0
    %3623 = vmatpush1.msra.mxu0 0.0
    %3624 = vmatprep.subr.mxu0 0.0
    %3625 = vmatpush1.msra.mxu0 0.0
    %3626 = vmatprep.subr.mxu0 0.0
    %3627 = vmatpush1.msra.mxu0 %v2470
    %3628 = vmatprep.subr.mxu0 0.0
    %3629 = vmatpush1.msra.mxu0 %v2464
    %3630 = vmatprep.subr.mxu0 0.0
    %3631 = vmatpush1.msra.mxu0 %v2463
    %3632 = vmatprep.subr.mxu0 0.0
    %3633 = vmatpush1.msra.mxu0 %v2462
    %3634 = vmatprep.subr.mxu0 0.0
    %3635 = vmatpush1.msra.mxu0 %v2461
    %3636 = vmatprep.subr.mxu0 0.0
    %3637 = vmatpush2.msra.mxu0 0.0
    %3638 = vmatprep.subr.mxu0 0.0
    %3639 = vmatpush2.msra.mxu0 0.0
    %3640 = vmatprep.subr.mxu0 0.0
    %3641 = vmatpush2.msra.mxu0 0.0
    %3642 = vmatprep.subr.mxu0 0.0
    %3643 = vmatpush2.msra.mxu0 0.0
    %3644 = vmatprep.subr.mxu0 0.0
    %3645 = vmatpush2.msra.mxu0 0.0
    %3646 = vmatprep.subr.mxu0 0.0
    %3647 = vmatpush2.msra.mxu0 0.0
    %3648 = vmatprep.subr.mxu0 0.0
    %3649 = vmatpush2.msra.mxu0 0.0
    %3650 = vmatprep.subr.mxu0 0.0
    %3651 = vmatpush2.msra.mxu0 0.0
    %3652 = vmatprep.subr.mxu0 0.0
    %3653 = vmatpush2.msra.mxu0 0.0
    %3654 = vmatprep.subr.mxu0 0.0
    %3655 = vmatpush2.msra.mxu0 0.0
    %3656 = vmatprep.subr.mxu0 0.0
    %3657 = vmatpush2.msra.mxu0 0.0
    %3658 = vmatprep.subr.mxu0 0.0
    %3659 = vmatpush2.msra.mxu0 0.0
    %3660 = vmatprep.subr.mxu0 0.0
    %3661 = vmatpush2.msra.mxu0 0.0
    %3662 = vmatprep.subr.mxu0 0.0
    %3663 = vmatpush2.msra.mxu0 0.0
    %3664 = vmatprep.subr.mxu0 0.0
    %3665 = vmatpush2.msra.mxu0 0.0
    %3666 = vmatprep.subr.mxu0 0.0
    %3667 = vmatpush2.msra.mxu0 0.0
    %3668 = vmatprep.mubr.f32.mxu0 0.0
    %3669 = vmatmul.mubr.f32.gmra.mxu0 %v3602
    %v3670 = vpop.f32.mrf.mxu0
    %v3671 = vadd.f32 0.0, %v3670
    %v3672 = vpop.f32.mrf.mxu0
    %3673 = vdwg.mxu0
    %v3674 = vadd.f32 %v3527, %v3671
    %v3675 = vadd.f32 %v3674, %v2917
    %v3676 = vmax.f32 %v3675, 0.0
    %v3677 = vld [vmem:[#allocation13] sm:$0xff]
    %v3678 = vld [vmem:[#allocation13 + $0x8] sm:$0xff]
    %v3679 = vld [vmem:[#allocation13 + $0x10] sm:$0xff]
    %v3680 = vld [vmem:[#allocation13 + $0x18] sm:$0xff]
    %v3681 = vld [vmem:[#allocation13 + $0x20] sm:$0x3]
    %v3683 = vsel %vm2308, %v3676, 0
    %v3686 = vsel %vm2312, %v3681, 0
    %3688 = vmatprep.subr.mxu0 0.0
    %3689 = vmatpush1.msra.mxu0 0.0
    %3690 = vmatprep.subr.mxu0 0.0
    %3691 = vmatpush1.msra.mxu0 0.0
    %3692 = vmatprep.subr.mxu0 0.0
    %3693 = vmatpush1.msra.mxu0 0.0
    %3694 = vmatprep.subr.mxu0 0.0
    %3695 = vmatpush1.msra.mxu0 0.0
    %3696 = vmatprep.subr.mxu0 0.0
    %3697 = vmatpush1.msra.mxu0 0.0
    %3698 = vmatprep.subr.mxu0 0.0
    %3699 = vmatpush1.msra.mxu0 0.0
    %3700 = vmatprep.subr.mxu0 0.0
    %3701 = vmatpush1.msra.mxu0 0.0
    %3702 = vmatprep.subr.mxu0 0.0
    %3703 = vmatpush1.msra.mxu0 0.0
    %3704 = vmatprep.subr.mxu0 0.0
    %3705 = vmatpush1.msra.mxu0 0.0
    %3706 = vmatprep.subr.mxu0 0.0
    %3707 = vmatpush1.msra.mxu0 0.0
    %3708 = vmatprep.subr.mxu0 0.0
    %3709 = vmatpush1.msra.mxu0 0.0
    %3710 = vmatprep.subr.mxu0 0.0
    %3711 = vmatpush1.msra.mxu0 %v3686
    %3712 = vmatprep.subr.mxu0 0.0
    %3713 = vmatpush1.msra.mxu0 %v3680
    %3714 = vmatprep.subr.mxu0 0.0
    %3715 = vmatpush1.msra.mxu0 %v3679
    %3716 = vmatprep.subr.mxu0 0.0
    %3717 = vmatpush1.msra.mxu0 %v3678
    %3718 = vmatprep.subr.mxu0 0.0
    %3719 = vmatpush1.msra.mxu0 %v3677
    %3720 = vmatprep.subr.mxu0 0.0
    %3721 = vmatpush2.msra.mxu0 0.0
    %3722 = vmatprep.subr.mxu0 0.0
    %3723 = vmatpush2.msra.mxu0 0.0
    %3724 = vmatprep.subr.mxu0 0.0
    %3725 = vmatpush2.msra.mxu0 0.0
    %3726 = vmatprep.subr.mxu0 0.0
    %3727 = vmatpush2.msra.mxu0 0.0
    %3728 = vmatprep.subr.mxu0 0.0
    %3729 = vmatpush2.msra.mxu0 0.0
    %3730 = vmatprep.subr.mxu0 0.0
    %3731 = vmatpush2.msra.mxu0 0.0
    %3732 = vmatprep.subr.mxu0 0.0
    %3733 = vmatpush2.msra.mxu0 0.0
    %3734 = vmatprep.subr.mxu0 0.0
    %3735 = vmatpush2.msra.mxu0 0.0
    %3736 = vmatprep.subr.mxu0 0.0
    %3737 = vmatpush2.msra.mxu0 0.0
    %3738 = vmatprep.subr.mxu0 0.0
    %3739 = vmatpush2.msra.mxu0 0.0
    %3740 = vmatprep.subr.mxu0 0.0
    %3741 = vmatpush2.msra.mxu0 0.0
    %3742 = vmatprep.subr.mxu0 0.0
    %3743 = vmatpush2.msra.mxu0 0.0
    %3744 = vmatprep.subr.mxu0 0.0
    %3745 = vmatpush2.msra.mxu0 0.0
    %3746 = vmatprep.subr.mxu0 0.0
    %3747 = vmatpush2.msra.mxu0 0.0
    %3748 = vmatprep.subr.mxu0 0.0
    %3749 = vmatpush2.msra.mxu0 0.0
    %3750 = vmatprep.subr.mxu0 0.0
    %3751 = vmatpush2.msra.mxu0 0.0
    %3752 = vmatprep.mubr.f32.mxu0 0.0
    %3753 = vmatmul.mubr.f32.gmra.mxu0 %v3683
    %v3754 = vpop.f32.mrf.mxu0
    %v3755 = vadd.f32 0.0, %v3754
    %v3756 = vpop.f32.mrf.mxu0
    %3757 = vdwg.mxu0
    %v3758 = vld [vmem:[#allocation12] sm:$0x3]
    %s3759 = scalar_lea.vmem [#allocation12], 2
    %v3760 = vld [vmem:[%s3759] sm:$0x3]
    %3762 = vrot.lane.b32.xlu0 %v3755, 126
    %v3763 = vpop.permute.xlu0 %3762
    %v3766 = vsel %vm155, %v3760, 0
    %3768 = vmatprep.subr.mxu0 0.0
    %3769 = vmatpush1.msra.mxu0 0.0
    %3770 = vmatprep.subr.mxu0 0.0
    %3771 = vmatpush1.msra.mxu0 0.0
    %3772 = vmatprep.subr.mxu0 0.0
    %3773 = vmatpush1.msra.mxu0 0.0
    %3774 = vmatprep.subr.mxu0 0.0
    %3775 = vmatpush1.msra.mxu0 0.0
    %3776 = vmatprep.subr.mxu0 0.0
    %3777 = vmatpush1.msra.mxu0 0.0
    %3778 = vmatprep.subr.mxu0 0.0
    %3779 = vmatpush1.msra.mxu0 0.0
    %3780 = vmatprep.subr.mxu0 0.0
    %3781 = vmatpush1.msra.mxu0 0.0
    %3782 = vmatprep.subr.mxu0 0.0
    %3783 = vmatpush1.msra.mxu0 0.0
    %3784 = vmatprep.subr.mxu0 0.0
    %3785 = vmatpush1.msra.mxu0 0.0
    %3786 = vmatprep.subr.mxu0 0.0
    %3787 = vmatpush1.msra.mxu0 0.0
    %3788 = vmatprep.subr.mxu0 0.0
    %3789 = vmatpush1.msra.mxu0 0.0
    %3790 = vmatprep.subr.mxu0 0.0
    %3791 = vmatpush1.msra.mxu0 0.0
    %3792 = vmatprep.subr.mxu0 0.0
    %3793 = vmatpush1.msra.mxu0 0.0
    %3794 = vmatprep.subr.mxu0 0.0
    %3795 = vmatpush1.msra.mxu0 0.0
    %3796 = vmatprep.subr.mxu0 0.0
    %3797 = vmatpush1.msra.mxu0 0.0
    %3798 = vmatprep.subr.mxu0 0.0
    %3799 = vmatpush1.msra.mxu0 %v3763
    %3800 = vmatprep.subr.mxu0 0.0
    %3801 = vmatpush2.msra.mxu0 0.0
    %3802 = vmatprep.subr.mxu0 0.0
    %3803 = vmatpush2.msra.mxu0 0.0
    %3804 = vmatprep.subr.mxu0 0.0
    %3805 = vmatpush2.msra.mxu0 0.0
    %3806 = vmatprep.subr.mxu0 0.0
    %3807 = vmatpush2.msra.mxu0 0.0
    %3808 = vmatprep.subr.mxu0 0.0
    %3809 = vmatpush2.msra.mxu0 0.0
    %3810 = vmatprep.subr.mxu0 0.0
    %3811 = vmatpush2.msra.mxu0 0.0
    %3812 = vmatprep.subr.mxu0 0.0
    %3813 = vmatpush2.msra.mxu0 0.0
    %3814 = vmatprep.subr.mxu0 0.0
    %3815 = vmatpush2.msra.mxu0 0.0
    %3816 = vmatprep.subr.mxu0 0.0
    %3817 = vmatpush2.msra.mxu0 0.0
    %3818 = vmatprep.subr.mxu0 0.0
    %3819 = vmatpush2.msra.mxu0 0.0
    %3820 = vmatprep.subr.mxu0 0.0
    %3821 = vmatpush2.msra.mxu0 0.0
    %3822 = vmatprep.subr.mxu0 0.0
    %3823 = vmatpush2.msra.mxu0 0.0
    %3824 = vmatprep.subr.mxu0 0.0
    %3825 = vmatpush2.msra.mxu0 0.0
    %3826 = vmatprep.subr.mxu0 0.0
    %3827 = vmatpush2.msra.mxu0 0.0
    %3828 = vmatprep.subr.mxu0 0.0
    %3829 = vmatpush2.msra.mxu0 0.0
    %3830 = vmatprep.subr.mxu0 0.0
    %3831 = vmatpush2.msra.mxu0 0.0
    %3832 = vmatprep.mubr.f32.mxu0 0.0
    %3833 = vmatmul.mubr.f32.gmra.mxu0 %v3766
    %v3834 = vpop.f32.mrf.mxu0
    %v3835 = vadd.f32 0.0, %v3834
    %v3836 = vpop.f32.mrf.mxu0
    %3837 = vdwg.mxu0
    %v3839 = vsel %vm155, %v3758, 0
    %3841 = vmatprep.subr.mxu0 0.0
    %3842 = vmatpush1.msra.mxu0 0.0
    %3843 = vmatprep.subr.mxu0 0.0
    %3844 = vmatpush1.msra.mxu0 0.0
    %3845 = vmatprep.subr.mxu0 0.0
    %3846 = vmatpush1.msra.mxu0 0.0
    %3847 = vmatprep.subr.mxu0 0.0
    %3848 = vmatpush1.msra.mxu0 0.0
    %3849 = vmatprep.subr.mxu0 0.0
    %3850 = vmatpush1.msra.mxu0 0.0
    %3851 = vmatprep.subr.mxu0 0.0
    %3852 = vmatpush1.msra.mxu0 0.0
    %3853 = vmatprep.subr.mxu0 0.0
    %3854 = vmatpush1.msra.mxu0 0.0
    %3855 = vmatprep.subr.mxu0 0.0
    %3856 = vmatpush1.msra.mxu0 0.0
    %3857 = vmatprep.subr.mxu0 0.0
    %3858 = vmatpush1.msra.mxu0 0.0
    %3859 = vmatprep.subr.mxu0 0.0
    %3860 = vmatpush1.msra.mxu0 0.0
    %3861 = vmatprep.subr.mxu0 0.0
    %3862 = vmatpush1.msra.mxu0 0.0
    %3863 = vmatprep.subr.mxu0 0.0
    %3864 = vmatpush1.msra.mxu0 0.0
    %3865 = vmatprep.subr.mxu0 0.0
    %3866 = vmatpush1.msra.mxu0 0.0
    %3867 = vmatprep.subr.mxu0 0.0
    %3868 = vmatpush1.msra.mxu0 0.0
    %3869 = vmatprep.subr.mxu0 0.0
    %3870 = vmatpush1.msra.mxu0 0.0
    %3871 = vmatprep.subr.mxu0 0.0
    %3872 = vmatpush1.msra.mxu0 %v3755
    %3873 = vmatprep.subr.mxu0 0.0
    %3874 = vmatpush2.msra.mxu0 0.0
    %3875 = vmatprep.subr.mxu0 0.0
    %3876 = vmatpush2.msra.mxu0 0.0
    %3877 = vmatprep.subr.mxu0 0.0
    %3878 = vmatpush2.msra.mxu0 0.0
    %3879 = vmatprep.subr.mxu0 0.0
    %3880 = vmatpush2.msra.mxu0 0.0
    %3881 = vmatprep.subr.mxu0 0.0
    %3882 = vmatpush2.msra.mxu0 0.0
    %3883 = vmatprep.subr.mxu0 0.0
    %3884 = vmatpush2.msra.mxu0 0.0
    %3885 = vmatprep.subr.mxu0 0.0
    %3886 = vmatpush2.msra.mxu0 0.0
    %3887 = vmatprep.subr.mxu0 0.0
    %3888 = vmatpush2.msra.mxu0 0.0
    %3889 = vmatprep.subr.mxu0 0.0
    %3890 = vmatpush2.msra.mxu0 0.0
    %3891 = vmatprep.subr.mxu0 0.0
    %3892 = vmatpush2.msra.mxu0 0.0
    %3893 = vmatprep.subr.mxu0 0.0
    %3894 = vmatpush2.msra.mxu0 0.0
    %3895 = vmatprep.subr.mxu0 0.0
    %3896 = vmatpush2.msra.mxu0 0.0
    %3897 = vmatprep.subr.mxu0 0.0
    %3898 = vmatpush2.msra.mxu0 0.0
    %3899 = vmatprep.subr.mxu0 0.0
    %3900 = vmatpush2.msra.mxu0 0.0
    %3901 = vmatprep.subr.mxu0 0.0
    %3902 = vmatpush2.msra.mxu0 0.0
    %3903 = vmatprep.subr.mxu0 0.0
    %3904 = vmatpush2.msra.mxu0 0.0
    %3905 = vmatprep.mubr.f32.mxu0 0.0
    %3906 = vmatmul.mubr.f32.gmra.mxu0 %v3839
    %v3907 = vpop.f32.mrf.mxu0
    %v3908 = vadd.f32 %v3835, %v3907
    %v3909 = vpop.f32.mrf.mxu0
    %3910 = vdwg.mxu0
    %vm3911 = vcmask 9216
    %3912 = vst.msk [vmem:[%s13] sm:$0x3] %vm3911, %v3908
    // Predicated region
    $region86: #{forward_pallas.1} parent=1 // pred_check
      _
    $region87: #{forward_pallas.1} parent=1 // pred_check_branch
      %3914 = sbr.rel (0) target = $region89
    $region88: #{forward_pallas.1} parent=1 // pred_region
      _
    $region89: #{forward_pallas.1} parent=1 // pred_fallthru
      _
    // Predicated region
    $region90: #{forward_pallas.1} parent=1 // pred_check
      _
    $region91: #{forward_pallas.1} parent=1 // pred_check_branch
      %3916 = sbr.rel (0) target = $region93
    $region92: #{forward_pallas.1} parent=1 // pred_region
      _
    $region93: #{forward_pallas.1} parent=1 // pred_fallthru
      _
    %3917 = vsyncpa [#allocation3], 1
    %3918 = vsyncpa [#allocation5], 1
    %3919 = vsyncpa [#allocation8], 1
    %3920 = vsyncpa [#allocation11], 1
    %3921 = vsyncpa [#allocation14], 1

</llo_original>
